<compile_context>
chip_gen: v6e
topology: v6e:2x2x1
jax: 0.10.0
libtpu: 0.0.40
codegen_flags: <defaults>
</compile_context>

<pallas_src>
import functools

import numpy as np
import jax
import jax.numpy as jnp
from jax import lax
from jax.experimental import pallas as pl
from jax.experimental.pallas import tpu as pltpu


def _prelu(v, a):
    return jnp.where(v > 0, v, a * v)


# --------------------------------------------------------------------------
# Pallas kernel: whole forward pass for one batch element.
# All activations are channel-major (C, P) with P = (H+2)*(W+2) flattened padded
# pixels on the 128-lane axis.
# --------------------------------------------------------------------------
def _gfu_kernel(xy_ref, m_ref,
                w12_ref, b1_ref, a1_ref,
                w3_ref, b3_ref, a3_ref,
                ws_ref, bs1_ref, as1_ref, bs2_ref,
                wf_ref, bf_ref, af_ref,
                out_ref,
                op3_ref, act_ref,
                *, co, row_shift):
    P = out_ref.shape[-1]
    mask = m_ref[...]                                   # (1, P): 0 on guard rows/cols

    def pack_taps(parts):
        # Pack the three dx taps of the channel-concatenated `parts` into the
        # contraction dim: op3[dx*Cin + i, p] = in[i, p + dx - 1].
        # Wrapped lanes of the rolls come from guard positions whose source is zero
        # (inputs are masked), so no extra edge masking is required.
        cin = sum(p.shape[0] for p in parts)
        for dx, sh in enumerate((1, 0, P - 1)):         # dx = 0 / 1 / 2 kernel column
            off = dx * cin
            for part in parts:
                c = part.shape[0]
                v = part if sh == 0 else pltpu.roll(part, sh, axis=1)
                op3_ref[off:off + c, :] = v             # sublane-aligned full-row store
                off += c
        return op3_ref[0:3 * cin, :]

    def row_sum(res):
        # res: (3*co, P) dy-stacked conv partials -> (co, P) 3x3-conv output (pre-bias).
        p0 = res[0:co, :]
        p1 = res[co:2 * co, :]
        p2 = res[2 * co:3 * co, :]
        return (p1 + pltpu.roll(p0, row_shift, axis=1)
                + pltpu.roll(p2, P - row_shift, axis=1))

    # conv1 (1x1 + folded BN + PReLU on x_gui) and conv2 (1x1 + ReLU on y_up) as one
    # matmul with a block-diagonal weight over the channel-concatenated input.
    r12 = jnp.dot(w12_ref[...], xy_ref[...], preferred_element_type=jnp.float32)
    x_act = _prelu(r12[0:co, :] + b1_ref[...], a1_ref[...]) * mask
    y_act = jnp.maximum(r12[co:2 * co, :], 0.0)         # no bias -> guards already 0
    act_ref[0:co, :] = x_act                            # stash: bound vreg pressure
    act_ref[co:2 * co, :] = y_act

    # conv3: 3x3 + folded BN + PReLU (single dy-stacked matmul).
    r3 = jnp.dot(w3_ref[...], pack_taps((x_act + y_act,)),
                 preferred_element_type=jnp.float32)
    fuse = _prelu(row_sum(r3) + b3_ref[...], a3_ref[...]) * mask

    # s1 (3x3 + BN + PReLU on chunk 0) and s2 (1x1 + BN + Sigmoid on chunk 1):
    # torch.chunk is folded into zero-padded weights; s2's 1x1 is extra output rows
    # of the same matmul reading only the centre (dx=1) tap group.
    rs = jnp.dot(ws_ref[...], pack_taps((fuse,)), preferred_element_type=jnp.float32)
    s1 = _prelu(row_sum(rs[0:3 * co, :]) + bs1_ref[...], as1_ref[...])
    s2 = 1.0 / (1.0 + jnp.exp(-(rs[3 * co:4 * co, :] + bs2_ref[...])))

    ml1 = s1 * act_ref[co:2 * co, :]                    # s1 * y_up
    ml2 = s2 * act_ref[0:co, :]                         # s2 * x_gui

    # fuse: 3x3 conv on cat([ml1, ml2]) with the original 2Co-input weight (merged).
    rf = jnp.dot(wf_ref[...], pack_taps((ml1, ml2)),
                 preferred_element_type=jnp.float32)
    out_ref[...] = _prelu(row_sum(rf) + bf_ref[...], af_ref[...])


# --------------------------------------------------------------------------
# Exact align_corners=True bilinear upsample (NCHW) as interpolation matrices.
# --------------------------------------------------------------------------
def _interp_matrix(src, dst):
    m = np.zeros((dst, src), dtype=np.float32)
    if src == 1 or dst == 1:
        m[:, 0] = 1.0
        return jnp.asarray(m)
    scale = (src - 1) / (dst - 1)
    for i in range(dst):
        s = i * scale
        i0 = min(int(np.floor(s)), src - 1)
        i1 = min(i0 + 1, src - 1)
        frac = s - i0
        m[i, i0] += 1.0 - frac
        m[i, i1] += frac
    return jnp.asarray(m)


def bilinear_upsample_align_corners(y, H, W):
    _, _, h, w = y.shape
    Rh = _interp_matrix(h, H)
    Rw = _interp_matrix(w, W)
    return jnp.einsum('Hi,Wj,ncij->ncHW', Rh, Rw, y,
                      precision=lax.Precision.HIGHEST)


# --------------------------------------------------------------------------
# Wrapper: padding, weight repacking, pallas_call.
# --------------------------------------------------------------------------
def global_feature_upsample(x_gui, y_high, params):
    """Fused GlobalFeatureUpsample forward.  x_gui / y_high are NCHW float32."""
    N, Cl, H, W = x_gui.shape
    Ci = y_high.shape[1]
    Co = params['w1'].shape[-1]
    Ch = Co // 2
    E, Wp = H + 2, W + 2                      # one zero guard row / column per side
    P = E * Wp

    # Exact bilinear upsample (linear; identical to the reference's upsample).
    # TODO(synk): fold into the kernel to avoid the full-res HBM round trip.
    y_up = bilinear_upsample_align_corners(y_high, H, W)

    # Single zero-padded, channel-concatenated input canvas, pixel-flattened (lane-dense).
    xy = jnp.concatenate([x_gui, y_up], axis=1)
    canvas = jnp.pad(xy, ((0, 0), (0, 0), (1, 1), (1, 1))).reshape(N, Cl + Ci, P)

    # {0,1} validity mask over the padded canvas (tiny resident constant).
    mask_np = np.zeros((E, Wp), np.float32)
    mask_np[1:H + 1, 1:W + 1] = 1.0
    mask = jnp.asarray(mask_np.reshape(1, P))

    # ---- weight repacking (BN already folded into the convs in make_params) -------
    def col(v):                               # (C,) -> (C, 1) bias / PReLU-slope column
        return v.reshape(-1, 1)

    def g3stack(w):                           # (3,3,Cin,Cout) -> (3*Cout, 3*Cin)
        return jnp.transpose(w, (0, 3, 1, 2)).reshape(3 * w.shape[3], 3 * w.shape[2])

    # conv1 + conv2 as one block-diagonal 1x1 weight (channel-major).
    w12 = jnp.zeros((2 * Co, Cl + Ci), jnp.float32)
    w12 = w12.at[:Co, :Cl].set(jnp.transpose(params['w1']))
    w12 = w12.at[Co:, Cl:].set(jnp.transpose(params['w2']))

    w3st = g3stack(params['w3'])              # (3Co, 3Co)

    # torch.chunk(fuse, 2): fold into zero-padded input channels; s2's 1x1 is appended
    # as extra output rows that read only the centre (dx=1) tap group.
    ws1_full = jnp.zeros((3, 3, Co, Co), jnp.float32).at[:, :, :Ch, :].set(params['ws1'])
    ws2_full = jnp.zeros((Co, Co), jnp.float32).at[Ch:, :].set(params['ws2'])
    wsst = jnp.zeros((4 * Co, 3 * Co), jnp.float32)
    wsst = wsst.at[:3 * Co, :].set(g3stack(ws1_full))
    wsst = wsst.at[3 * Co:, Co:2 * Co].set(jnp.transpose(ws2_full))

    wfst = g3stack(params['wf'])              # (3Co, 6Co), cat([ml1, ml2]) channel order

    inputs = (
        canvas, mask,
        w12, col(params['b1']), col(params['a1']),
        w3st, col(params['b3']), col(params['a3']),
        wsst, col(params['bs1']), col(params['as1']), col(params['bs2']),
        wfst, col(params['bf']), col(params['af']),
    )

    def resident(a):                          # small weights stay resident in VMEM
        zeros = (0,) * a.ndim
        return pl.BlockSpec(tuple(a.shape), lambda n, _z=zeros: _z)

    in_specs = [pl.BlockSpec((None, Cl + Ci, P), lambda n: (n, 0, 0))]
    in_specs += [resident(a) for a in inputs[1:]]

    out_shape = jax.ShapeDtypeStruct((N, Co, P), jnp.float32)
    out_specs = pl.BlockSpec((None, Co, P), lambda n: (n, 0, 0))

    # VMEM budget derived from the real footprint (double-buffered I/O + scratch +
    # resident weights), with generous headroom; well below v7x's 64 MiB.
    fp32 = 4
    in_bytes = (Cl + Ci) * P * fp32
    out_bytes = Co * P * fp32
    weight_bytes = int(sum(int(np.prod(a.shape)) for a in inputs[1:]) * fp32)
    scratch_bytes = (6 * Co + 2 * Co) * P * fp32
    need = 2 * (in_bytes + out_bytes) + 2 * weight_bytes + scratch_bytes
    vmem_limit = int(min(48 * 1024 * 1024, max(4 * need, 16 * 1024 * 1024)))

    mm_flops = 2 * P * (2 * Co * (Cl + Ci) + 9 * Co * Co + 12 * Co * Co + 18 * Co * Co)
    cost = pl.CostEstimate(
        flops=int(N * (mm_flops + 30 * Co * P)),
        transcendentals=int(N * Co * P),
        bytes_accessed=int(N * (in_bytes + out_bytes) + weight_bytes),
    )

    kernel = functools.partial(_gfu_kernel, co=Co, row_shift=Wp)

    out_flat = pl.pallas_call(
        kernel,
        out_shape=out_shape,
        grid=(N,),
        in_specs=in_specs,
        out_specs=out_specs,
        scratch_shapes=[
            pltpu.VMEM((6 * Co, P), jnp.float32),   # dx-tap packing (K = 3*Cin)
            pltpu.VMEM((2 * Co, P), jnp.float32),   # x_act / y_act stash
        ],
        compiler_params=pltpu.CompilerParams(
            dimension_semantics=("parallel",),
            vmem_limit_bytes=vmem_limit,
        ),
        cost_estimate=cost,
    )(*inputs)

    # Contiguous reshape + crop of the guard ring (no transpose, single pass).
    return out_flat.reshape(N, Co, E, Wp)[:, :, 1:H + 1, 1:W + 1]


# --------------------------------------------------------------------------
# Deterministic parameters (BN folded into the convs as eval-mode affine).
# --------------------------------------------------------------------------
def make_params(key, Cl, Ci, Co):
    Ch = Co // 2
    ks = iter(jax.random.split(key, 32))

    def conv_w(shape):
        return 0.1 * jax.random.normal(next(ks), shape, jnp.float32)

    def bn_fold(c):
        gamma = 1.0 + 0.1 * jax.random.normal(next(ks), (c,), jnp.float32)
        beta = 0.1 * jax.random.normal(next(ks), (c,), jnp.float32)
        mean = 0.05 * jax.random.normal(next(ks), (c,), jnp.float32)
        var = 1.0 + 0.1 * jax.random.uniform(next(ks), (c,), jnp.float32)
        scale = gamma / jnp.sqrt(var + 1e-5)
        return scale, beta - mean * scale

    def prelu_a(c):
        return 0.1 + 0.3 * jax.random.uniform(next(ks), (c,), jnp.float32)

    p = {}
    w = conv_w((Cl, Co)); s, b = bn_fold(Co)              # conv1: 1x1 + BN + PReLU
    p['w1'], p['b1'], p['a1'] = w * s, b, prelu_a(Co)
    p['w2'] = conv_w((Ci, Co))                            # conv2: 1x1 (no BN/bias)
    w = conv_w((3, 3, Co, Co)); s, b = bn_fold(Co)        # conv3: 3x3 + BN + PReLU
    p['w3'], p['b3'], p['a3'] = w * s, b, prelu_a(Co)
    w = conv_w((3, 3, Ch, Co)); s, b = bn_fold(Co)        # s1: 3x3 + BN + PReLU
    p['ws1'], p['bs1'], p['as1'] = w * s, b, prelu_a(Co)
    w = conv_w((Ch, Co)); s, b = bn_fold(Co)              # s2: 1x1 -> BN -> Sigmoid
    p['ws2'], p['bs2'] = w * s, b
    w = conv_w((3, 3, 2 * Co, Co)); s, b = bn_fold(Co)    # fuse: 3x3 + BN + PReLU
    p['wf'], p['bf'], p['af'] = w * s, b, prelu_a(Co)
    return p


# --------------------------------------------------------------------------
# Pure-JAX reference (NCHW, same folded-BN params) for verification.
# --------------------------------------------------------------------------
def reference(x_gui, y_high, params):
    _, _, H, W = x_gui.shape
    Co = params['w1'].shape[-1]
    Ch = Co // 2
    y_up = bilinear_upsample_align_corners(y_high, H, W)
    hp = lax.Precision.HIGHEST

    def c1x1(x, w, b=None):
        o = jnp.einsum('nchw,cd->ndhw', x, w, precision=hp)
        return o if b is None else o + b.reshape(1, -1, 1, 1)

    def c3x3(x, w, b):
        o = lax.conv_general_dilated(
            x, w, (1, 1), 'SAME',
            dimension_numbers=('NCHW', 'HWIO', 'NCHW'), precision=hp)
        return o + b.reshape(1, -1, 1, 1)

    def prelu(v, a):
        return jnp.where(v > 0, v, a.reshape(1, -1, 1, 1) * v)

    xg = prelu(c1x1(x_gui, params['w1'], params['b1']), params['a1'])
    yu = jnp.maximum(c1x1(y_up, params['w2']), 0.0)
    fuse = prelu(c3x3(xg + yu, params['w3'], params['b3']), params['a3'])
    s1_in, s2_in = fuse[:, :Ch], fuse[:, Ch:]
    s1 = prelu(c3x3(s1_in, params['ws1'], params['bs1']), params['as1'])
    s2 = 1.0 / (1.0 + jnp.exp(-c1x1(s2_in, params['ws2'], params['bs2'])))
    out = prelu(c3x3(jnp.concatenate([s1 * yu, s2 * xg], axis=1),
                     params['wf'], params['bf']), params['af'])
    return out


if __name__ == "__main__":
    key = jax.random.PRNGKey(0)
    k1, k2, k3 = jax.random.split(key, 3)

    # NCHW like the PyTorch module: batch=2, low_ch=4, in_ch=8, out_ch=8,
    # x_gui 40x32, y_high 20x16 (bilinearly upsampled to 40x32 inside).
    N, H, W = 2, 40, 32
    Cl, Ci, Co = 4, 8, 8
    x_gui = jax.random.normal(k1, (N, Cl, H, W), jnp.float32)
    y_high = jax.random.normal(k2, (N, Ci, H // 2, W // 2), jnp.float32)
    params = make_params(k3, Cl, Ci, Co)

    out = jax.jit(global_feature_upsample)(x_gui, y_high, params)
    out = jax.block_until_ready(out)

    ref = reference(x_gui, y_high, params)
    assert out.shape == (N, Co, H, W), f"bad shape {out.shape}"
    err = float(jnp.max(jnp.abs(out - ref)))
    assert err < 5e-3, f"max abs error {err}"
    print("KERNEL_OK")
</pallas_src>

<mosaic_0001>
module attributes {stable_mosaic.version = 11 : i64} {
  func.func @_gfu_kernel(%arg0: i32, %arg1: memref<1x12x1428xf32, #tpu.memory_space<vmem>>, %arg2: memref<1x1428xf32, #tpu.memory_space<vmem>>, %arg3: memref<16x12xf32, #tpu.memory_space<vmem>>, %arg4: memref<8x1xf32, #tpu.memory_space<vmem>>, %arg5: memref<8x1xf32, #tpu.memory_space<vmem>>, %arg6: memref<24x24xf32, #tpu.memory_space<vmem>>, %arg7: memref<8x1xf32, #tpu.memory_space<vmem>>, %arg8: memref<8x1xf32, #tpu.memory_space<vmem>>, %arg9: memref<32x24xf32, #tpu.memory_space<vmem>>, %arg10: memref<8x1xf32, #tpu.memory_space<vmem>>, %arg11: memref<8x1xf32, #tpu.memory_space<vmem>>, %arg12: memref<8x1xf32, #tpu.memory_space<vmem>>, %arg13: memref<24x48xf32, #tpu.memory_space<vmem>>, %arg14: memref<8x1xf32, #tpu.memory_space<vmem>>, %arg15: memref<8x1xf32, #tpu.memory_space<vmem>>, %arg16: memref<1x8x1428xf32, #tpu.memory_space<vmem>>, %arg17: memref<48x1428xf32, #tpu.memory_space<vmem>>, %arg18: memref<16x1428xf32, #tpu.memory_space<vmem>>) attributes {dimension_semantics = [#tpu.dimension_semantics<parallel>], iteration_bounds = array<i64: 2>, scalar_prefetch = 0 : i64, scratch_operands = 2 : i64, tpu.core_type = #tpu.core_type<tc>, window_params = [{transform_indices = @transform_0, window_bounds = array<i64: 1, 12, 1428>}, {pipeline_mode = #tpu.pipeline_mode<synchronous>, transform_indices = @transform_1, window_bounds = array<i64: 1, 1428>}, {pipeline_mode = #tpu.pipeline_mode<synchronous>, transform_indices = @transform_2, window_bounds = array<i64: 16, 12>}, {pipeline_mode = #tpu.pipeline_mode<synchronous>, transform_indices = @transform_3, window_bounds = array<i64: 8, 1>}, {pipeline_mode = #tpu.pipeline_mode<synchronous>, transform_indices = @transform_4, window_bounds = array<i64: 8, 1>}, {pipeline_mode = #tpu.pipeline_mode<synchronous>, transform_indices = @transform_5, window_bounds = array<i64: 24, 24>}, {pipeline_mode = #tpu.pipeline_mode<synchronous>, transform_indices = @transform_6, window_bounds = array<i64: 8, 1>}, {pipeline_mode = #tpu.pipeline_mode<synchronous>, transform_indices = @transform_7, window_bounds = array<i64: 8, 1>}, {pipeline_mode = #tpu.pipeline_mode<synchronous>, transform_indices = @transform_8, window_bounds = array<i64: 32, 24>}, {pipeline_mode = #tpu.pipeline_mode<synchronous>, transform_indices = @transform_9, window_bounds = array<i64: 8, 1>}, {pipeline_mode = #tpu.pipeline_mode<synchronous>, transform_indices = @transform_10, window_bounds = array<i64: 8, 1>}, {pipeline_mode = #tpu.pipeline_mode<synchronous>, transform_indices = @transform_11, window_bounds = array<i64: 8, 1>}, {pipeline_mode = #tpu.pipeline_mode<synchronous>, transform_indices = @transform_12, window_bounds = array<i64: 24, 48>}, {pipeline_mode = #tpu.pipeline_mode<synchronous>, transform_indices = @transform_13, window_bounds = array<i64: 8, 1>}, {pipeline_mode = #tpu.pipeline_mode<synchronous>, transform_indices = @transform_14, window_bounds = array<i64: 8, 1>}, {transform_indices = @transform_15, window_bounds = array<i64: 1, 8, 1428>}]} {
    %c0 = arith.constant 0 : index
    %c0_0 = arith.constant 0 : index
    %0 = vector.load %arg2[%c0, %c0_0] : memref<1x1428xf32, #tpu.memory_space<vmem>>, vector<1x1428xf32>
    %c0_1 = arith.constant 0 : index
    %c0_2 = arith.constant 0 : index
    %1 = vector.load %arg3[%c0_1, %c0_2] : memref<16x12xf32, #tpu.memory_space<vmem>>, vector<16x12xf32>
    %c0_3 = arith.constant 0 : index
    %c0_4 = arith.constant 0 : index
    %c0_5 = arith.constant 0 : index
    %2 = vector.load %arg1[%c0_3, %c0_4, %c0_5] : memref<1x12x1428xf32, #tpu.memory_space<vmem>>, vector<1x12x1428xf32>
    %3 = vector.shape_cast %2 : vector<1x12x1428xf32> to vector<12x1428xf32>
    %cst = arith.constant dense<0.000000e+00> : vector<16x1428xf32>
    %4 = tpu.matmul %1, %3, %cst {dimension_numbers = #tpu.dot_dimension_numbers<[1], [0], [0], [1], [0, 0, 1, 1], [], []>} : vector<16x12xf32>, vector<12x1428xf32>, vector<16x1428xf32> -> vector<16x1428xf32>
    %5 = vector.extract_strided_slice %4 {offsets = [0, 0], sizes = [8, 1428], strides = [1, 1]} : vector<16x1428xf32> to vector<8x1428xf32>
    %c0_6 = arith.constant 0 : index
    %c0_7 = arith.constant 0 : index
    %6 = vector.load %arg4[%c0_6, %c0_7] : memref<8x1xf32, #tpu.memory_space<vmem>>, vector<8x1xf32>
    %7 = vector.broadcast %6 : vector<8x1xf32> to vector<8x1428xf32>
    %8 = arith.addf %5, %7 : vector<8x1428xf32>
    %c0_8 = arith.constant 0 : index
    %c0_9 = arith.constant 0 : index
    %9 = vector.load %arg5[%c0_8, %c0_9] : memref<8x1xf32, #tpu.memory_space<vmem>>, vector<8x1xf32>
    %cst_10 = arith.constant 0.000000e+00 : f32
    %10 = vector.broadcast %cst_10 : f32 to vector<8x1428xf32>
    %11 = arith.cmpf ogt, %8, %10 : vector<8x1428xf32>
    %12 = vector.broadcast %9 : vector<8x1xf32> to vector<8x1428xf32>
    %13 = arith.mulf %12, %8 : vector<8x1428xf32>
    %14 = arith.select %11, %8, %13 : vector<8x1428xi1>, vector<8x1428xf32>
    %15 = vector.broadcast %0 : vector<1x1428xf32> to vector<8x1428xf32>
    %16 = arith.mulf %14, %15 : vector<8x1428xf32>
    %17 = vector.extract_strided_slice %4 {offsets = [8, 0], sizes = [8, 1428], strides = [1, 1]} : vector<16x1428xf32> to vector<8x1428xf32>
    %cst_11 = arith.constant 0.000000e+00 : f32
    %18 = vector.broadcast %cst_11 : f32 to vector<8x1428xf32>
    %19 = arith.maximumf %17, %18 : vector<8x1428xf32>
    %c0_12 = arith.constant 0 : index
    %c0_13 = arith.constant 0 : index
    %20 = vector.load %arg18[%c0_12, %c0_13] : memref<16x1428xf32, #tpu.memory_space<vmem>>, vector<8x1428xf32>
    tpu.vector_store %arg18[%c0_12, %c0_13], %16 {strides = array<i32>} : memref<16x1428xf32, #tpu.memory_space<vmem>>, vector<8x1428xf32>,
    %c8 = arith.constant 8 : index
    %c0_14 = arith.constant 0 : index
    %21 = vector.load %arg18[%c8, %c0_14] : memref<16x1428xf32, #tpu.memory_space<vmem>>, vector<8x1428xf32>
    tpu.vector_store %arg18[%c8, %c0_14], %19 {strides = array<i32>} : memref<16x1428xf32, #tpu.memory_space<vmem>>, vector<8x1428xf32>,
    %c0_15 = arith.constant 0 : index
    %c0_16 = arith.constant 0 : index
    %22 = vector.load %arg6[%c0_15, %c0_16] : memref<24x24xf32, #tpu.memory_space<vmem>>, vector<24x24xf32>
    %23 = arith.addf %16, %19 : vector<8x1428xf32>
    %c1_i32 = arith.constant 1 : i32
    %24 = tpu.dynamic_rotate %23 by %c1_i32 dim 1 : vector<8x1428xf32>, i32 -> vector<8x1428xf32>
    %c0_17 = arith.constant 0 : index
    %c0_18 = arith.constant 0 : index
    %25 = vector.load %arg17[%c0_17, %c0_18] : memref<48x1428xf32, #tpu.memory_space<vmem>>, vector<8x1428xf32>
    tpu.vector_store %arg17[%c0_17, %c0_18], %24 {strides = array<i32>} : memref<48x1428xf32, #tpu.memory_space<vmem>>, vector<8x1428xf32>,
    %c8_19 = arith.constant 8 : index
    %c0_20 = arith.constant 0 : index
    %26 = vector.load %arg17[%c8_19, %c0_20] : memref<48x1428xf32, #tpu.memory_space<vmem>>, vector<8x1428xf32>
    tpu.vector_store %arg17[%c8_19, %c0_20], %23 {strides = array<i32>} : memref<48x1428xf32, #tpu.memory_space<vmem>>, vector<8x1428xf32>,
    %c1427_i32 = arith.constant 1427 : i32
    %27 = tpu.dynamic_rotate %23 by %c1427_i32 dim 1 : vector<8x1428xf32>, i32 -> vector<8x1428xf32>
    %c16 = arith.constant 16 : index
    %c0_21 = arith.constant 0 : index
    %28 = vector.load %arg17[%c16, %c0_21] : memref<48x1428xf32, #tpu.memory_space<vmem>>, vector<8x1428xf32>
    tpu.vector_store %arg17[%c16, %c0_21], %27 {strides = array<i32>} : memref<48x1428xf32, #tpu.memory_space<vmem>>, vector<8x1428xf32>,
    %c0_22 = arith.constant 0 : index
    %c0_23 = arith.constant 0 : index
    %29 = vector.load %arg17[%c0_22, %c0_23] : memref<48x1428xf32, #tpu.memory_space<vmem>>, vector<24x1428xf32>
    %cst_24 = arith.constant dense<0.000000e+00> : vector<24x1428xf32>
    %30 = tpu.matmul %22, %29, %cst_24 {dimension_numbers = #tpu.dot_dimension_numbers<[1], [0], [0], [1], [0, 0, 1, 1], [], []>} : vector<24x24xf32>, vector<24x1428xf32>, vector<24x1428xf32> -> vector<24x1428xf32>
    %31 = vector.extract_strided_slice %30 {offsets = [0, 0], sizes = [8, 1428], strides = [1, 1]} : vector<24x1428xf32> to vector<8x1428xf32>
    %32 = vector.extract_strided_slice %30 {offsets = [8, 0], sizes = [8, 1428], strides = [1, 1]} : vector<24x1428xf32> to vector<8x1428xf32>
    %33 = vector.extract_strided_slice %30 {offsets = [16, 0], sizes = [8, 1428], strides = [1, 1]} : vector<24x1428xf32> to vector<8x1428xf32>
    %c34_i32 = arith.constant 34 : i32
    %34 = tpu.dynamic_rotate %31 by %c34_i32 dim 1 : vector<8x1428xf32>, i32 -> vector<8x1428xf32>
    %35 = arith.addf %32, %34 : vector<8x1428xf32>
    %c1394_i32 = arith.constant 1394 : i32
    %36 = tpu.dynamic_rotate %33 by %c1394_i32 dim 1 : vector<8x1428xf32>, i32 -> vector<8x1428xf32>
    %37 = arith.addf %35, %36 : vector<8x1428xf32>
    %c0_25 = arith.constant 0 : index
    %c0_26 = arith.constant 0 : index
    %38 = vector.load %arg7[%c0_25, %c0_26] : memref<8x1xf32, #tpu.memory_space<vmem>>, vector<8x1xf32>
    %39 = vector.broadcast %38 : vector<8x1xf32> to vector<8x1428xf32>
    %40 = arith.addf %37, %39 : vector<8x1428xf32>
    %c0_27 = arith.constant 0 : index
    %c0_28 = arith.constant 0 : index
    %41 = vector.load %arg8[%c0_27, %c0_28] : memref<8x1xf32, #tpu.memory_space<vmem>>, vector<8x1xf32>
    %cst_29 = arith.constant 0.000000e+00 : f32
    %42 = vector.broadcast %cst_29 : f32 to vector<8x1428xf32>
    %43 = arith.cmpf ogt, %40, %42 : vector<8x1428xf32>
    %44 = vector.broadcast %41 : vector<8x1xf32> to vector<8x1428xf32>
    %45 = arith.mulf %44, %40 : vector<8x1428xf32>
    %46 = arith.select %43, %40, %45 : vector<8x1428xi1>, vector<8x1428xf32>
    %47 = vector.broadcast %0 : vector<1x1428xf32> to vector<8x1428xf32>
    %48 = arith.mulf %46, %47 : vector<8x1428xf32>
    %c0_30 = arith.constant 0 : index
    %c0_31 = arith.constant 0 : index
    %49 = vector.load %arg9[%c0_30, %c0_31] : memref<32x24xf32, #tpu.memory_space<vmem>>, vector<32x24xf32>
    %c1_i32_32 = arith.constant 1 : i32
    %50 = tpu.dynamic_rotate %48 by %c1_i32_32 dim 1 : vector<8x1428xf32>, i32 -> vector<8x1428xf32>
    %c0_33 = arith.constant 0 : index
    %c0_34 = arith.constant 0 : index
    %51 = vector.load %arg17[%c0_33, %c0_34] : memref<48x1428xf32, #tpu.memory_space<vmem>>, vector<8x1428xf32>
    tpu.vector_store %arg17[%c0_33, %c0_34], %50 {strides = array<i32>} : memref<48x1428xf32, #tpu.memory_space<vmem>>, vector<8x1428xf32>,
    %c8_35 = arith.constant 8 : index
    %c0_36 = arith.constant 0 : index
    %52 = vector.load %arg17[%c8_35, %c0_36] : memref<48x1428xf32, #tpu.memory_space<vmem>>, vector<8x1428xf32>
    tpu.vector_store %arg17[%c8_35, %c0_36], %48 {strides = array<i32>} : memref<48x1428xf32, #tpu.memory_space<vmem>>, vector<8x1428xf32>,
    %c1427_i32_37 = arith.constant 1427 : i32
    %53 = tpu.dynamic_rotate %48 by %c1427_i32_37 dim 1 : vector<8x1428xf32>, i32 -> vector<8x1428xf32>
    %c16_38 = arith.constant 16 : index
    %c0_39 = arith.constant 0 : index
    %54 = vector.load %arg17[%c16_38, %c0_39] : memref<48x1428xf32, #tpu.memory_space<vmem>>, vector<8x1428xf32>
    tpu.vector_store %arg17[%c16_38, %c0_39], %53 {strides = array<i32>} : memref<48x1428xf32, #tpu.memory_space<vmem>>, vector<8x1428xf32>,
    %c0_40 = arith.constant 0 : index
    %c0_41 = arith.constant 0 : index
    %55 = vector.load %arg17[%c0_40, %c0_41] : memref<48x1428xf32, #tpu.memory_space<vmem>>, vector<24x1428xf32>
    %cst_42 = arith.constant dense<0.000000e+00> : vector<32x1428xf32>
    %56 = tpu.matmul %49, %55, %cst_42 {dimension_numbers = #tpu.dot_dimension_numbers<[1], [0], [0], [1], [0, 0, 1, 1], [], []>} : vector<32x24xf32>, vector<24x1428xf32>, vector<32x1428xf32> -> vector<32x1428xf32>
    %57 = vector.extract_strided_slice %56 {offsets = [0, 0], sizes = [24, 1428], strides = [1, 1]} : vector<32x1428xf32> to vector<24x1428xf32>
    %58 = vector.extract_strided_slice %57 {offsets = [0, 0], sizes = [8, 1428], strides = [1, 1]} : vector<24x1428xf32> to vector<8x1428xf32>
    %59 = vector.extract_strided_slice %57 {offsets = [8, 0], sizes = [8, 1428], strides = [1, 1]} : vector<24x1428xf32> to vector<8x1428xf32>
    %60 = vector.extract_strided_slice %57 {offsets = [16, 0], sizes = [8, 1428], strides = [1, 1]} : vector<24x1428xf32> to vector<8x1428xf32>
    %c34_i32_43 = arith.constant 34 : i32
    %61 = tpu.dynamic_rotate %58 by %c34_i32_43 dim 1 : vector<8x1428xf32>, i32 -> vector<8x1428xf32>
    %62 = arith.addf %59, %61 : vector<8x1428xf32>
    %c1394_i32_44 = arith.constant 1394 : i32
    %63 = tpu.dynamic_rotate %60 by %c1394_i32_44 dim 1 : vector<8x1428xf32>, i32 -> vector<8x1428xf32>
    %64 = arith.addf %62, %63 : vector<8x1428xf32>
    %c0_45 = arith.constant 0 : index
    %c0_46 = arith.constant 0 : index
    %65 = vector.load %arg10[%c0_45, %c0_46] : memref<8x1xf32, #tpu.memory_space<vmem>>, vector<8x1xf32>
    %66 = vector.broadcast %65 : vector<8x1xf32> to vector<8x1428xf32>
    %67 = arith.addf %64, %66 : vector<8x1428xf32>
    %c0_47 = arith.constant 0 : index
    %c0_48 = arith.constant 0 : index
    %68 = vector.load %arg11[%c0_47, %c0_48] : memref<8x1xf32, #tpu.memory_space<vmem>>, vector<8x1xf32>
    %cst_49 = arith.constant 0.000000e+00 : f32
    %69 = vector.broadcast %cst_49 : f32 to vector<8x1428xf32>
    %70 = arith.cmpf ogt, %67, %69 : vector<8x1428xf32>
    %71 = vector.broadcast %68 : vector<8x1xf32> to vector<8x1428xf32>
    %72 = arith.mulf %71, %67 : vector<8x1428xf32>
    %73 = arith.select %70, %67, %72 : vector<8x1428xi1>, vector<8x1428xf32>
    %74 = vector.extract_strided_slice %56 {offsets = [24, 0], sizes = [8, 1428], strides = [1, 1]} : vector<32x1428xf32> to vector<8x1428xf32>
    %c0_50 = arith.constant 0 : index
    %c0_51 = arith.constant 0 : index
    %75 = vector.load %arg12[%c0_50, %c0_51] : memref<8x1xf32, #tpu.memory_space<vmem>>, vector<8x1xf32>
    %76 = vector.broadcast %75 : vector<8x1xf32> to vector<8x1428xf32>
    %77 = arith.addf %74, %76 : vector<8x1428xf32>
    %cst_52 = arith.constant 0.000000e+00 : f32
    %78 = vector.broadcast %cst_52 : f32 to vector<8x1428xf32>
    %79 = arith.subf %78, %77 : vector<8x1428xf32>
    %80 = math.exp %79 : vector<8x1428xf32>
    %cst_53 = arith.constant 1.000000e+00 : f32
    %81 = vector.broadcast %cst_53 : f32 to vector<8x1428xf32>
    %82 = arith.addf %81, %80 : vector<8x1428xf32>
    %cst_54 = arith.constant 1.000000e+00 : f32
    %83 = vector.broadcast %cst_54 : f32 to vector<8x1428xf32>
    %84 = arith.divf %83, %82 : vector<8x1428xf32>
    %c8_55 = arith.constant 8 : index
    %c0_56 = arith.constant 0 : index
    %85 = vector.load %arg18[%c8_55, %c0_56] : memref<16x1428xf32, #tpu.memory_space<vmem>>, vector<8x1428xf32>
    %86 = arith.mulf %73, %85 : vector<8x1428xf32>
    %c0_57 = arith.constant 0 : index
    %c0_58 = arith.constant 0 : index
    %87 = vector.load %arg18[%c0_57, %c0_58] : memref<16x1428xf32, #tpu.memory_space<vmem>>, vector<8x1428xf32>
    %88 = arith.mulf %84, %87 : vector<8x1428xf32>
    %c0_59 = arith.constant 0 : index
    %c0_60 = arith.constant 0 : index
    %89 = vector.load %arg13[%c0_59, %c0_60] : memref<24x48xf32, #tpu.memory_space<vmem>>, vector<24x48xf32>
    %c1_i32_61 = arith.constant 1 : i32
    %90 = tpu.dynamic_rotate %86 by %c1_i32_61 dim 1 : vector<8x1428xf32>, i32 -> vector<8x1428xf32>
    %c0_62 = arith.constant 0 : index
    %c0_63 = arith.constant 0 : index
    %91 = vector.load %arg17[%c0_62, %c0_63] : memref<48x1428xf32, #tpu.memory_space<vmem>>, vector<8x1428xf32>
    tpu.vector_store %arg17[%c0_62, %c0_63], %90 {strides = array<i32>} : memref<48x1428xf32, #tpu.memory_space<vmem>>, vector<8x1428xf32>,
    %c1_i32_64 = arith.constant 1 : i32
    %92 = tpu.dynamic_rotate %88 by %c1_i32_64 dim 1 : vector<8x1428xf32>, i32 -> vector<8x1428xf32>
    %c8_65 = arith.constant 8 : index
    %c0_66 = arith.constant 0 : index
    %93 = vector.load %arg17[%c8_65, %c0_66] : memref<48x1428xf32, #tpu.memory_space<vmem>>, vector<8x1428xf32>
    tpu.vector_store %arg17[%c8_65, %c0_66], %92 {strides = array<i32>} : memref<48x1428xf32, #tpu.memory_space<vmem>>, vector<8x1428xf32>,
    %c16_67 = arith.constant 16 : index
    %c0_68 = arith.constant 0 : index
    %94 = vector.load %arg17[%c16_67, %c0_68] : memref<48x1428xf32, #tpu.memory_space<vmem>>, vector<8x1428xf32>
    tpu.vector_store %arg17[%c16_67, %c0_68], %86 {strides = array<i32>} : memref<48x1428xf32, #tpu.memory_space<vmem>>, vector<8x1428xf32>,
    %c24 = arith.constant 24 : index
    %c0_69 = arith.constant 0 : index
    %95 = vector.load %arg17[%c24, %c0_69] : memref<48x1428xf32, #tpu.memory_space<vmem>>, vector<8x1428xf32>
    tpu.vector_store %arg17[%c24, %c0_69], %88 {strides = array<i32>} : memref<48x1428xf32, #tpu.memory_space<vmem>>, vector<8x1428xf32>,
    %c1427_i32_70 = arith.constant 1427 : i32
    %96 = tpu.dynamic_rotate %86 by %c1427_i32_70 dim 1 : vector<8x1428xf32>, i32 -> vector<8x1428xf32>
    %c32 = arith.constant 32 : index
    %c0_71 = arith.constant 0 : index
    %97 = vector.load %arg17[%c32, %c0_71] : memref<48x1428xf32, #tpu.memory_space<vmem>>, vector<8x1428xf32>
    tpu.vector_store %arg17[%c32, %c0_71], %96 {strides = array<i32>} : memref<48x1428xf32, #tpu.memory_space<vmem>>, vector<8x1428xf32>,
    %c1427_i32_72 = arith.constant 1427 : i32
    %98 = tpu.dynamic_rotate %88 by %c1427_i32_72 dim 1 : vector<8x1428xf32>, i32 -> vector<8x1428xf32>
    %c40 = arith.constant 40 : index
    %c0_73 = arith.constant 0 : index
    %99 = vector.load %arg17[%c40, %c0_73] : memref<48x1428xf32, #tpu.memory_space<vmem>>, vector<8x1428xf32>
    tpu.vector_store %arg17[%c40, %c0_73], %98 {strides = array<i32>} : memref<48x1428xf32, #tpu.memory_space<vmem>>, vector<8x1428xf32>,
    %c0_74 = arith.constant 0 : index
    %c0_75 = arith.constant 0 : index
    %100 = vector.load %arg17[%c0_74, %c0_75] : memref<48x1428xf32, #tpu.memory_space<vmem>>, vector<48x1428xf32>
    %cst_76 = arith.constant dense<0.000000e+00> : vector<24x1428xf32>
    %101 = tpu.matmul %89, %100, %cst_76 {dimension_numbers = #tpu.dot_dimension_numbers<[1], [0], [0], [1], [0, 0, 1, 1], [], []>} : vector<24x48xf32>, vector<48x1428xf32>, vector<24x1428xf32> -> vector<24x1428xf32>
    %102 = vector.extract_strided_slice %101 {offsets = [0, 0], sizes = [8, 1428], strides = [1, 1]} : vector<24x1428xf32> to vector<8x1428xf32>
    %103 = vector.extract_strided_slice %101 {offsets = [8, 0], sizes = [8, 1428], strides = [1, 1]} : vector<24x1428xf32> to vector<8x1428xf32>
    %104 = vector.extract_strided_slice %101 {offsets = [16, 0], sizes = [8, 1428], strides = [1, 1]} : vector<24x1428xf32> to vector<8x1428xf32>
    %c34_i32_77 = arith.constant 34 : i32
    %105 = tpu.dynamic_rotate %102 by %c34_i32_77 dim 1 : vector<8x1428xf32>, i32 -> vector<8x1428xf32>
    %106 = arith.addf %103, %105 : vector<8x1428xf32>
    %c1394_i32_78 = arith.constant 1394 : i32
    %107 = tpu.dynamic_rotate %104 by %c1394_i32_78 dim 1 : vector<8x1428xf32>, i32 -> vector<8x1428xf32>
    %108 = arith.addf %106, %107 : vector<8x1428xf32>
    %c0_79 = arith.constant 0 : index
    %c0_80 = arith.constant 0 : index
    %109 = vector.load %arg14[%c0_79, %c0_80] : memref<8x1xf32, #tpu.memory_space<vmem>>, vector<8x1xf32>
    %110 = vector.broadcast %109 : vector<8x1xf32> to vector<8x1428xf32>
    %111 = arith.addf %108, %110 : vector<8x1428xf32>
    %c0_81 = arith.constant 0 : index
    %c0_82 = arith.constant 0 : index
    %112 = vector.load %arg15[%c0_81, %c0_82] : memref<8x1xf32, #tpu.memory_space<vmem>>, vector<8x1xf32>
    %cst_83 = arith.constant 0.000000e+00 : f32
    %113 = vector.broadcast %cst_83 : f32 to vector<8x1428xf32>
    %114 = arith.cmpf ogt, %111, %113 : vector<8x1428xf32>
    %115 = vector.broadcast %112 : vector<8x1xf32> to vector<8x1428xf32>
    %116 = arith.mulf %115, %111 : vector<8x1428xf32>
    %117 = arith.select %114, %111, %116 : vector<8x1428xi1>, vector<8x1428xf32>
    %c0_84 = arith.constant 0 : index
    %c0_85 = arith.constant 0 : index
    %c0_86 = arith.constant 0 : index
    %118 = vector.load %arg16[%c0_84, %c0_85, %c0_86] : memref<1x8x1428xf32, #tpu.memory_space<vmem>>, vector<1x8x1428xf32>
    %119 = vector.shape_cast %118 : vector<1x8x1428xf32> to vector<8x1428xf32>
    %120 = vector.shape_cast %117 : vector<8x1428xf32> to vector<1x8x1428xf32>
    tpu.vector_store %arg16[%c0_84, %c0_85, %c0_86], %120 {strides = array<i32>} : memref<1x8x1428xf32, #tpu.memory_space<vmem>>, vector<1x8x1428xf32>,
    return
  }
  func.func @transform_0(%arg0: i32) -> (i32, i32, i32) {
    %c0_i32 = arith.constant 0 : i32
    %c0_i32_0 = arith.constant 0 : i32
    %c0_i32_1 = arith.constant 0 : i32
    return %arg0, %c0_i32, %c0_i32_0 : i32, i32, i32
  }
  func.func @transform_1(%arg0: i32) -> (i32, i32) {
    %c0_i32 = arith.constant 0 : i32
    %c0_i32_0 = arith.constant 0 : i32
    %c0_i32_1 = arith.constant 0 : i32
    return %c0_i32, %c0_i32_0 : i32, i32
  }
  func.func @transform_2(%arg0: i32) -> (i32, i32) {
    %c0_i32 = arith.constant 0 : i32
    %c0_i32_0 = arith.constant 0 : i32
    %c0_i32_1 = arith.constant 0 : i32
    return %c0_i32, %c0_i32_0 : i32, i32
  }
  func.func @transform_3(%arg0: i32) -> (i32, i32) {
    %c0_i32 = arith.constant 0 : i32
    %c0_i32_0 = arith.constant 0 : i32
    %c0_i32_1 = arith.constant 0 : i32
    return %c0_i32, %c0_i32_0 : i32, i32
  }
  func.func @transform_4(%arg0: i32) -> (i32, i32) {
    %c0_i32 = arith.constant 0 : i32
    %c0_i32_0 = arith.constant 0 : i32
    %c0_i32_1 = arith.constant 0 : i32
    return %c0_i32, %c0_i32_0 : i32, i32
  }
  func.func @transform_5(%arg0: i32) -> (i32, i32) {
    %c0_i32 = arith.constant 0 : i32
    %c0_i32_0 = arith.constant 0 : i32
    %c0_i32_1 = arith.constant 0 : i32
    return %c0_i32, %c0_i32_0 : i32, i32
  }
  func.func @transform_6(%arg0: i32) -> (i32, i32) {
    %c0_i32 = arith.constant 0 : i32
    %c0_i32_0 = arith.constant 0 : i32
    %c0_i32_1 = arith.constant 0 : i32
    return %c0_i32, %c0_i32_0 : i32, i32
  }
  func.func @transform_7(%arg0: i32) -> (i32, i32) {
    %c0_i32 = arith.constant 0 : i32
    %c0_i32_0 = arith.constant 0 : i32
    %c0_i32_1 = arith.constant 0 : i32
    return %c0_i32, %c0_i32_0 : i32, i32
  }
  func.func @transform_8(%arg0: i32) -> (i32, i32) {
    %c0_i32 = arith.constant 0 : i32
    %c0_i32_0 = arith.constant 0 : i32
    %c0_i32_1 = arith.constant 0 : i32
    return %c0_i32, %c0_i32_0 : i32, i32
  }
  func.func @transform_9(%arg0: i32) -> (i32, i32) {
    %c0_i32 = arith.constant 0 : i32
    %c0_i32_0 = arith.constant 0 : i32
    %c0_i32_1 = arith.constant 0 : i32
    return %c0_i32, %c0_i32_0 : i32, i32
  }
  func.func @transform_10(%arg0: i32) -> (i32, i32) {
    %c0_i32 = arith.constant 0 : i32
    %c0_i32_0 = arith.constant 0 : i32
    %c0_i32_1 = arith.constant 0 : i32
    return %c0_i32, %c0_i32_0 : i32, i32
  }
  func.func @transform_11(%arg0: i32) -> (i32, i32) {
    %c0_i32 = arith.constant 0 : i32
    %c0_i32_0 = arith.constant 0 : i32
    %c0_i32_1 = arith.constant 0 : i32
    return %c0_i32, %c0_i32_0 : i32, i32
  }
  func.func @transform_12(%arg0: i32) -> (i32, i32) {
    %c0_i32 = arith.constant 0 : i32
    %c0_i32_0 = arith.constant 0 : i32
    %c0_i32_1 = arith.constant 0 : i32
    return %c0_i32, %c0_i32_0 : i32, i32
  }
  func.func @transform_13(%arg0: i32) -> (i32, i32) {
    %c0_i32 = arith.constant 0 : i32
    %c0_i32_0 = arith.constant 0 : i32
    %c0_i32_1 = arith.constant 0 : i32
    return %c0_i32, %c0_i32_0 : i32, i32
  }
  func.func @transform_14(%arg0: i32) -> (i32, i32) {
    %c0_i32 = arith.constant 0 : i32
    %c0_i32_0 = arith.constant 0 : i32
    %c0_i32_1 = arith.constant 0 : i32
    return %c0_i32, %c0_i32_0 : i32, i32
  }
  func.func @transform_15(%arg0: i32) -> (i32, i32, i32) {
    %c0_i32 = arith.constant 0 : i32
    %c0_i32_0 = arith.constant 0 : i32
    %c0_i32_1 = arith.constant 0 : i32
    return %arg0, %c0_i32, %c0_i32_0 : i32, i32, i32
  }
}

</mosaic_0001>

<llo_original>
// kernel: global_feature_upsample.1
$region0: #{global_feature_upsample.1}
  #allocation0 [shape = 'u32[]', space=smem, size = 0x4, offset = 0x4, fixed_abs, tag = 'smem constant byte address 0x4 - core index']
  #allocation1 [shape = 'u32[144,128]{1,0:T(1,128)}', space=vmem, size = 0x12000, scoped, tag = 'internal scratch']
  #allocation2 [shape = 'f32[48,1428]{1,0:T(8,128)}', space=vmem, size = 0x48000, scoped, tag = 'scratch operand']
  #allocation3 [shape = 'f32[16,1428]{1,0:T(8,128)}', space=vmem, size = 0x18000, scoped, tag = 'scratch operand']
  %s0 = inlined_call_operand.vmem [shape: f32[2,12,1428], index: 0, kind: input, shape index: {}]
  %s1 = inlined_call_operand.vmem [shape: f32[1,1428], index: 1, kind: input, shape index: {}]
  %s2 = inlined_call_operand.vmem [shape: f32[16,12], index: 2, kind: input, shape index: {}]
  %s3 = inlined_call_operand.vmem [shape: f32[8,1], index: 3, kind: input, shape index: {}]
  %s4 = inlined_call_operand.vmem [shape: f32[8,1], index: 4, kind: input, shape index: {}]
  %s5 = inlined_call_operand.vmem [shape: f32[24,24], index: 5, kind: input, shape index: {}]
  %s6 = inlined_call_operand.vmem [shape: f32[8,1], index: 6, kind: input, shape index: {}]
  %s7 = inlined_call_operand.vmem [shape: f32[8,1], index: 7, kind: input, shape index: {}]
  %s8 = inlined_call_operand.vmem [shape: f32[32,24], index: 8, kind: input, shape index: {}]
  %s9 = inlined_call_operand.vmem [shape: f32[8,1], index: 9, kind: input, shape index: {}]
  %s10 = inlined_call_operand.vmem [shape: f32[8,1], index: 10, kind: input, shape index: {}]
  %s11 = inlined_call_operand.vmem [shape: f32[8,1], index: 11, kind: input, shape index: {}]
  %s12 = inlined_call_operand.vmem [shape: f32[24,48], index: 12, kind: input, shape index: {}]
  %s13 = inlined_call_operand.vmem [shape: f32[8,1], index: 13, kind: input, shape index: {}]
  %s14 = inlined_call_operand.vmem [shape: f32[8,1], index: 14, kind: input, shape index: {}]
  %s15 = inlined_call_operand.vmem [shape: f32[2,8,1428], index: 15, kind: output, shape index: {}]
  %s16 = sld [smem:[#allocation0]]
  $region93: #{global_feature_upsample.1} parent=0
    _
  %s18 = ssub.s32 1, %s16
  %s19 = scalar_select 0, %s18, %s16
  loop: start=0, step=1, limit=4
  $region2: #{global_feature_upsample.1} parent=0 // loop_pre_header
    _
  $region3: #{global_feature_upsample.1} parent=0 // loop_header
    %s21 = sphi 0, %s25
    %p22 = scmp.ge.s32.totalorder %s21, 4
    %s31 = sphi 0, %s33
    %s34 = sphi 0, %s31
    %s35 = sphi 0, %s34
    %s51 = sphi 0, %s35
    %s55 = sphi 0, %s55
    %s57 = sphi 0, %s55
    %s58 = sphi 0, %s57
    %s72 = sphi 0, %s58
    %s76 = sphi 0, %s76
    %s78 = sphi 0, %s76
    %s79 = sphi 0, %s78
    %s93 = sphi 0, %s79
    %s97 = sphi 0, %s97
    %s99 = sphi 0, %s97
    %s100 = sphi 0, %s99
    %s114 = sphi 0, %s100
    %s118 = sphi 0, %s118
    %s120 = sphi 0, %s118
    %s121 = sphi 0, %s120
    %s135 = sphi 0, %s121
    %s139 = sphi 0, %s139
    %s141 = sphi 0, %s139
    %s142 = sphi 0, %s141
    %s156 = sphi 0, %s142
    %s160 = sphi 0, %s160
    %s162 = sphi 0, %s160
    %s163 = sphi 0, %s162
    %s177 = sphi 0, %s163
    %s181 = sphi 0, %s181
    %s183 = sphi 0, %s181
    %s184 = sphi 0, %s183
    %s198 = sphi 0, %s184
    %s202 = sphi 0, %s202
    %s204 = sphi 0, %s202
    %s205 = sphi 0, %s204
    %s219 = sphi 0, %s205
    %s223 = sphi 0, %s223
    %s225 = sphi 0, %s223
    %s226 = sphi 0, %s225
    %s240 = sphi 0, %s226
    %s244 = sphi 0, %s244
    %s246 = sphi 0, %s244
    %s247 = sphi 0, %s246
    %s261 = sphi 0, %s247
    %s265 = sphi 0, %s265
    %s267 = sphi 0, %s265
    %s268 = sphi 0, %s267
    %s282 = sphi 0, %s268
    %s286 = sphi 0, %s286
    %s288 = sphi 0, %s286
    %s289 = sphi 0, %s288
    %s303 = sphi 0, %s289
    %s307 = sphi 0, %s307
    %s309 = sphi 0, %s307
    %s310 = sphi 0, %s309
    %s324 = sphi 0, %s310
    %s328 = sphi 0, %s328
    %s330 = sphi 0, %s328
    %s331 = sphi 0, %s330
    %s345 = sphi 0, %s331
    %s351 = sphi 0, %s353
    %s354 = sphi 0, %s351
    %s355 = sphi 0, %s354
    %s371 = sphi 0, %s355
  $region4: #{global_feature_upsample.1} parent=0 // loop_header_branch
    %24 = sbr.rel (%p22) target = $region8
  $region5: #{global_feature_upsample.1} parent=0 // loop_body
    %s26 = ssub.s32 %s21, 1
    %s27 = ssub.s32 %s21, 2
    %s28 = sadd.s32 %s21, 1
    %s29 = ssub.s32 %s21, %s28
    %p30 = scmp.eq.s32.totalorder %s29, 0
    %s32 = sadd.s32 %s31, 1
    %s33 = scalar_select %p30, %s31, %s32
    %p36 = pneg %p30
    %p37 = scmp.eq.s32.totalorder %s21, 1
    %p38 = por %p36, %p37
    %p39 = scmp.ne.s32.totalorder %s31, %s34
    %p40 = scmp.eq.s32.totalorder %s21, 0
    %p41 = por %p39, %p40
    %p42 = scmp.ne.s32.totalorder %s31, %s34
    %p43 = scmp.eq.s32.totalorder %s26, 1
    %p44 = por %p42, %p43
    %p45 = scmp.ne.s32.totalorder %s34, %s35
    %p46 = scmp.eq.s32.totalorder %s26, 0
    %p47 = por %p45, %p46
    %p48 = scmp.ne.s32.totalorder %s34, %s35
    %p49 = scmp.eq.s32.totalorder %s27, 1
    %p50 = por %p48, %p49
    %p52 = scmp.ne.s32.totalorder %s35, %s51
    %p53 = scmp.eq.s32.totalorder %s27, 0
    %p54 = por %p52, %p53
    %s56 = sadd.s32 %s55, 1
    %p59 = scmp.eq.s32.totalorder %s21, 1
    %p60 = scmp.ne.s32.totalorder %s55, %s57
    %p61 = scmp.eq.s32.totalorder %s21, 0
    %p62 = por %p60, %p61
    %p63 = scmp.ne.s32.totalorder %s55, %s57
    %p64 = scmp.eq.s32.totalorder %s26, 1
    %p65 = por %p63, %p64
    %p66 = scmp.ne.s32.totalorder %s57, %s58
    %p67 = scmp.eq.s32.totalorder %s26, 0
    %p68 = por %p66, %p67
    %p69 = scmp.ne.s32.totalorder %s57, %s58
    %p70 = scmp.eq.s32.totalorder %s27, 1
    %p71 = por %p69, %p70
    %p73 = scmp.ne.s32.totalorder %s58, %s72
    %p74 = scmp.eq.s32.totalorder %s27, 0
    %p75 = por %p73, %p74
    %s77 = sadd.s32 %s76, 1
    %p80 = scmp.eq.s32.totalorder %s21, 1
    %p81 = scmp.ne.s32.totalorder %s76, %s78
    %p82 = scmp.eq.s32.totalorder %s21, 0
    %p83 = por %p81, %p82
    %p84 = scmp.ne.s32.totalorder %s76, %s78
    %p85 = scmp.eq.s32.totalorder %s26, 1
    %p86 = por %p84, %p85
    %p87 = scmp.ne.s32.totalorder %s78, %s79
    %p88 = scmp.eq.s32.totalorder %s26, 0
    %p89 = por %p87, %p88
    %p90 = scmp.ne.s32.totalorder %s78, %s79
    %p91 = scmp.eq.s32.totalorder %s27, 1
    %p92 = por %p90, %p91
    %p94 = scmp.ne.s32.totalorder %s79, %s93
    %p95 = scmp.eq.s32.totalorder %s27, 0
    %p96 = por %p94, %p95
    %s98 = sadd.s32 %s97, 1
    %p101 = scmp.eq.s32.totalorder %s21, 1
    %p102 = scmp.ne.s32.totalorder %s97, %s99
    %p103 = scmp.eq.s32.totalorder %s21, 0
    %p104 = por %p102, %p103
    %p105 = scmp.ne.s32.totalorder %s97, %s99
    %p106 = scmp.eq.s32.totalorder %s26, 1
    %p107 = por %p105, %p106
    %p108 = scmp.ne.s32.totalorder %s99, %s100
    %p109 = scmp.eq.s32.totalorder %s26, 0
    %p110 = por %p108, %p109
    %p111 = scmp.ne.s32.totalorder %s99, %s100
    %p112 = scmp.eq.s32.totalorder %s27, 1
    %p113 = por %p111, %p112
    %p115 = scmp.ne.s32.totalorder %s100, %s114
    %p116 = scmp.eq.s32.totalorder %s27, 0
    %p117 = por %p115, %p116
    %s119 = sadd.s32 %s118, 1
    %p122 = scmp.eq.s32.totalorder %s21, 1
    %p123 = scmp.ne.s32.totalorder %s118, %s120
    %p124 = scmp.eq.s32.totalorder %s21, 0
    %p125 = por %p123, %p124
    %p126 = scmp.ne.s32.totalorder %s118, %s120
    %p127 = scmp.eq.s32.totalorder %s26, 1
    %p128 = por %p126, %p127
    %p129 = scmp.ne.s32.totalorder %s120, %s121
    %p130 = scmp.eq.s32.totalorder %s26, 0
    %p131 = por %p129, %p130
    %p132 = scmp.ne.s32.totalorder %s120, %s121
    %p133 = scmp.eq.s32.totalorder %s27, 1
    %p134 = por %p132, %p133
    %p136 = scmp.ne.s32.totalorder %s121, %s135
    %p137 = scmp.eq.s32.totalorder %s27, 0
    %p138 = por %p136, %p137
    %s140 = sadd.s32 %s139, 1
    %p143 = scmp.eq.s32.totalorder %s21, 1
    %p144 = scmp.ne.s32.totalorder %s139, %s141
    %p145 = scmp.eq.s32.totalorder %s21, 0
    %p146 = por %p144, %p145
    %p147 = scmp.ne.s32.totalorder %s139, %s141
    %p148 = scmp.eq.s32.totalorder %s26, 1
    %p149 = por %p147, %p148
    %p150 = scmp.ne.s32.totalorder %s141, %s142
    %p151 = scmp.eq.s32.totalorder %s26, 0
    %p152 = por %p150, %p151
    %p153 = scmp.ne.s32.totalorder %s141, %s142
    %p154 = scmp.eq.s32.totalorder %s27, 1
    %p155 = por %p153, %p154
    %p157 = scmp.ne.s32.totalorder %s142, %s156
    %p158 = scmp.eq.s32.totalorder %s27, 0
    %p159 = por %p157, %p158
    %s161 = sadd.s32 %s160, 1
    %p164 = scmp.eq.s32.totalorder %s21, 1
    %p165 = scmp.ne.s32.totalorder %s160, %s162
    %p166 = scmp.eq.s32.totalorder %s21, 0
    %p167 = por %p165, %p166
    %p168 = scmp.ne.s32.totalorder %s160, %s162
    %p169 = scmp.eq.s32.totalorder %s26, 1
    %p170 = por %p168, %p169
    %p171 = scmp.ne.s32.totalorder %s162, %s163
    %p172 = scmp.eq.s32.totalorder %s26, 0
    %p173 = por %p171, %p172
    %p174 = scmp.ne.s32.totalorder %s162, %s163
    %p175 = scmp.eq.s32.totalorder %s27, 1
    %p176 = por %p174, %p175
    %p178 = scmp.ne.s32.totalorder %s163, %s177
    %p179 = scmp.eq.s32.totalorder %s27, 0
    %p180 = por %p178, %p179
    %s182 = sadd.s32 %s181, 1
    %p185 = scmp.eq.s32.totalorder %s21, 1
    %p186 = scmp.ne.s32.totalorder %s181, %s183
    %p187 = scmp.eq.s32.totalorder %s21, 0
    %p188 = por %p186, %p187
    %p189 = scmp.ne.s32.totalorder %s181, %s183
    %p190 = scmp.eq.s32.totalorder %s26, 1
    %p191 = por %p189, %p190
    %p192 = scmp.ne.s32.totalorder %s183, %s184
    %p193 = scmp.eq.s32.totalorder %s26, 0
    %p194 = por %p192, %p193
    %p195 = scmp.ne.s32.totalorder %s183, %s184
    %p196 = scmp.eq.s32.totalorder %s27, 1
    %p197 = por %p195, %p196
    %p199 = scmp.ne.s32.totalorder %s184, %s198
    %p200 = scmp.eq.s32.totalorder %s27, 0
    %p201 = por %p199, %p200
    %s203 = sadd.s32 %s202, 1
    %p206 = scmp.eq.s32.totalorder %s21, 1
    %p207 = scmp.ne.s32.totalorder %s202, %s204
    %p208 = scmp.eq.s32.totalorder %s21, 0
    %p209 = por %p207, %p208
    %p210 = scmp.ne.s32.totalorder %s202, %s204
    %p211 = scmp.eq.s32.totalorder %s26, 1
    %p212 = por %p210, %p211
    %p213 = scmp.ne.s32.totalorder %s204, %s205
    %p214 = scmp.eq.s32.totalorder %s26, 0
    %p215 = por %p213, %p214
    %p216 = scmp.ne.s32.totalorder %s204, %s205
    %p217 = scmp.eq.s32.totalorder %s27, 1
    %p218 = por %p216, %p217
    %p220 = scmp.ne.s32.totalorder %s205, %s219
    %p221 = scmp.eq.s32.totalorder %s27, 0
    %p222 = por %p220, %p221
    %s224 = sadd.s32 %s223, 1
    %p227 = scmp.eq.s32.totalorder %s21, 1
    %p228 = scmp.ne.s32.totalorder %s223, %s225
    %p229 = scmp.eq.s32.totalorder %s21, 0
    %p230 = por %p228, %p229
    %p231 = scmp.ne.s32.totalorder %s223, %s225
    %p232 = scmp.eq.s32.totalorder %s26, 1
    %p233 = por %p231, %p232
    %p234 = scmp.ne.s32.totalorder %s225, %s226
    %p235 = scmp.eq.s32.totalorder %s26, 0
    %p236 = por %p234, %p235
    %p237 = scmp.ne.s32.totalorder %s225, %s226
    %p238 = scmp.eq.s32.totalorder %s27, 1
    %p239 = por %p237, %p238
    %p241 = scmp.ne.s32.totalorder %s226, %s240
    %p242 = scmp.eq.s32.totalorder %s27, 0
    %p243 = por %p241, %p242
    %s245 = sadd.s32 %s244, 1
    %p248 = scmp.eq.s32.totalorder %s21, 1
    %p249 = scmp.ne.s32.totalorder %s244, %s246
    %p250 = scmp.eq.s32.totalorder %s21, 0
    %p251 = por %p249, %p250
    %p252 = scmp.ne.s32.totalorder %s244, %s246
    %p253 = scmp.eq.s32.totalorder %s26, 1
    %p254 = por %p252, %p253
    %p255 = scmp.ne.s32.totalorder %s246, %s247
    %p256 = scmp.eq.s32.totalorder %s26, 0
    %p257 = por %p255, %p256
    %p258 = scmp.ne.s32.totalorder %s246, %s247
    %p259 = scmp.eq.s32.totalorder %s27, 1
    %p260 = por %p258, %p259
    %p262 = scmp.ne.s32.totalorder %s247, %s261
    %p263 = scmp.eq.s32.totalorder %s27, 0
    %p264 = por %p262, %p263
    %s266 = sadd.s32 %s265, 1
    %p269 = scmp.eq.s32.totalorder %s21, 1
    %p270 = scmp.ne.s32.totalorder %s265, %s267
    %p271 = scmp.eq.s32.totalorder %s21, 0
    %p272 = por %p270, %p271
    %p273 = scmp.ne.s32.totalorder %s265, %s267
    %p274 = scmp.eq.s32.totalorder %s26, 1
    %p275 = por %p273, %p274
    %p276 = scmp.ne.s32.totalorder %s267, %s268
    %p277 = scmp.eq.s32.totalorder %s26, 0
    %p278 = por %p276, %p277
    %p279 = scmp.ne.s32.totalorder %s267, %s268
    %p280 = scmp.eq.s32.totalorder %s27, 1
    %p281 = por %p279, %p280
    %p283 = scmp.ne.s32.totalorder %s268, %s282
    %p284 = scmp.eq.s32.totalorder %s27, 0
    %p285 = por %p283, %p284
    %s287 = sadd.s32 %s286, 1
    %p290 = scmp.eq.s32.totalorder %s21, 1
    %p291 = scmp.ne.s32.totalorder %s286, %s288
    %p292 = scmp.eq.s32.totalorder %s21, 0
    %p293 = por %p291, %p292
    %p294 = scmp.ne.s32.totalorder %s286, %s288
    %p295 = scmp.eq.s32.totalorder %s26, 1
    %p296 = por %p294, %p295
    %p297 = scmp.ne.s32.totalorder %s288, %s289
    %p298 = scmp.eq.s32.totalorder %s26, 0
    %p299 = por %p297, %p298
    %p300 = scmp.ne.s32.totalorder %s288, %s289
    %p301 = scmp.eq.s32.totalorder %s27, 1
    %p302 = por %p300, %p301
    %p304 = scmp.ne.s32.totalorder %s289, %s303
    %p305 = scmp.eq.s32.totalorder %s27, 0
    %p306 = por %p304, %p305
    %s308 = sadd.s32 %s307, 1
    %p311 = scmp.eq.s32.totalorder %s21, 1
    %p312 = scmp.ne.s32.totalorder %s307, %s309
    %p313 = scmp.eq.s32.totalorder %s21, 0
    %p314 = por %p312, %p313
    %p315 = scmp.ne.s32.totalorder %s307, %s309
    %p316 = scmp.eq.s32.totalorder %s26, 1
    %p317 = por %p315, %p316
    %p318 = scmp.ne.s32.totalorder %s309, %s310
    %p319 = scmp.eq.s32.totalorder %s26, 0
    %p320 = por %p318, %p319
    %p321 = scmp.ne.s32.totalorder %s309, %s310
    %p322 = scmp.eq.s32.totalorder %s27, 1
    %p323 = por %p321, %p322
    %p325 = scmp.ne.s32.totalorder %s310, %s324
    %p326 = scmp.eq.s32.totalorder %s27, 0
    %p327 = por %p325, %p326
    %s329 = sadd.s32 %s328, 1
    %p332 = scmp.eq.s32.totalorder %s21, 1
    %p333 = scmp.ne.s32.totalorder %s328, %s330
    %p334 = scmp.eq.s32.totalorder %s21, 0
    %p335 = por %p333, %p334
    %p336 = scmp.ne.s32.totalorder %s328, %s330
    %p337 = scmp.eq.s32.totalorder %s26, 1
    %p338 = por %p336, %p337
    %p339 = scmp.ne.s32.totalorder %s330, %s331
    %p340 = scmp.eq.s32.totalorder %s26, 0
    %p341 = por %p339, %p340
    %p342 = scmp.ne.s32.totalorder %s330, %s331
    %p343 = scmp.eq.s32.totalorder %s27, 1
    %p344 = por %p342, %p343
    %p346 = scmp.ne.s32.totalorder %s331, %s345
    %p347 = scmp.eq.s32.totalorder %s27, 0
    %p348 = por %p346, %p347
    %s349 = ssub.s32 %s21, %s28
    %p350 = scmp.eq.s32.totalorder %s349, 0
    %s352 = sadd.s32 %s351, 1
    %s353 = scalar_select %p350, %s351, %s352
    %p356 = pneg %p350
    %p357 = scmp.eq.s32.totalorder %s21, 1
    %p358 = por %p356, %p357
    %p359 = scmp.ne.s32.totalorder %s351, %s354
    %p360 = scmp.eq.s32.totalorder %s21, 0
    %p361 = por %p359, %p360
    %p362 = scmp.ne.s32.totalorder %s351, %s354
    %p363 = scmp.eq.s32.totalorder %s26, 1
    %p364 = por %p362, %p363
    %p365 = scmp.ne.s32.totalorder %s354, %s355
    %p366 = scmp.eq.s32.totalorder %s26, 0
    %p367 = por %p365, %p366
    %p368 = scmp.ne.s32.totalorder %s354, %s355
    %p369 = scmp.eq.s32.totalorder %s27, 1
    %p370 = por %p368, %p369
    %p372 = scmp.ne.s32.totalorder %s355, %s371
    %p373 = scmp.eq.s32.totalorder %s27, 0
    %p374 = por %p372, %p373
    %p375 = scmp.le.s32.totalorder 1, %s21
    %p376 = scmp.lt.s32.totalorder %s21, 3
    %p377 = pnand %p375, %p376
    %p378 = pneg %p377
    // Predicated region
    $region9: #{global_feature_upsample.1} parent=5 // pred_check
      _
    $region10: #{global_feature_upsample.1} parent=5 // pred_check_branch
      %380 = sbr.rel (%p377) target = $region12
    $region11: #{global_feature_upsample.1} parent=5 // pred_region
      %s381 = ssub.s32 %s21, 1
      // Predicated region
      $region13: #{global_feature_upsample.1} parent=11 // pred_check
        %p382 = pneg %p68
      $region14: #{global_feature_upsample.1} parent=11 // pred_check_branch
        %384 = sbr.rel (%p382) target = $region16
      $region15: #{global_feature_upsample.1} parent=11 // pred_region
        _
      $region16: #{global_feature_upsample.1} parent=11 // pred_fallthru
        _
      // Predicated region
      $region17: #{global_feature_upsample.1} parent=11 // pred_check
        %p385 = pneg %p89
      $region18: #{global_feature_upsample.1} parent=11 // pred_check_branch
        %387 = sbr.rel (%p385) target = $region20
      $region19: #{global_feature_upsample.1} parent=11 // pred_region
        _
      $region20: #{global_feature_upsample.1} parent=11 // pred_fallthru
        _
      // Predicated region
      $region21: #{global_feature_upsample.1} parent=11 // pred_check
        %p388 = pneg %p110
      $region22: #{global_feature_upsample.1} parent=11 // pred_check_branch
        %390 = sbr.rel (%p388) target = $region24
      $region23: #{global_feature_upsample.1} parent=11 // pred_region
        _
      $region24: #{global_feature_upsample.1} parent=11 // pred_fallthru
        _
      // Predicated region
      $region25: #{global_feature_upsample.1} parent=11 // pred_check
        %p391 = pneg %p131
      $region26: #{global_feature_upsample.1} parent=11 // pred_check_branch
        %393 = sbr.rel (%p391) target = $region28
      $region27: #{global_feature_upsample.1} parent=11 // pred_region
        _
      $region28: #{global_feature_upsample.1} parent=11 // pred_fallthru
        _
      // Predicated region
      $region29: #{global_feature_upsample.1} parent=11 // pred_check
        %p394 = pneg %p152
      $region30: #{global_feature_upsample.1} parent=11 // pred_check_branch
        %396 = sbr.rel (%p394) target = $region32
      $region31: #{global_feature_upsample.1} parent=11 // pred_region
        _
      $region32: #{global_feature_upsample.1} parent=11 // pred_fallthru
        _
      // Predicated region
      $region33: #{global_feature_upsample.1} parent=11 // pred_check
        %p397 = pneg %p173
      $region34: #{global_feature_upsample.1} parent=11 // pred_check_branch
        %399 = sbr.rel (%p397) target = $region36
      $region35: #{global_feature_upsample.1} parent=11 // pred_region
        _
      $region36: #{global_feature_upsample.1} parent=11 // pred_fallthru
        _
      // Predicated region
      $region37: #{global_feature_upsample.1} parent=11 // pred_check
        %p400 = pneg %p194
      $region38: #{global_feature_upsample.1} parent=11 // pred_check_branch
        %402 = sbr.rel (%p400) target = $region40
      $region39: #{global_feature_upsample.1} parent=11 // pred_region
        _
      $region40: #{global_feature_upsample.1} parent=11 // pred_fallthru
        _
      // Predicated region
      $region41: #{global_feature_upsample.1} parent=11 // pred_check
        %p403 = pneg %p215
      $region42: #{global_feature_upsample.1} parent=11 // pred_check_branch
        %405 = sbr.rel (%p403) target = $region44
      $region43: #{global_feature_upsample.1} parent=11 // pred_region
        _
      $region44: #{global_feature_upsample.1} parent=11 // pred_fallthru
        _
      // Predicated region
      $region45: #{global_feature_upsample.1} parent=11 // pred_check
        %p406 = pneg %p236
      $region46: #{global_feature_upsample.1} parent=11 // pred_check_branch
        %408 = sbr.rel (%p406) target = $region48
      $region47: #{global_feature_upsample.1} parent=11 // pred_region
        _
      $region48: #{global_feature_upsample.1} parent=11 // pred_fallthru
        _
      // Predicated region
      $region49: #{global_feature_upsample.1} parent=11 // pred_check
        %p409 = pneg %p257
      $region50: #{global_feature_upsample.1} parent=11 // pred_check_branch
        %411 = sbr.rel (%p409) target = $region52
      $region51: #{global_feature_upsample.1} parent=11 // pred_region
        _
      $region52: #{global_feature_upsample.1} parent=11 // pred_fallthru
        _
      // Predicated region
      $region53: #{global_feature_upsample.1} parent=11 // pred_check
        %p412 = pneg %p278
      $region54: #{global_feature_upsample.1} parent=11 // pred_check_branch
        %414 = sbr.rel (%p412) target = $region56
      $region55: #{global_feature_upsample.1} parent=11 // pred_region
        _
      $region56: #{global_feature_upsample.1} parent=11 // pred_fallthru
        _
      // Predicated region
      $region57: #{global_feature_upsample.1} parent=11 // pred_check
        %p415 = pneg %p299
      $region58: #{global_feature_upsample.1} parent=11 // pred_check_branch
        %417 = sbr.rel (%p415) target = $region60
      $region59: #{global_feature_upsample.1} parent=11 // pred_region
        _
      $region60: #{global_feature_upsample.1} parent=11 // pred_fallthru
        _
      // Predicated region
      $region61: #{global_feature_upsample.1} parent=11 // pred_check
        %p418 = pneg %p320
      $region62: #{global_feature_upsample.1} parent=11 // pred_check_branch
        %420 = sbr.rel (%p418) target = $region64
      $region63: #{global_feature_upsample.1} parent=11 // pred_region
        _
      $region64: #{global_feature_upsample.1} parent=11 // pred_fallthru
        _
      // Predicated region
      $region65: #{global_feature_upsample.1} parent=11 // pred_check
        %p421 = pneg %p341
      $region66: #{global_feature_upsample.1} parent=11 // pred_check_branch
        %423 = sbr.rel (%p421) target = $region68
      $region67: #{global_feature_upsample.1} parent=11 // pred_region
        _
      $region68: #{global_feature_upsample.1} parent=11 // pred_fallthru
        _
    $region12: #{global_feature_upsample.1} parent=5 // pred_fallthru
      _
    %p424 = scmp.lt.s32.totalorder %s21, 2
    // Predicated region
    $region69: #{global_feature_upsample.1} parent=5 // pred_check
      %p425 = pneg %p424
    $region70: #{global_feature_upsample.1} parent=5 // pred_check_branch
      %427 = sbr.rel (%p425) target = $region72
    $region71: #{global_feature_upsample.1} parent=5 // pred_region
      // Predicated region
      $region73: #{global_feature_upsample.1} parent=71 // pred_check
        %p428 = pneg %p41
      $region74: #{global_feature_upsample.1} parent=71 // pred_check_branch
        %430 = sbr.rel (%p428) target = $region76
      $region75: #{global_feature_upsample.1} parent=71 // pred_region
        %p431 = scmp.lt.s32.totalorder %s21, 1
        %s432 = scalar_select %p431, %s21, 1
        %s433 = smul.addr %s432, 24
        %s434 = smul.addr %s433, 8
        %s435 = scalar_lea.vmem %s0, %s434
      $region76: #{global_feature_upsample.1} parent=71 // pred_fallthru
        _
    $region72: #{global_feature_upsample.1} parent=5 // pred_fallthru
      _
    %p436 = scmp.le.s32.totalorder 1, %s21
    %p437 = scmp.lt.s32.totalorder %s21, 3
    %p438 = pnand %p436, %p437
    %p439 = pneg %p438
    // Predicated region
    $region77: #{global_feature_upsample.1} parent=5 // pred_check
      _
    $region78: #{global_feature_upsample.1} parent=5 // pred_check_branch
      %441 = sbr.rel (%p438) target = $region80
    $region79: #{global_feature_upsample.1} parent=5 // pred_region
      %s442 = ssub.s32 %s21, 1
      %p443 = scmp.lt.s32.totalorder %s26, 1
      %s444 = scalar_select %p443, %s26, 1
      %s445 = smul.addr %s444, 24
      %s446 = smul.addr %s445, 8
      %s447 = scalar_lea.vmem %s0, %s446
      %p448 = pneg %p47
      %p449 = pneg %p44
      %p450 = pneg %p68
      %p451 = pneg %p65
      %p452 = pneg %p89
      %p453 = pneg %p86
      %p454 = pneg %p110
      %p455 = pneg %p107
      %p456 = pneg %p131
      %p457 = pneg %p128
      %p458 = pneg %p152
      %p459 = pneg %p149
      %p460 = pneg %p173
      %p461 = pneg %p170
      %p462 = pneg %p194
      %p463 = pneg %p191
      %p464 = pneg %p215
      %p465 = pneg %p212
      %p466 = pneg %p236
      %p467 = pneg %p233
      %p468 = pneg %p257
      %p469 = pneg %p254
      %p470 = pneg %p278
      %p471 = pneg %p275
      %p472 = pneg %p299
      %p473 = pneg %p296
      %p474 = pneg %p320
      %p475 = pneg %p317
      %p476 = pneg %p341
      %p477 = pneg %p338
      %p478 = pneg %p367
      %p479 = pneg %p364
      %p480 = scmp.lt.s32.totalorder %s26, 1
      %s481 = scalar_select %p480, %s26, 1
      %s482 = smul.addr %s481, 12
      %s483 = smul.addr %s482, 8
      %s484 = scalar_lea.vmem %s15, %s483
      %p485 = scmp.lt.s32.totalorder %s26, 1
      %s486 = scalar_select %p485, %s26, 1
      %s487 = smul.addr %s486, 24
      %s488 = smul.addr %s487, 8
      %s489 = scalar_lea.vmem %s0, %s488
      %p490 = scmp.lt.s32.totalorder %s26, 1
      %s491 = scalar_select %p490, %s26, 1
      %s492 = smul.addr %s491, 12
      %s493 = smul.addr %s492, 8
      %s494 = scalar_lea.vmem %s15, %s493
      %v495 = vld [vmem:[%s1] sm:$0xff]
      %v496 = vld [vmem:[%s1 + $0x8] sm:$0xf]
      %v497 = vld [vmem:[%s2] sm:$0xff]
      %v498 = vld [vmem:[%s2 + $0x8] sm:$0xff]
      %v499 = vld [vmem:[%s489] sm:$0xff]
      %v500 = vld [vmem:[%s489 + $0x8] sm:$0xff]
      %v501 = vld [vmem:[%s489 + $0x10] sm:$0xff]
      %v502 = vld [vmem:[%s489 + $0x18] sm:$0xff]
      %v503 = vld [vmem:[%s489 + $0x20] sm:$0xff]
      %v504 = vld [vmem:[%s489 + $0x28] sm:$0xff]
      %v505 = vld [vmem:[%s489 + $0x30] sm:$0xff]
      %v506 = vld [vmem:[%s489 + $0x38] sm:$0xff]
      %v507 = vld [vmem:[%s489 + $0x40] sm:$0xff]
      %v508 = vld [vmem:[%s489 + $0x48] sm:$0xff]
      %v509 = vld [vmem:[%s489 + $0x50] sm:$0xff]
      %v510 = vld [vmem:[%s489 + $0x58] sm:$0xff]
      %v511 = vld [vmem:[%s489 + $0x60] sm:$0xf]
      %v512 = vld [vmem:[%s489 + $0x68] sm:$0xf]
      %v513 = vld [vmem:[%s489 + $0x70] sm:$0xf]
      %v514 = vld [vmem:[%s489 + $0x78] sm:$0xf]
      %v515 = vld [vmem:[%s489 + $0x80] sm:$0xf]
      %v516 = vld [vmem:[%s489 + $0x88] sm:$0xf]
      %v517 = vld [vmem:[%s489 + $0x90] sm:$0xf]
      %v518 = vld [vmem:[%s489 + $0x98] sm:$0xf]
      %v519 = vld [vmem:[%s489 + $0xa0] sm:$0xf]
      %v520 = vld [vmem:[%s489 + $0xa8] sm:$0xf]
      %v521 = vld [vmem:[%s489 + $0xb0] sm:$0xf]
      %v522 = vld [vmem:[%s489 + $0xb8] sm:$0xf]
      %vm523 = vcmask 97280
      %v525 = vsel %vm523, %v497, 0
      %v528 = vsel %vm523, %v498, 0
      %vm530 = vcmask 1043456
      %v532 = vsel %vm530, %v511, 0
      %v535 = vsel %vm530, %v512, 0
      %v538 = vsel %vm530, %v513, 0
      %v541 = vsel %vm530, %v514, 0
      %v544 = vsel %vm530, %v515, 0
      %v547 = vsel %vm530, %v516, 0
      %v550 = vsel %vm530, %v517, 0
      %v553 = vsel %vm530, %v518, 0
      %v556 = vsel %vm530, %v519, 0
      %v559 = vsel %vm530, %v520, 0
      %v562 = vsel %vm530, %v521, 0
      %v565 = vsel %vm530, %v522, 0
      %567 = vmatprep.subr.mxu0 0.0
      %568 = vmatpush1.msra.mxu0 0.0
      %569 = vmatprep.subr.mxu0 0.0
      %570 = vmatpush1.msra.mxu0 0.0
      %571 = vmatprep.subr.mxu0 0.0
      %572 = vmatpush1.msra.mxu0 0.0
      %573 = vmatprep.subr.mxu0 0.0
      %574 = vmatpush1.msra.mxu0 0.0
      %575 = vmatprep.subr.mxu0 0.0
      %576 = vmatpush1.msra.mxu0 0.0
      %577 = vmatprep.subr.mxu0 0.0
      %578 = vmatpush1.msra.mxu0 0.0
      %579 = vmatprep.subr.mxu0 0.0
      %580 = vmatpush1.msra.mxu0 0.0
      %581 = vmatprep.subr.mxu0 0.0
      %582 = vmatpush1.msra.mxu0 0.0
      %583 = vmatprep.subr.mxu0 0.0
      %584 = vmatpush1.msra.mxu0 0.0
      %585 = vmatprep.subr.mxu0 0.0
      %586 = vmatpush1.msra.mxu0 0.0
      %587 = vmatprep.subr.mxu0 0.0
      %588 = vmatpush1.msra.mxu0 0.0
      %589 = vmatprep.subr.mxu0 0.0
      %590 = vmatpush1.msra.mxu0 0.0
      %591 = vmatprep.subr.mxu0 0.0
      %592 = vmatpush1.msra.mxu0 0.0
      %593 = vmatprep.subr.mxu0 0.0
      %594 = vmatpush1.msra.mxu0 0.0
      %595 = vmatprep.subr.mxu0 %v535
      %596 = vmatpush1.msra.mxu0 %v532
      %597 = vmatprep.subr.mxu0 %v500
      %598 = vmatpush1.msra.mxu0 %v499
      %599 = vmatprep.subr.mxu0 0.0
      %600 = vmatpush2.msra.mxu0 0.0
      %601 = vmatprep.subr.mxu0 0.0
      %602 = vmatpush2.msra.mxu0 0.0
      %603 = vmatprep.subr.mxu0 0.0
      %604 = vmatpush2.msra.mxu0 0.0
      %605 = vmatprep.subr.mxu0 0.0
      %606 = vmatpush2.msra.mxu0 0.0
      %607 = vmatprep.subr.mxu0 0.0
      %608 = vmatpush2.msra.mxu0 0.0
      %609 = vmatprep.subr.mxu0 0.0
      %610 = vmatpush2.msra.mxu0 0.0
      %611 = vmatprep.subr.mxu0 0.0
      %612 = vmatpush2.msra.mxu0 0.0
      %613 = vmatprep.subr.mxu0 0.0
      %614 = vmatpush2.msra.mxu0 0.0
      %615 = vmatprep.subr.mxu0 0.0
      %616 = vmatpush2.msra.mxu0 0.0
      %617 = vmatprep.subr.mxu0 0.0
      %618 = vmatpush2.msra.mxu0 0.0
      %619 = vmatprep.subr.mxu0 0.0
      %620 = vmatpush2.msra.mxu0 0.0
      %621 = vmatprep.subr.mxu0 0.0
      %622 = vmatpush2.msra.mxu0 0.0
      %623 = vmatprep.subr.mxu0 0.0
      %624 = vmatpush2.msra.mxu0 0.0
      %625 = vmatprep.subr.mxu0 0.0
      %626 = vmatpush2.msra.mxu0 0.0
      %627 = vmatprep.subr.mxu0 0.0
      %628 = vmatpush2.msra.mxu0 0.0
      %629 = vmatprep.subr.mxu0 0.0
      %630 = vmatpush2.msra.mxu0 0.0
      %631 = vmatprep.mubr.f32.mxu0 0.0
      %632 = vmatmul.mubr.f32.gmra.mxu0 %v525
      %v633 = vpop.f32.mrf.mxu0
      %v634 = vadd.f32 0.0, %v633
      %v635 = vpop.f32.mrf.mxu0
      %v636 = vadd.f32 0.0, %v635
      %637 = vmatprep.mubr.f32.mxu0 0.0
      %638 = vmatmul.mubr.f32.gmra.mxu0 %v528
      %v639 = vpop.f32.mrf.mxu0
      %v640 = vadd.f32 0.0, %v639
      %v641 = vpop.f32.mrf.mxu0
      %v642 = vadd.f32 0.0, %v641
      %643 = vdwg.mxu0
      %644 = vmatprep.subr.mxu0 0.0
      %645 = vmatpush1.msra.mxu0 0.0
      %646 = vmatprep.subr.mxu0 0.0
      %647 = vmatpush1.msra.mxu0 0.0
      %648 = vmatprep.subr.mxu0 0.0
      %649 = vmatpush1.msra.mxu0 0.0
      %650 = vmatprep.subr.mxu0 0.0
      %651 = vmatpush1.msra.mxu0 0.0
      %652 = vmatprep.subr.mxu0 0.0
      %653 = vmatpush1.msra.mxu0 0.0
      %654 = vmatprep.subr.mxu0 0.0
      %655 = vmatpush1.msra.mxu0 0.0
      %656 = vmatprep.subr.mxu0 0.0
      %657 = vmatpush1.msra.mxu0 0.0
      %658 = vmatprep.subr.mxu0 0.0
      %659 = vmatpush1.msra.mxu0 0.0
      %660 = vmatprep.subr.mxu0 0.0
      %661 = vmatpush1.msra.mxu0 0.0
      %662 = vmatprep.subr.mxu0 0.0
      %663 = vmatpush1.msra.mxu0 0.0
      %664 = vmatprep.subr.mxu0 0.0
      %665 = vmatpush1.msra.mxu0 0.0
      %666 = vmatprep.subr.mxu0 0.0
      %667 = vmatpush1.msra.mxu0 0.0
      %668 = vmatprep.subr.mxu0 0.0
      %669 = vmatpush1.msra.mxu0 0.0
      %670 = vmatprep.subr.mxu0 0.0
      %671 = vmatpush1.msra.mxu0 0.0
      %672 = vmatprep.subr.mxu0 %v541
      %673 = vmatpush1.msra.mxu0 %v538
      %674 = vmatprep.subr.mxu0 %v502
      %675 = vmatpush1.msra.mxu0 %v501
      %676 = vmatprep.subr.mxu0 0.0
      %677 = vmatpush2.msra.mxu0 0.0
      %678 = vmatprep.subr.mxu0 0.0
      %679 = vmatpush2.msra.mxu0 0.0
      %680 = vmatprep.subr.mxu0 0.0
      %681 = vmatpush2.msra.mxu0 0.0
      %682 = vmatprep.subr.mxu0 0.0
      %683 = vmatpush2.msra.mxu0 0.0
      %684 = vmatprep.subr.mxu0 0.0
      %685 = vmatpush2.msra.mxu0 0.0
      %686 = vmatprep.subr.mxu0 0.0
      %687 = vmatpush2.msra.mxu0 0.0
      %688 = vmatprep.subr.mxu0 0.0
      %689 = vmatpush2.msra.mxu0 0.0
      %690 = vmatprep.subr.mxu0 0.0
      %691 = vmatpush2.msra.mxu0 0.0
      %692 = vmatprep.subr.mxu0 0.0
      %693 = vmatpush2.msra.mxu0 0.0
      %694 = vmatprep.subr.mxu0 0.0
      %695 = vmatpush2.msra.mxu0 0.0
      %696 = vmatprep.subr.mxu0 0.0
      %697 = vmatpush2.msra.mxu0 0.0
      %698 = vmatprep.subr.mxu0 0.0
      %699 = vmatpush2.msra.mxu0 0.0
      %700 = vmatprep.subr.mxu0 0.0
      %701 = vmatpush2.msra.mxu0 0.0
      %702 = vmatprep.subr.mxu0 0.0
      %703 = vmatpush2.msra.mxu0 0.0
      %704 = vmatprep.subr.mxu0 0.0
      %705 = vmatpush2.msra.mxu0 0.0
      %706 = vmatprep.subr.mxu0 0.0
      %707 = vmatpush2.msra.mxu0 0.0
      %708 = vmatprep.mubr.f32.mxu0 0.0
      %709 = vmatmul.mubr.f32.gmra.mxu0 %v525
      %v710 = vpop.f32.mrf.mxu0
      %v711 = vadd.f32 0.0, %v710
      %v712 = vpop.f32.mrf.mxu0
      %v713 = vadd.f32 0.0, %v712
      %714 = vmatprep.mubr.f32.mxu0 0.0
      %715 = vmatmul.mubr.f32.gmra.mxu0 %v528
      %v716 = vpop.f32.mrf.mxu0
      %v717 = vadd.f32 0.0, %v716
      %v718 = vpop.f32.mrf.mxu0
      %v719 = vadd.f32 0.0, %v718
      %720 = vdwg.mxu0
      %721 = vmatprep.subr.mxu0 0.0
      %722 = vmatpush1.msra.mxu0 0.0
      %723 = vmatprep.subr.mxu0 0.0
      %724 = vmatpush1.msra.mxu0 0.0
      %725 = vmatprep.subr.mxu0 0.0
      %726 = vmatpush1.msra.mxu0 0.0
      %727 = vmatprep.subr.mxu0 0.0
      %728 = vmatpush1.msra.mxu0 0.0
      %729 = vmatprep.subr.mxu0 0.0
      %730 = vmatpush1.msra.mxu0 0.0
      %731 = vmatprep.subr.mxu0 0.0
      %732 = vmatpush1.msra.mxu0 0.0
      %733 = vmatprep.subr.mxu0 0.0
      %734 = vmatpush1.msra.mxu0 0.0
      %735 = vmatprep.subr.mxu0 0.0
      %736 = vmatpush1.msra.mxu0 0.0
      %737 = vmatprep.subr.mxu0 0.0
      %738 = vmatpush1.msra.mxu0 0.0
      %739 = vmatprep.subr.mxu0 0.0
      %740 = vmatpush1.msra.mxu0 0.0
      %741 = vmatprep.subr.mxu0 0.0
      %742 = vmatpush1.msra.mxu0 0.0
      %743 = vmatprep.subr.mxu0 0.0
      %744 = vmatpush1.msra.mxu0 0.0
      %745 = vmatprep.subr.mxu0 0.0
      %746 = vmatpush1.msra.mxu0 0.0
      %747 = vmatprep.subr.mxu0 0.0
      %748 = vmatpush1.msra.mxu0 0.0
      %749 = vmatprep.subr.mxu0 %v547
      %750 = vmatpush1.msra.mxu0 %v544
      %751 = vmatprep.subr.mxu0 %v504
      %752 = vmatpush1.msra.mxu0 %v503
      %753 = vmatprep.subr.mxu0 0.0
      %754 = vmatpush2.msra.mxu0 0.0
      %755 = vmatprep.subr.mxu0 0.0
      %756 = vmatpush2.msra.mxu0 0.0
      %757 = vmatprep.subr.mxu0 0.0
      %758 = vmatpush2.msra.mxu0 0.0
      %759 = vmatprep.subr.mxu0 0.0
      %760 = vmatpush2.msra.mxu0 0.0
      %761 = vmatprep.subr.mxu0 0.0
      %762 = vmatpush2.msra.mxu0 0.0
      %763 = vmatprep.subr.mxu0 0.0
      %764 = vmatpush2.msra.mxu0 0.0
      %765 = vmatprep.subr.mxu0 0.0
      %766 = vmatpush2.msra.mxu0 0.0
      %767 = vmatprep.subr.mxu0 0.0
      %768 = vmatpush2.msra.mxu0 0.0
      %769 = vmatprep.subr.mxu0 0.0
      %770 = vmatpush2.msra.mxu0 0.0
      %771 = vmatprep.subr.mxu0 0.0
      %772 = vmatpush2.msra.mxu0 0.0
      %773 = vmatprep.subr.mxu0 0.0
      %774 = vmatpush2.msra.mxu0 0.0
      %775 = vmatprep.subr.mxu0 0.0
      %776 = vmatpush2.msra.mxu0 0.0
      %777 = vmatprep.subr.mxu0 0.0
      %778 = vmatpush2.msra.mxu0 0.0
      %779 = vmatprep.subr.mxu0 0.0
      %780 = vmatpush2.msra.mxu0 0.0
      %781 = vmatprep.subr.mxu0 0.0
      %782 = vmatpush2.msra.mxu0 0.0
      %783 = vmatprep.subr.mxu0 0.0
      %784 = vmatpush2.msra.mxu0 0.0
      %785 = vmatprep.mubr.f32.mxu0 0.0
      %786 = vmatmul.mubr.f32.gmra.mxu0 %v525
      %v787 = vpop.f32.mrf.mxu0
      %v788 = vadd.f32 0.0, %v787
      %v789 = vpop.f32.mrf.mxu0
      %v790 = vadd.f32 0.0, %v789
      %791 = vmatprep.mubr.f32.mxu0 0.0
      %792 = vmatmul.mubr.f32.gmra.mxu0 %v528
      %v793 = vpop.f32.mrf.mxu0
      %v794 = vadd.f32 0.0, %v793
      %v795 = vpop.f32.mrf.mxu0
      %v796 = vadd.f32 0.0, %v795
      %797 = vdwg.mxu0
      %798 = vmatprep.subr.mxu0 0.0
      %799 = vmatpush1.msra.mxu0 0.0
      %800 = vmatprep.subr.mxu0 0.0
      %801 = vmatpush1.msra.mxu0 0.0
      %802 = vmatprep.subr.mxu0 0.0
      %803 = vmatpush1.msra.mxu0 0.0
      %804 = vmatprep.subr.mxu0 0.0
      %805 = vmatpush1.msra.mxu0 0.0
      %806 = vmatprep.subr.mxu0 0.0
      %807 = vmatpush1.msra.mxu0 0.0
      %808 = vmatprep.subr.mxu0 0.0
      %809 = vmatpush1.msra.mxu0 0.0
      %810 = vmatprep.subr.mxu0 0.0
      %811 = vmatpush1.msra.mxu0 0.0
      %812 = vmatprep.subr.mxu0 0.0
      %813 = vmatpush1.msra.mxu0 0.0
      %814 = vmatprep.subr.mxu0 0.0
      %815 = vmatpush1.msra.mxu0 0.0
      %816 = vmatprep.subr.mxu0 0.0
      %817 = vmatpush1.msra.mxu0 0.0
      %818 = vmatprep.subr.mxu0 0.0
      %819 = vmatpush1.msra.mxu0 0.0
      %820 = vmatprep.subr.mxu0 0.0
      %821 = vmatpush1.msra.mxu0 0.0
      %822 = vmatprep.subr.mxu0 0.0
      %823 = vmatpush1.msra.mxu0 0.0
      %824 = vmatprep.subr.mxu0 0.0
      %825 = vmatpush1.msra.mxu0 0.0
      %826 = vmatprep.subr.mxu0 %v553
      %827 = vmatpush1.msra.mxu0 %v550
      %828 = vmatprep.subr.mxu0 %v506
      %829 = vmatpush1.msra.mxu0 %v505
      %830 = vmatprep.subr.mxu0 0.0
      %831 = vmatpush2.msra.mxu0 0.0
      %832 = vmatprep.subr.mxu0 0.0
      %833 = vmatpush2.msra.mxu0 0.0
      %834 = vmatprep.subr.mxu0 0.0
      %835 = vmatpush2.msra.mxu0 0.0
      %836 = vmatprep.subr.mxu0 0.0
      %837 = vmatpush2.msra.mxu0 0.0
      %838 = vmatprep.subr.mxu0 0.0
      %839 = vmatpush2.msra.mxu0 0.0
      %840 = vmatprep.subr.mxu0 0.0
      %841 = vmatpush2.msra.mxu0 0.0
      %842 = vmatprep.subr.mxu0 0.0
      %843 = vmatpush2.msra.mxu0 0.0
      %844 = vmatprep.subr.mxu0 0.0
      %845 = vmatpush2.msra.mxu0 0.0
      %846 = vmatprep.subr.mxu0 0.0
      %847 = vmatpush2.msra.mxu0 0.0
      %848 = vmatprep.subr.mxu0 0.0
      %849 = vmatpush2.msra.mxu0 0.0
      %850 = vmatprep.subr.mxu0 0.0
      %851 = vmatpush2.msra.mxu0 0.0
      %852 = vmatprep.subr.mxu0 0.0
      %853 = vmatpush2.msra.mxu0 0.0
      %854 = vmatprep.subr.mxu0 0.0
      %855 = vmatpush2.msra.mxu0 0.0
      %856 = vmatprep.subr.mxu0 0.0
      %857 = vmatpush2.msra.mxu0 0.0
      %858 = vmatprep.subr.mxu0 0.0
      %859 = vmatpush2.msra.mxu0 0.0
      %860 = vmatprep.subr.mxu0 0.0
      %861 = vmatpush2.msra.mxu0 0.0
      %862 = vmatprep.mubr.f32.mxu0 0.0
      %863 = vmatmul.mubr.f32.gmra.mxu0 %v525
      %v864 = vpop.f32.mrf.mxu0
      %v865 = vadd.f32 0.0, %v864
      %v866 = vpop.f32.mrf.mxu0
      %v867 = vadd.f32 0.0, %v866
      %868 = vmatprep.mubr.f32.mxu0 0.0
      %869 = vmatmul.mubr.f32.gmra.mxu0 %v528
      %v870 = vpop.f32.mrf.mxu0
      %v871 = vadd.f32 0.0, %v870
      %v872 = vpop.f32.mrf.mxu0
      %v873 = vadd.f32 0.0, %v872
      %874 = vdwg.mxu0
      %875 = vmatprep.subr.mxu0 0.0
      %876 = vmatpush1.msra.mxu0 0.0
      %877 = vmatprep.subr.mxu0 0.0
      %878 = vmatpush1.msra.mxu0 0.0
      %879 = vmatprep.subr.mxu0 0.0
      %880 = vmatpush1.msra.mxu0 0.0
      %881 = vmatprep.subr.mxu0 0.0
      %882 = vmatpush1.msra.mxu0 0.0
      %883 = vmatprep.subr.mxu0 0.0
      %884 = vmatpush1.msra.mxu0 0.0
      %885 = vmatprep.subr.mxu0 0.0
      %886 = vmatpush1.msra.mxu0 0.0
      %887 = vmatprep.subr.mxu0 0.0
      %888 = vmatpush1.msra.mxu0 0.0
      %889 = vmatprep.subr.mxu0 0.0
      %890 = vmatpush1.msra.mxu0 0.0
      %891 = vmatprep.subr.mxu0 0.0
      %892 = vmatpush1.msra.mxu0 0.0
      %893 = vmatprep.subr.mxu0 0.0
      %894 = vmatpush1.msra.mxu0 0.0
      %895 = vmatprep.subr.mxu0 0.0
      %896 = vmatpush1.msra.mxu0 0.0
      %897 = vmatprep.subr.mxu0 0.0
      %898 = vmatpush1.msra.mxu0 0.0
      %899 = vmatprep.subr.mxu0 0.0
      %900 = vmatpush1.msra.mxu0 0.0
      %901 = vmatprep.subr.mxu0 0.0
      %902 = vmatpush1.msra.mxu0 0.0
      %903 = vmatprep.subr.mxu0 %v559
      %904 = vmatpush1.msra.mxu0 %v556
      %905 = vmatprep.subr.mxu0 %v508
      %906 = vmatpush1.msra.mxu0 %v507
      %907 = vmatprep.subr.mxu0 0.0
      %908 = vmatpush2.msra.mxu0 0.0
      %909 = vmatprep.subr.mxu0 0.0
      %910 = vmatpush2.msra.mxu0 0.0
      %911 = vmatprep.subr.mxu0 0.0
      %912 = vmatpush2.msra.mxu0 0.0
      %913 = vmatprep.subr.mxu0 0.0
      %914 = vmatpush2.msra.mxu0 0.0
      %915 = vmatprep.subr.mxu0 0.0
      %916 = vmatpush2.msra.mxu0 0.0
      %917 = vmatprep.subr.mxu0 0.0
      %918 = vmatpush2.msra.mxu0 0.0
      %919 = vmatprep.subr.mxu0 0.0
      %920 = vmatpush2.msra.mxu0 0.0
      %921 = vmatprep.subr.mxu0 0.0
      %922 = vmatpush2.msra.mxu0 0.0
      %923 = vmatprep.subr.mxu0 0.0
      %924 = vmatpush2.msra.mxu0 0.0
      %925 = vmatprep.subr.mxu0 0.0
      %926 = vmatpush2.msra.mxu0 0.0
      %927 = vmatprep.subr.mxu0 0.0
      %928 = vmatpush2.msra.mxu0 0.0
      %929 = vmatprep.subr.mxu0 0.0
      %930 = vmatpush2.msra.mxu0 0.0
      %931 = vmatprep.subr.mxu0 0.0
      %932 = vmatpush2.msra.mxu0 0.0
      %933 = vmatprep.subr.mxu0 0.0
      %934 = vmatpush2.msra.mxu0 0.0
      %935 = vmatprep.subr.mxu0 0.0
      %936 = vmatpush2.msra.mxu0 0.0
      %937 = vmatprep.subr.mxu0 0.0
      %938 = vmatpush2.msra.mxu0 0.0
      %939 = vmatprep.mubr.f32.mxu0 0.0
      %940 = vmatmul.mubr.f32.gmra.mxu0 %v525
      %v941 = vpop.f32.mrf.mxu0
      %v942 = vadd.f32 0.0, %v941
      %v943 = vpop.f32.mrf.mxu0
      %v944 = vadd.f32 0.0, %v943
      %945 = vmatprep.mubr.f32.mxu0 0.0
      %946 = vmatmul.mubr.f32.gmra.mxu0 %v528
      %v947 = vpop.f32.mrf.mxu0
      %v948 = vadd.f32 0.0, %v947
      %v949 = vpop.f32.mrf.mxu0
      %v950 = vadd.f32 0.0, %v949
      %951 = vdwg.mxu0
      %952 = vmatprep.subr.mxu0 0.0
      %953 = vmatpush1.msra.mxu0 0.0
      %954 = vmatprep.subr.mxu0 0.0
      %955 = vmatpush1.msra.mxu0 0.0
      %956 = vmatprep.subr.mxu0 0.0
      %957 = vmatpush1.msra.mxu0 0.0
      %958 = vmatprep.subr.mxu0 0.0
      %959 = vmatpush1.msra.mxu0 0.0
      %960 = vmatprep.subr.mxu0 0.0
      %961 = vmatpush1.msra.mxu0 0.0
      %962 = vmatprep.subr.mxu0 0.0
      %963 = vmatpush1.msra.mxu0 0.0
      %964 = vmatprep.subr.mxu0 0.0
      %965 = vmatpush1.msra.mxu0 0.0
      %966 = vmatprep.subr.mxu0 0.0
      %967 = vmatpush1.msra.mxu0 0.0
      %968 = vmatprep.subr.mxu0 0.0
      %969 = vmatpush1.msra.mxu0 0.0
      %970 = vmatprep.subr.mxu0 0.0
      %971 = vmatpush1.msra.mxu0 0.0
      %972 = vmatprep.subr.mxu0 0.0
      %973 = vmatpush1.msra.mxu0 0.0
      %974 = vmatprep.subr.mxu0 0.0
      %975 = vmatpush1.msra.mxu0 0.0
      %976 = vmatprep.subr.mxu0 0.0
      %977 = vmatpush1.msra.mxu0 0.0
      %978 = vmatprep.subr.mxu0 0.0
      %979 = vmatpush1.msra.mxu0 0.0
      %980 = vmatprep.subr.mxu0 %v565
      %981 = vmatpush1.msra.mxu0 %v562
      %982 = vmatprep.subr.mxu0 %v510
      %983 = vmatpush1.msra.mxu0 %v509
      %984 = vmatprep.subr.mxu0 0.0
      %985 = vmatpush2.msra.mxu0 0.0
      %986 = vmatprep.subr.mxu0 0.0
      %987 = vmatpush2.msra.mxu0 0.0
      %988 = vmatprep.subr.mxu0 0.0
      %989 = vmatpush2.msra.mxu0 0.0
      %990 = vmatprep.subr.mxu0 0.0
      %991 = vmatpush2.msra.mxu0 0.0
      %992 = vmatprep.subr.mxu0 0.0
      %993 = vmatpush2.msra.mxu0 0.0
      %994 = vmatprep.subr.mxu0 0.0
      %995 = vmatpush2.msra.mxu0 0.0
      %996 = vmatprep.subr.mxu0 0.0
      %997 = vmatpush2.msra.mxu0 0.0
      %998 = vmatprep.subr.mxu0 0.0
      %999 = vmatpush2.msra.mxu0 0.0
      %1000 = vmatprep.subr.mxu0 0.0
      %1001 = vmatpush2.msra.mxu0 0.0
      %1002 = vmatprep.subr.mxu0 0.0
      %1003 = vmatpush2.msra.mxu0 0.0
      %1004 = vmatprep.subr.mxu0 0.0
      %1005 = vmatpush2.msra.mxu0 0.0
      %1006 = vmatprep.subr.mxu0 0.0
      %1007 = vmatpush2.msra.mxu0 0.0
      %1008 = vmatprep.subr.mxu0 0.0
      %1009 = vmatpush2.msra.mxu0 0.0
      %1010 = vmatprep.subr.mxu0 0.0
      %1011 = vmatpush2.msra.mxu0 0.0
      %1012 = vmatprep.subr.mxu0 0.0
      %1013 = vmatpush2.msra.mxu0 0.0
      %1014 = vmatprep.subr.mxu0 0.0
      %1015 = vmatpush2.msra.mxu0 0.0
      %1016 = vmatprep.mubr.f32.mxu0 0.0
      %1017 = vmatmul.mubr.f32.gmra.mxu0 %v525
      %v1018 = vpop.f32.mrf.mxu0
      %v1019 = vadd.f32 0.0, %v1018
      %v1020 = vpop.f32.mrf.mxu0
      %v1021 = vadd.f32 0.0, %v1020
      %1022 = vmatprep.mubr.f32.mxu0 0.0
      %1023 = vmatmul.mubr.f32.gmra.mxu0 %v528
      %v1024 = vpop.f32.mrf.mxu0
      %v1025 = vadd.f32 0.0, %v1024
      %v1026 = vpop.f32.mrf.mxu0
      %v1027 = vadd.f32 0.0, %v1026
      %1028 = vdwg.mxu0
      %v1029 = vld [vmem:[%s3] sm:$0xff]
      %1031 = vset.pattern.permute.xlu0 0
      %1032 = vperm.xlu0 %1031, %v1029
      %v1033 = vpop.permute.xlu0 %1032
      %v1035 = vadd.f32 %v634, %v1033
      %v1036 = vadd.f32 %v636, %v1033
      %v1037 = vadd.f32 %v711, %v1033
      %v1038 = vadd.f32 %v713, %v1033
      %v1039 = vadd.f32 %v788, %v1033
      %v1040 = vadd.f32 %v790, %v1033
      %v1041 = vadd.f32 %v865, %v1033
      %v1042 = vadd.f32 %v867, %v1033
      %v1043 = vadd.f32 %v942, %v1033
      %v1044 = vadd.f32 %v944, %v1033
      %v1045 = vadd.f32 %v1019, %v1033
      %v1046 = vadd.f32 %v1021, %v1033
      %v1047 = vld [vmem:[%s4] sm:$0xff]
      %vm1048 = vcmp.gt.f32.partialorder %v1035, 0.0
      %vm1049 = vcmp.gt.f32.partialorder %v1036, 0.0
      %vm1050 = vcmp.gt.f32.partialorder %v1037, 0.0
      %vm1051 = vcmp.gt.f32.partialorder %v1038, 0.0
      %vm1052 = vcmp.gt.f32.partialorder %v1039, 0.0
      %vm1053 = vcmp.gt.f32.partialorder %v1040, 0.0
      %vm1054 = vcmp.gt.f32.partialorder %v1041, 0.0
      %vm1055 = vcmp.gt.f32.partialorder %v1042, 0.0
      %vm1056 = vcmp.gt.f32.partialorder %v1043, 0.0
      %vm1057 = vcmp.gt.f32.partialorder %v1044, 0.0
      %vm1058 = vcmp.gt.f32.partialorder %v1045, 0.0
      %vm1059 = vcmp.gt.f32.partialorder %v1046, 0.0
      %1061 = vset.pattern.permute.xlu0 0
      %1062 = vperm.xlu0 %1061, %v1047
      %v1063 = vpop.permute.xlu0 %1062
      %v1065 = vmul.f32 %v1063, %v1035
      %v1066 = vmul.f32 %v1063, %v1036
      %v1067 = vmul.f32 %v1063, %v1037
      %v1068 = vmul.f32 %v1063, %v1038
      %v1069 = vmul.f32 %v1063, %v1039
      %v1070 = vmul.f32 %v1063, %v1040
      %v1071 = vmul.f32 %v1063, %v1041
      %v1072 = vmul.f32 %v1063, %v1042
      %v1073 = vmul.f32 %v1063, %v1043
      %v1074 = vmul.f32 %v1063, %v1044
      %v1075 = vmul.f32 %v1063, %v1045
      %v1076 = vmul.f32 %v1063, %v1046
      %v1077 = vsel %vm1048, %v1035, %v1065
      %v1078 = vsel %vm1049, %v1036, %v1066
      %v1079 = vsel %vm1050, %v1037, %v1067
      %v1080 = vsel %vm1051, %v1038, %v1068
      %v1081 = vsel %vm1052, %v1039, %v1069
      %v1082 = vsel %vm1053, %v1040, %v1070
      %v1083 = vsel %vm1054, %v1041, %v1071
      %v1084 = vsel %vm1055, %v1042, %v1072
      %v1085 = vsel %vm1056, %v1043, %v1073
      %v1086 = vsel %vm1057, %v1044, %v1074
      %v1087 = vsel %vm1058, %v1045, %v1075
      %v1088 = vsel %vm1059, %v1046, %v1076
      %v1091 = vlaneseq
      %v1092 = vshrl.u32 %v1091, 7
      %v1093 = vsub.s32 0, %v1092
      %v1094 = vrot.slane %v495, %v1093
      %v1095 = vlaneseq
      %v1096 = vshrl.u32 %v1095, 7
      %v1097 = vsub.s32 1, %v1096
      %v1098 = vrot.slane %v495, %v1097
      %v1099 = vlaneseq
      %v1100 = vshrl.u32 %v1099, 7
      %v1101 = vsub.s32 2, %v1100
      %v1102 = vrot.slane %v495, %v1101
      %v1103 = vlaneseq
      %v1104 = vshrl.u32 %v1103, 7
      %v1105 = vsub.s32 3, %v1104
      %v1106 = vrot.slane %v495, %v1105
      %v1107 = vlaneseq
      %v1108 = vshrl.u32 %v1107, 7
      %v1109 = vsub.s32 4, %v1108
      %v1110 = vrot.slane %v495, %v1109
      %v1111 = vlaneseq
      %v1112 = vshrl.u32 %v1111, 7
      %v1113 = vsub.s32 5, %v1112
      %v1114 = vrot.slane %v495, %v1113
      %v1115 = vlaneseq
      %v1116 = vshrl.u32 %v1115, 7
      %v1117 = vsub.s32 6, %v1116
      %v1118 = vrot.slane %v495, %v1117
      %v1119 = vlaneseq
      %v1120 = vshrl.u32 %v1119, 7
      %v1121 = vsub.s32 7, %v1120
      %v1122 = vrot.slane %v495, %v1121
      %v1123 = vlaneseq
      %v1124 = vshrl.u32 %v1123, 7
      %v1125 = vsub.s32 0, %v1124
      %v1126 = vrot.slane %v496, %v1125
      %v1127 = vlaneseq
      %v1128 = vshrl.u32 %v1127, 7
      %v1129 = vsub.s32 1, %v1128
      %v1130 = vrot.slane %v496, %v1129
      %v1131 = vlaneseq
      %v1132 = vshrl.u32 %v1131, 7
      %v1133 = vsub.s32 2, %v1132
      %v1134 = vrot.slane %v496, %v1133
      %v1135 = vlaneseq
      %v1136 = vshrl.u32 %v1135, 7
      %v1137 = vsub.s32 3, %v1136
      %v1138 = vrot.slane %v496, %v1137
      %v1151 = vmul.f32 %v1077, %v1094
      %v1152 = vmul.f32 %v1078, %v1098
      %v1153 = vmul.f32 %v1079, %v1102
      %v1154 = vmul.f32 %v1080, %v1106
      %v1155 = vmul.f32 %v1081, %v1110
      %v1156 = vmul.f32 %v1082, %v1114
      %v1157 = vmul.f32 %v1083, %v1118
      %v1158 = vmul.f32 %v1084, %v1122
      %v1159 = vmul.f32 %v1085, %v1126
      %v1160 = vmul.f32 %v1086, %v1130
      %v1161 = vmul.f32 %v1087, %v1134
      %v1162 = vmul.f32 %v1088, %v1138
      %v1163 = vmax.f32 %v640, 0.0
      %v1164 = vmax.f32 %v642, 0.0
      %v1165 = vmax.f32 %v717, 0.0
      %v1166 = vmax.f32 %v719, 0.0
      %v1167 = vmax.f32 %v794, 0.0
      %v1168 = vmax.f32 %v796, 0.0
      %v1169 = vmax.f32 %v871, 0.0
      %v1170 = vmax.f32 %v873, 0.0
      %v1171 = vmax.f32 %v948, 0.0
      %v1172 = vmax.f32 %v950, 0.0
      %v1173 = vmax.f32 %v1025, 0.0
      %v1174 = vmax.f32 %v1027, 0.0
      %1175 = vst [vmem:[#allocation3] sm:$0xff] %v1151
      %1176 = vst [vmem:[#allocation3 + $0x8] sm:$0xff] %v1152
      %1177 = vst [vmem:[#allocation3 + $0x10] sm:$0xff] %v1153
      %1178 = vst [vmem:[#allocation3 + $0x18] sm:$0xff] %v1154
      %1179 = vst [vmem:[#allocation3 + $0x20] sm:$0xff] %v1155
      %1180 = vst [vmem:[#allocation3 + $0x28] sm:$0xff] %v1156
      %1181 = vst [vmem:[#allocation3 + $0x30] sm:$0xff] %v1157
      %1182 = vst [vmem:[#allocation3 + $0x38] sm:$0xff] %v1158
      %1183 = vst [vmem:[#allocation3 + $0x40] sm:$0xff] %v1159
      %1184 = vst [vmem:[#allocation3 + $0x48] sm:$0xff] %v1160
      %1185 = vst [vmem:[#allocation3 + $0x50] sm:$0xff] %v1161
      %vm1186 = vcmask 162816
      %1187 = vst.msk [vmem:[#allocation3 + $0x58] sm:$0xff] %vm1186, %v1162
      %1188 = vst [vmem:[#allocation3 + $0x60] sm:$0xff] %v1163
      %1189 = vst [vmem:[#allocation3 + $0x68] sm:$0xff] %v1164
      %1190 = vst [vmem:[#allocation3 + $0x70] sm:$0xff] %v1165
      %1191 = vst [vmem:[#allocation3 + $0x78] sm:$0xff] %v1166
      %1192 = vst [vmem:[#allocation3 + $0x80] sm:$0xff] %v1167
      %1193 = vst [vmem:[#allocation3 + $0x88] sm:$0xff] %v1168
      %1194 = vst [vmem:[#allocation3 + $0x90] sm:$0xff] %v1169
      %1195 = vst [vmem:[#allocation3 + $0x98] sm:$0xff] %v1170
      %1196 = vst [vmem:[#allocation3 + $0xa0] sm:$0xff] %v1171
      %1197 = vst [vmem:[#allocation3 + $0xa8] sm:$0xff] %v1172
      %1198 = vst [vmem:[#allocation3 + $0xb0] sm:$0xff] %v1173
      %1199 = vst.msk [vmem:[#allocation3 + $0xb8] sm:$0xff] %vm1186, %v1174
      %v1200 = vld [vmem:[%s5] sm:$0xff]
      %v1201 = vld [vmem:[%s5 + $0x8] sm:$0xff]
      %v1202 = vld [vmem:[%s5 + $0x10] sm:$0xff]
      %v1203 = vadd.f32 %v1151, %v1163
      %v1204 = vadd.f32 %v1152, %v1164
      %v1205 = vadd.f32 %v1153, %v1165
      %v1206 = vadd.f32 %v1154, %v1166
      %v1207 = vadd.f32 %v1155, %v1167
      %v1208 = vadd.f32 %v1156, %v1168
      %v1209 = vadd.f32 %v1157, %v1169
      %v1210 = vadd.f32 %v1158, %v1170
      %v1211 = vadd.f32 %v1159, %v1171
      %v1212 = vadd.f32 %v1160, %v1172
      %v1213 = vadd.f32 %v1161, %v1173
      %v1214 = vadd.f32 %v1162, %v1174
      %vm1215 = vcmask 1047712
      %1216 = vrot.lane.b32.xlu0 %v1203, 20
      %v1217 = vpop.permute.xlu0 %1216
      %v1218 = vsel %vm1215, %v1217, %v1214
      %1219 = vrot.lane.b32.xlu0 %v1204, 20
      %v1220 = vpop.permute.xlu0 %1219
      %1221 = vrot.lane.b32.xlu0 %v1205, 20
      %v1222 = vpop.permute.xlu0 %1221
      %1223 = vrot.lane.b32.xlu0 %v1206, 20
      %v1224 = vpop.permute.xlu0 %1223
      %1225 = vrot.lane.b32.xlu0 %v1207, 20
      %v1226 = vpop.permute.xlu0 %1225
      %1227 = vrot.lane.b32.xlu0 %v1208, 20
      %v1228 = vpop.permute.xlu0 %1227
      %1229 = vrot.lane.b32.xlu0 %v1209, 20
      %v1230 = vpop.permute.xlu0 %1229
      %1231 = vrot.lane.b32.xlu0 %v1210, 20
      %v1232 = vpop.permute.xlu0 %1231
      %1233 = vrot.lane.b32.xlu0 %v1211, 20
      %v1234 = vpop.permute.xlu0 %1233
      %1235 = vrot.lane.b32.xlu0 %v1212, 20
      %v1236 = vpop.permute.xlu0 %1235
      %1237 = vrot.lane.b32.xlu0 %v1213, 20
      %v1238 = vpop.permute.xlu0 %1237
      %1239 = vrot.lane.b32.xlu0 %v1218, 20
      %v1240 = vpop.permute.xlu0 %1239
      %v1241 = vsel %vm1215, %v1220, %v1217
      %v1242 = vsel %vm1215, %v1222, %v1220
      %v1243 = vsel %vm1215, %v1224, %v1222
      %v1244 = vsel %vm1215, %v1226, %v1224
      %v1245 = vsel %vm1215, %v1228, %v1226
      %v1246 = vsel %vm1215, %v1230, %v1228
      %v1247 = vsel %vm1215, %v1232, %v1230
      %v1248 = vsel %vm1215, %v1234, %v1232
      %v1249 = vsel %vm1215, %v1236, %v1234
      %v1250 = vsel %vm1215, %v1238, %v1236
      %v1251 = vsel %vm1215, %v1240, %v1238
      %1264 = vrot.lane.b32.xlu0 %v1218, 109
      %v1265 = vpop.permute.xlu0 %1264
      %1266 = vrot.lane.b32.xlu0 %v1241, 109
      %v1267 = vpop.permute.xlu0 %1266
      %1268 = vrot.lane.b32.xlu0 %v1242, 109
      %v1269 = vpop.permute.xlu0 %1268
      %1270 = vrot.lane.b32.xlu0 %v1243, 109
      %v1271 = vpop.permute.xlu0 %1270
      %1272 = vrot.lane.b32.xlu0 %v1244, 109
      %v1273 = vpop.permute.xlu0 %1272
      %1274 = vrot.lane.b32.xlu0 %v1245, 109
      %v1275 = vpop.permute.xlu0 %1274
      %1276 = vrot.lane.b32.xlu0 %v1246, 109
      %v1277 = vpop.permute.xlu0 %1276
      %1278 = vrot.lane.b32.xlu0 %v1247, 109
      %v1279 = vpop.permute.xlu0 %1278
      %1280 = vrot.lane.b32.xlu0 %v1248, 109
      %v1281 = vpop.permute.xlu0 %1280
      %1282 = vrot.lane.b32.xlu0 %v1249, 109
      %v1283 = vpop.permute.xlu0 %1282
      %1284 = vrot.lane.b32.xlu0 %v1250, 109
      %v1285 = vpop.permute.xlu0 %1284
      %1286 = vrot.lane.b32.xlu0 %v1251, 109
      %v1287 = vpop.permute.xlu0 %1286
      %vm1288 = vcmask 891904
      %v1289 = vsel %vm1288, %v1265, %v1267
      %v1290 = vsel %vm1288, %v1267, %v1269
      %v1291 = vsel %vm1288, %v1269, %v1271
      %v1292 = vsel %vm1288, %v1271, %v1273
      %v1293 = vsel %vm1288, %v1273, %v1275
      %v1294 = vsel %vm1288, %v1275, %v1277
      %v1295 = vsel %vm1288, %v1277, %v1279
      %v1296 = vsel %vm1288, %v1279, %v1281
      %v1297 = vsel %vm1288, %v1281, %v1283
      %v1298 = vsel %vm1288, %v1283, %v1285
      %v1299 = vsel %vm1288, %v1285, %v1287
      %1312 = vst [vmem:[#allocation2] sm:$0xff] %v1289
      %1313 = vst [vmem:[#allocation2 + $0x8] sm:$0xff] %v1290
      %1314 = vst [vmem:[#allocation2 + $0x10] sm:$0xff] %v1291
      %1315 = vst [vmem:[#allocation2 + $0x18] sm:$0xff] %v1292
      %1316 = vst [vmem:[#allocation2 + $0x20] sm:$0xff] %v1293
      %1317 = vst [vmem:[#allocation2 + $0x28] sm:$0xff] %v1294
      %1318 = vst [vmem:[#allocation2 + $0x30] sm:$0xff] %v1295
      %1319 = vst [vmem:[#allocation2 + $0x38] sm:$0xff] %v1296
      %1320 = vst [vmem:[#allocation2 + $0x40] sm:$0xff] %v1297
      %1321 = vst [vmem:[#allocation2 + $0x48] sm:$0xff] %v1298
      %1322 = vst [vmem:[#allocation2 + $0x50] sm:$0xff] %v1299
      %1323 = vst.msk [vmem:[#allocation2 + $0x58] sm:$0xff] %vm1186, %v1287
      %1324 = vst [vmem:[#allocation2 + $0x60] sm:$0xff] %v1203
      %1325 = vst [vmem:[#allocation2 + $0x68] sm:$0xff] %v1204
      %1326 = vst [vmem:[#allocation2 + $0x70] sm:$0xff] %v1205
      %1327 = vst [vmem:[#allocation2 + $0x78] sm:$0xff] %v1206
      %1328 = vst [vmem:[#allocation2 + $0x80] sm:$0xff] %v1207
      %1329 = vst [vmem:[#allocation2 + $0x88] sm:$0xff] %v1208
      %1330 = vst [vmem:[#allocation2 + $0x90] sm:$0xff] %v1209
      %1331 = vst [vmem:[#allocation2 + $0x98] sm:$0xff] %v1210
      %1332 = vst [vmem:[#allocation2 + $0xa0] sm:$0xff] %v1211
      %1333 = vst [vmem:[#allocation2 + $0xa8] sm:$0xff] %v1212
      %1334 = vst [vmem:[#allocation2 + $0xb0] sm:$0xff] %v1213
      %1335 = vst.msk [vmem:[#allocation2 + $0xb8] sm:$0xff] %vm1186, %v1214
      %1347 = vrot.lane.b32.xlu0 %v1203, 127
      %v1348 = vpop.permute.xlu0 %1347
      %1349 = vrot.lane.b32.xlu0 %v1204, 127
      %v1350 = vpop.permute.xlu0 %1349
      %1351 = vrot.lane.b32.xlu0 %v1205, 127
      %v1352 = vpop.permute.xlu0 %1351
      %1353 = vrot.lane.b32.xlu0 %v1206, 127
      %v1354 = vpop.permute.xlu0 %1353
      %1355 = vrot.lane.b32.xlu0 %v1207, 127
      %v1356 = vpop.permute.xlu0 %1355
      %1357 = vrot.lane.b32.xlu0 %v1208, 127
      %v1358 = vpop.permute.xlu0 %1357
      %1359 = vrot.lane.b32.xlu0 %v1209, 127
      %v1360 = vpop.permute.xlu0 %1359
      %1361 = vrot.lane.b32.xlu0 %v1210, 127
      %v1362 = vpop.permute.xlu0 %1361
      %1363 = vrot.lane.b32.xlu0 %v1211, 127
      %v1364 = vpop.permute.xlu0 %1363
      %1365 = vrot.lane.b32.xlu0 %v1212, 127
      %v1366 = vpop.permute.xlu0 %1365
      %1367 = vrot.lane.b32.xlu0 %v1213, 127
      %v1368 = vpop.permute.xlu0 %1367
      %1369 = vrot.lane.b32.xlu0 %v1218, 127
      %v1370 = vpop.permute.xlu0 %1369
      %vm1371 = vcmask 1039360
      %v1372 = vsel %vm1371, %v1348, %v1350
      %v1373 = vsel %vm1371, %v1350, %v1352
      %v1374 = vsel %vm1371, %v1352, %v1354
      %v1375 = vsel %vm1371, %v1354, %v1356
      %v1376 = vsel %vm1371, %v1356, %v1358
      %v1377 = vsel %vm1371, %v1358, %v1360
      %v1378 = vsel %vm1371, %v1360, %v1362
      %v1379 = vsel %vm1371, %v1362, %v1364
      %v1380 = vsel %vm1371, %v1364, %v1366
      %v1381 = vsel %vm1371, %v1366, %v1368
      %v1382 = vsel %vm1371, %v1368, %v1370
      %1395 = vst [vmem:[#allocation2 + $0xc0] sm:$0xff] %v1372
      %1396 = vst [vmem:[#allocation2 + $0xc8] sm:$0xff] %v1373
      %1397 = vst [vmem:[#allocation2 + $0xd0] sm:$0xff] %v1374
      %1398 = vst [vmem:[#allocation2 + $0xd8] sm:$0xff] %v1375
      %1399 = vst [vmem:[#allocation2 + $0xe0] sm:$0xff] %v1376
      %1400 = vst [vmem:[#allocation2 + $0xe8] sm:$0xff] %v1377
      %1401 = vst [vmem:[#allocation2 + $0xf0] sm:$0xff] %v1378
      %1402 = vst [vmem:[#allocation2 + $0xf8] sm:$0xff] %v1379
      %1403 = vst [vmem:[#allocation2 + $0x100] sm:$0xff] %v1380
      %1404 = vst [vmem:[#allocation2 + $0x108] sm:$0xff] %v1381
      %1405 = vst [vmem:[#allocation2 + $0x110] sm:$0xff] %v1382
      %1406 = vst.msk [vmem:[#allocation2 + $0x118] sm:$0xff] %vm1186, %v1370
      %v1407 = vld [vmem:[#allocation2] sm:$0xff]
      %v1408 = vld [vmem:[#allocation2 + $0x8] sm:$0xff]
      %v1409 = vld [vmem:[#allocation2 + $0x10] sm:$0xff]
      %v1410 = vld [vmem:[#allocation2 + $0x18] sm:$0xff]
      %v1411 = vld [vmem:[#allocation2 + $0x20] sm:$0xff]
      %v1412 = vld [vmem:[#allocation2 + $0x28] sm:$0xff]
      %v1413 = vld [vmem:[#allocation2 + $0x30] sm:$0xff]
      %v1414 = vld [vmem:[#allocation2 + $0x38] sm:$0xff]
      %v1415 = vld [vmem:[#allocation2 + $0x40] sm:$0xff]
      %v1416 = vld [vmem:[#allocation2 + $0x48] sm:$0xff]
      %v1417 = vld [vmem:[#allocation2 + $0x50] sm:$0xff]
      %v1418 = vld [vmem:[#allocation2 + $0x58] sm:$0xff]
      %v1419 = vld [vmem:[#allocation2 + $0x60] sm:$0xff]
      %v1420 = vld [vmem:[#allocation2 + $0x68] sm:$0xff]
      %v1421 = vld [vmem:[#allocation2 + $0x70] sm:$0xff]
      %v1422 = vld [vmem:[#allocation2 + $0x78] sm:$0xff]
      %v1423 = vld [vmem:[#allocation2 + $0x80] sm:$0xff]
      %v1424 = vld [vmem:[#allocation2 + $0x88] sm:$0xff]
      %v1425 = vld [vmem:[#allocation2 + $0x90] sm:$0xff]
      %v1426 = vld [vmem:[#allocation2 + $0x98] sm:$0xff]
      %v1427 = vld [vmem:[#allocation2 + $0xa0] sm:$0xff]
      %v1428 = vld [vmem:[#allocation2 + $0xa8] sm:$0xff]
      %v1429 = vld [vmem:[#allocation2 + $0xb0] sm:$0xff]
      %v1430 = vld [vmem:[#allocation2 + $0xb8] sm:$0xff]
      %v1431 = vld [vmem:[#allocation2 + $0xc0] sm:$0xff]
      %v1432 = vld [vmem:[#allocation2 + $0xc8] sm:$0xff]
      %v1433 = vld [vmem:[#allocation2 + $0xd0] sm:$0xff]
      %v1434 = vld [vmem:[#allocation2 + $0xd8] sm:$0xff]
      %v1435 = vld [vmem:[#allocation2 + $0xe0] sm:$0xff]
      %v1436 = vld [vmem:[#allocation2 + $0xe8] sm:$0xff]
      %v1437 = vld [vmem:[#allocation2 + $0xf0] sm:$0xff]
      %v1438 = vld [vmem:[#allocation2 + $0xf8] sm:$0xff]
      %v1439 = vld [vmem:[#allocation2 + $0x100] sm:$0xff]
      %v1440 = vld [vmem:[#allocation2 + $0x108] sm:$0xff]
      %v1441 = vld [vmem:[#allocation2 + $0x110] sm:$0xff]
      %v1442 = vld [vmem:[#allocation2 + $0x118] sm:$0xff]
      %vm1443 = vcmask 195584
      %v1445 = vsel %vm1443, %v1200, 0
      %v1448 = vsel %vm1443, %v1201, 0
      %v1451 = vsel %vm1443, %v1202, 0
      %1453 = vmatprep.subr.mxu0 0.0
      %1454 = vmatpush1.msra.mxu0 0.0
      %1455 = vmatprep.subr.mxu0 0.0
      %1456 = vmatpush1.msra.mxu0 0.0
      %1457 = vmatprep.subr.mxu0 0.0
      %1458 = vmatpush1.msra.mxu0 0.0
      %1459 = vmatprep.subr.mxu0 0.0
      %1460 = vmatpush1.msra.mxu0 0.0
      %1461 = vmatprep.subr.mxu0 0.0
      %1462 = vmatpush1.msra.mxu0 0.0
      %1463 = vmatprep.subr.mxu0 0.0
      %1464 = vmatpush1.msra.mxu0 0.0
      %1465 = vmatprep.subr.mxu0 0.0
      %1466 = vmatpush1.msra.mxu0 0.0
      %1467 = vmatprep.subr.mxu0 0.0
      %1468 = vmatpush1.msra.mxu0 0.0
      %1469 = vmatprep.subr.mxu0 0.0
      %1470 = vmatpush1.msra.mxu0 0.0
      %1471 = vmatprep.subr.mxu0 0.0
      %1472 = vmatpush1.msra.mxu0 0.0
      %1473 = vmatprep.subr.mxu0 0.0
      %1474 = vmatpush1.msra.mxu0 0.0
      %1475 = vmatprep.subr.mxu0 0.0
      %1476 = vmatpush1.msra.mxu0 0.0
      %1477 = vmatprep.subr.mxu0 0.0
      %1478 = vmatpush1.msra.mxu0 0.0
      %1479 = vmatprep.subr.mxu0 %v1432
      %1480 = vmatpush1.msra.mxu0 %v1431
      %1481 = vmatprep.subr.mxu0 %v1420
      %1482 = vmatpush1.msra.mxu0 %v1419
      %1483 = vmatprep.subr.mxu0 %v1408
      %1484 = vmatpush1.msra.mxu0 %v1407
      %1485 = vmatprep.subr.mxu0 0.0
      %1486 = vmatpush2.msra.mxu0 0.0
      %1487 = vmatprep.subr.mxu0 0.0
      %1488 = vmatpush2.msra.mxu0 0.0
      %1489 = vmatprep.subr.mxu0 0.0
      %1490 = vmatpush2.msra.mxu0 0.0
      %1491 = vmatprep.subr.mxu0 0.0
      %1492 = vmatpush2.msra.mxu0 0.0
      %1493 = vmatprep.subr.mxu0 0.0
      %1494 = vmatpush2.msra.mxu0 0.0
      %1495 = vmatprep.subr.mxu0 0.0
      %1496 = vmatpush2.msra.mxu0 0.0
      %1497 = vmatprep.subr.mxu0 0.0
      %1498 = vmatpush2.msra.mxu0 0.0
      %1499 = vmatprep.subr.mxu0 0.0
      %1500 = vmatpush2.msra.mxu0 0.0
      %1501 = vmatprep.subr.mxu0 0.0
      %1502 = vmatpush2.msra.mxu0 0.0
      %1503 = vmatprep.subr.mxu0 0.0
      %1504 = vmatpush2.msra.mxu0 0.0
      %1505 = vmatprep.subr.mxu0 0.0
      %1506 = vmatpush2.msra.mxu0 0.0
      %1507 = vmatprep.subr.mxu0 0.0
      %1508 = vmatpush2.msra.mxu0 0.0
      %1509 = vmatprep.subr.mxu0 0.0
      %1510 = vmatpush2.msra.mxu0 0.0
      %1511 = vmatprep.subr.mxu0 0.0
      %1512 = vmatpush2.msra.mxu0 0.0
      %1513 = vmatprep.subr.mxu0 0.0
      %1514 = vmatpush2.msra.mxu0 0.0
      %1515 = vmatprep.subr.mxu0 0.0
      %1516 = vmatpush2.msra.mxu0 0.0
      %1517 = vmatprep.mubr.f32.mxu0 0.0
      %1518 = vmatmul.mubr.f32.gmra.mxu0 %v1445
      %v1519 = vpop.f32.mrf.mxu0
      %v1520 = vadd.f32 0.0, %v1519
      %v1521 = vpop.f32.mrf.mxu0
      %v1522 = vadd.f32 0.0, %v1521
      %1523 = vmatprep.mubr.f32.mxu0 0.0
      %1524 = vmatmul.mubr.f32.gmra.mxu0 %v1448
      %v1525 = vpop.f32.mrf.mxu0
      %v1526 = vadd.f32 0.0, %v1525
      %v1527 = vpop.f32.mrf.mxu0
      %v1528 = vadd.f32 0.0, %v1527
      %1529 = vmatprep.mubr.f32.mxu0 0.0
      %1530 = vmatmul.mubr.f32.gmra.mxu0 %v1451
      %v1531 = vpop.f32.mrf.mxu0
      %v1532 = vadd.f32 0.0, %v1531
      %v1533 = vpop.f32.mrf.mxu0
      %v1534 = vadd.f32 0.0, %v1533
      %1535 = vdwg.mxu0
      %1536 = vmatprep.subr.mxu0 0.0
      %1537 = vmatpush1.msra.mxu0 0.0
      %1538 = vmatprep.subr.mxu0 0.0
      %1539 = vmatpush1.msra.mxu0 0.0
      %1540 = vmatprep.subr.mxu0 0.0
      %1541 = vmatpush1.msra.mxu0 0.0
      %1542 = vmatprep.subr.mxu0 0.0
      %1543 = vmatpush1.msra.mxu0 0.0
      %1544 = vmatprep.subr.mxu0 0.0
      %1545 = vmatpush1.msra.mxu0 0.0
      %1546 = vmatprep.subr.mxu0 0.0
      %1547 = vmatpush1.msra.mxu0 0.0
      %1548 = vmatprep.subr.mxu0 0.0
      %1549 = vmatpush1.msra.mxu0 0.0
      %1550 = vmatprep.subr.mxu0 0.0
      %1551 = vmatpush1.msra.mxu0 0.0
      %1552 = vmatprep.subr.mxu0 0.0
      %1553 = vmatpush1.msra.mxu0 0.0
      %1554 = vmatprep.subr.mxu0 0.0
      %1555 = vmatpush1.msra.mxu0 0.0
      %1556 = vmatprep.subr.mxu0 0.0
      %1557 = vmatpush1.msra.mxu0 0.0
      %1558 = vmatprep.subr.mxu0 0.0
      %1559 = vmatpush1.msra.mxu0 0.0
      %1560 = vmatprep.subr.mxu0 0.0
      %1561 = vmatpush1.msra.mxu0 0.0
      %1562 = vmatprep.subr.mxu0 %v1434
      %1563 = vmatpush1.msra.mxu0 %v1433
      %1564 = vmatprep.subr.mxu0 %v1422
      %1565 = vmatpush1.msra.mxu0 %v1421
      %1566 = vmatprep.subr.mxu0 %v1410
      %1567 = vmatpush1.msra.mxu0 %v1409
      %1568 = vmatprep.subr.mxu0 0.0
      %1569 = vmatpush2.msra.mxu0 0.0
      %1570 = vmatprep.subr.mxu0 0.0
      %1571 = vmatpush2.msra.mxu0 0.0
      %1572 = vmatprep.subr.mxu0 0.0
      %1573 = vmatpush2.msra.mxu0 0.0
      %1574 = vmatprep.subr.mxu0 0.0
      %1575 = vmatpush2.msra.mxu0 0.0
      %1576 = vmatprep.subr.mxu0 0.0
      %1577 = vmatpush2.msra.mxu0 0.0
      %1578 = vmatprep.subr.mxu0 0.0
      %1579 = vmatpush2.msra.mxu0 0.0
      %1580 = vmatprep.subr.mxu0 0.0
      %1581 = vmatpush2.msra.mxu0 0.0
      %1582 = vmatprep.subr.mxu0 0.0
      %1583 = vmatpush2.msra.mxu0 0.0
      %1584 = vmatprep.subr.mxu0 0.0
      %1585 = vmatpush2.msra.mxu0 0.0
      %1586 = vmatprep.subr.mxu0 0.0
      %1587 = vmatpush2.msra.mxu0 0.0
      %1588 = vmatprep.subr.mxu0 0.0
      %1589 = vmatpush2.msra.mxu0 0.0
      %1590 = vmatprep.subr.mxu0 0.0
      %1591 = vmatpush2.msra.mxu0 0.0
      %1592 = vmatprep.subr.mxu0 0.0
      %1593 = vmatpush2.msra.mxu0 0.0
      %1594 = vmatprep.subr.mxu0 0.0
      %1595 = vmatpush2.msra.mxu0 0.0
      %1596 = vmatprep.subr.mxu0 0.0
      %1597 = vmatpush2.msra.mxu0 0.0
      %1598 = vmatprep.subr.mxu0 0.0
      %1599 = vmatpush2.msra.mxu0 0.0
      %1600 = vmatprep.mubr.f32.mxu0 0.0
      %1601 = vmatmul.mubr.f32.gmra.mxu0 %v1445
      %v1602 = vpop.f32.mrf.mxu0
      %v1603 = vadd.f32 0.0, %v1602
      %v1604 = vpop.f32.mrf.mxu0
      %v1605 = vadd.f32 0.0, %v1604
      %1606 = vmatprep.mubr.f32.mxu0 0.0
      %1607 = vmatmul.mubr.f32.gmra.mxu0 %v1448
      %v1608 = vpop.f32.mrf.mxu0
      %v1609 = vadd.f32 0.0, %v1608
      %v1610 = vpop.f32.mrf.mxu0
      %v1611 = vadd.f32 0.0, %v1610
      %1612 = vmatprep.mubr.f32.mxu0 0.0
      %1613 = vmatmul.mubr.f32.gmra.mxu0 %v1451
      %v1614 = vpop.f32.mrf.mxu0
      %v1615 = vadd.f32 0.0, %v1614
      %v1616 = vpop.f32.mrf.mxu0
      %v1617 = vadd.f32 0.0, %v1616
      %1618 = vdwg.mxu0
      %1619 = vmatprep.subr.mxu0 0.0
      %1620 = vmatpush1.msra.mxu0 0.0
      %1621 = vmatprep.subr.mxu0 0.0
      %1622 = vmatpush1.msra.mxu0 0.0
      %1623 = vmatprep.subr.mxu0 0.0
      %1624 = vmatpush1.msra.mxu0 0.0
      %1625 = vmatprep.subr.mxu0 0.0
      %1626 = vmatpush1.msra.mxu0 0.0
      %1627 = vmatprep.subr.mxu0 0.0
      %1628 = vmatpush1.msra.mxu0 0.0
      %1629 = vmatprep.subr.mxu0 0.0
      %1630 = vmatpush1.msra.mxu0 0.0
      %1631 = vmatprep.subr.mxu0 0.0
      %1632 = vmatpush1.msra.mxu0 0.0
      %1633 = vmatprep.subr.mxu0 0.0
      %1634 = vmatpush1.msra.mxu0 0.0
      %1635 = vmatprep.subr.mxu0 0.0
      %1636 = vmatpush1.msra.mxu0 0.0
      %1637 = vmatprep.subr.mxu0 0.0
      %1638 = vmatpush1.msra.mxu0 0.0
      %1639 = vmatprep.subr.mxu0 0.0
      %1640 = vmatpush1.msra.mxu0 0.0
      %1641 = vmatprep.subr.mxu0 0.0
      %1642 = vmatpush1.msra.mxu0 0.0
      %1643 = vmatprep.subr.mxu0 0.0
      %1644 = vmatpush1.msra.mxu0 0.0
      %1645 = vmatprep.subr.mxu0 %v1436
      %1646 = vmatpush1.msra.mxu0 %v1435
      %1647 = vmatprep.subr.mxu0 %v1424
      %1648 = vmatpush1.msra.mxu0 %v1423
      %1649 = vmatprep.subr.mxu0 %v1412
      %1650 = vmatpush1.msra.mxu0 %v1411
      %1651 = vmatprep.subr.mxu0 0.0
      %1652 = vmatpush2.msra.mxu0 0.0
      %1653 = vmatprep.subr.mxu0 0.0
      %1654 = vmatpush2.msra.mxu0 0.0
      %1655 = vmatprep.subr.mxu0 0.0
      %1656 = vmatpush2.msra.mxu0 0.0
      %1657 = vmatprep.subr.mxu0 0.0
      %1658 = vmatpush2.msra.mxu0 0.0
      %1659 = vmatprep.subr.mxu0 0.0
      %1660 = vmatpush2.msra.mxu0 0.0
      %1661 = vmatprep.subr.mxu0 0.0
      %1662 = vmatpush2.msra.mxu0 0.0
      %1663 = vmatprep.subr.mxu0 0.0
      %1664 = vmatpush2.msra.mxu0 0.0
      %1665 = vmatprep.subr.mxu0 0.0
      %1666 = vmatpush2.msra.mxu0 0.0
      %1667 = vmatprep.subr.mxu0 0.0
      %1668 = vmatpush2.msra.mxu0 0.0
      %1669 = vmatprep.subr.mxu0 0.0
      %1670 = vmatpush2.msra.mxu0 0.0
      %1671 = vmatprep.subr.mxu0 0.0
      %1672 = vmatpush2.msra.mxu0 0.0
      %1673 = vmatprep.subr.mxu0 0.0
      %1674 = vmatpush2.msra.mxu0 0.0
      %1675 = vmatprep.subr.mxu0 0.0
      %1676 = vmatpush2.msra.mxu0 0.0
      %1677 = vmatprep.subr.mxu0 0.0
      %1678 = vmatpush2.msra.mxu0 0.0
      %1679 = vmatprep.subr.mxu0 0.0
      %1680 = vmatpush2.msra.mxu0 0.0
      %1681 = vmatprep.subr.mxu0 0.0
      %1682 = vmatpush2.msra.mxu0 0.0
      %1683 = vmatprep.mubr.f32.mxu0 0.0
      %1684 = vmatmul.mubr.f32.gmra.mxu0 %v1445
      %v1685 = vpop.f32.mrf.mxu0
      %v1686 = vadd.f32 0.0, %v1685
      %v1687 = vpop.f32.mrf.mxu0
      %v1688 = vadd.f32 0.0, %v1687
      %1689 = vmatprep.mubr.f32.mxu0 0.0
      %1690 = vmatmul.mubr.f32.gmra.mxu0 %v1448
      %v1691 = vpop.f32.mrf.mxu0
      %v1692 = vadd.f32 0.0, %v1691
      %v1693 = vpop.f32.mrf.mxu0
      %v1694 = vadd.f32 0.0, %v1693
      %1695 = vmatprep.mubr.f32.mxu0 0.0
      %1696 = vmatmul.mubr.f32.gmra.mxu0 %v1451
      %v1697 = vpop.f32.mrf.mxu0
      %v1698 = vadd.f32 0.0, %v1697
      %v1699 = vpop.f32.mrf.mxu0
      %v1700 = vadd.f32 0.0, %v1699
      %1701 = vdwg.mxu0
      %1702 = vmatprep.subr.mxu0 0.0
      %1703 = vmatpush1.msra.mxu0 0.0
      %1704 = vmatprep.subr.mxu0 0.0
      %1705 = vmatpush1.msra.mxu0 0.0
      %1706 = vmatprep.subr.mxu0 0.0
      %1707 = vmatpush1.msra.mxu0 0.0
      %1708 = vmatprep.subr.mxu0 0.0
      %1709 = vmatpush1.msra.mxu0 0.0
      %1710 = vmatprep.subr.mxu0 0.0
      %1711 = vmatpush1.msra.mxu0 0.0
      %1712 = vmatprep.subr.mxu0 0.0
      %1713 = vmatpush1.msra.mxu0 0.0
      %1714 = vmatprep.subr.mxu0 0.0
      %1715 = vmatpush1.msra.mxu0 0.0
      %1716 = vmatprep.subr.mxu0 0.0
      %1717 = vmatpush1.msra.mxu0 0.0
      %1718 = vmatprep.subr.mxu0 0.0
      %1719 = vmatpush1.msra.mxu0 0.0
      %1720 = vmatprep.subr.mxu0 0.0
      %1721 = vmatpush1.msra.mxu0 0.0
      %1722 = vmatprep.subr.mxu0 0.0
      %1723 = vmatpush1.msra.mxu0 0.0
      %1724 = vmatprep.subr.mxu0 0.0
      %1725 = vmatpush1.msra.mxu0 0.0
      %1726 = vmatprep.subr.mxu0 0.0
      %1727 = vmatpush1.msra.mxu0 0.0
      %1728 = vmatprep.subr.mxu0 %v1438
      %1729 = vmatpush1.msra.mxu0 %v1437
      %1730 = vmatprep.subr.mxu0 %v1426
      %1731 = vmatpush1.msra.mxu0 %v1425
      %1732 = vmatprep.subr.mxu0 %v1414
      %1733 = vmatpush1.msra.mxu0 %v1413
      %1734 = vmatprep.subr.mxu0 0.0
      %1735 = vmatpush2.msra.mxu0 0.0
      %1736 = vmatprep.subr.mxu0 0.0
      %1737 = vmatpush2.msra.mxu0 0.0
      %1738 = vmatprep.subr.mxu0 0.0
      %1739 = vmatpush2.msra.mxu0 0.0
      %1740 = vmatprep.subr.mxu0 0.0
      %1741 = vmatpush2.msra.mxu0 0.0
      %1742 = vmatprep.subr.mxu0 0.0
      %1743 = vmatpush2.msra.mxu0 0.0
      %1744 = vmatprep.subr.mxu0 0.0
      %1745 = vmatpush2.msra.mxu0 0.0
      %1746 = vmatprep.subr.mxu0 0.0
      %1747 = vmatpush2.msra.mxu0 0.0
      %1748 = vmatprep.subr.mxu0 0.0
      %1749 = vmatpush2.msra.mxu0 0.0
      %1750 = vmatprep.subr.mxu0 0.0
      %1751 = vmatpush2.msra.mxu0 0.0
      %1752 = vmatprep.subr.mxu0 0.0
      %1753 = vmatpush2.msra.mxu0 0.0
      %1754 = vmatprep.subr.mxu0 0.0
      %1755 = vmatpush2.msra.mxu0 0.0
      %1756 = vmatprep.subr.mxu0 0.0
      %1757 = vmatpush2.msra.mxu0 0.0
      %1758 = vmatprep.subr.mxu0 0.0
      %1759 = vmatpush2.msra.mxu0 0.0
      %1760 = vmatprep.subr.mxu0 0.0
      %1761 = vmatpush2.msra.mxu0 0.0
      %1762 = vmatprep.subr.mxu0 0.0
      %1763 = vmatpush2.msra.mxu0 0.0
      %1764 = vmatprep.subr.mxu0 0.0
      %1765 = vmatpush2.msra.mxu0 0.0
      %1766 = vmatprep.mubr.f32.mxu0 0.0
      %1767 = vmatmul.mubr.f32.gmra.mxu0 %v1445
      %v1768 = vpop.f32.mrf.mxu0
      %v1769 = vadd.f32 0.0, %v1768
      %v1770 = vpop.f32.mrf.mxu0
      %v1771 = vadd.f32 0.0, %v1770
      %1772 = vmatprep.mubr.f32.mxu0 0.0
      %1773 = vmatmul.mubr.f32.gmra.mxu0 %v1448
      %v1774 = vpop.f32.mrf.mxu0
      %v1775 = vadd.f32 0.0, %v1774
      %v1776 = vpop.f32.mrf.mxu0
      %v1777 = vadd.f32 0.0, %v1776
      %1778 = vmatprep.mubr.f32.mxu0 0.0
      %1779 = vmatmul.mubr.f32.gmra.mxu0 %v1451
      %v1780 = vpop.f32.mrf.mxu0
      %v1781 = vadd.f32 0.0, %v1780
      %v1782 = vpop.f32.mrf.mxu0
      %v1783 = vadd.f32 0.0, %v1782
      %1784 = vdwg.mxu0
      %1785 = vmatprep.subr.mxu0 0.0
      %1786 = vmatpush1.msra.mxu0 0.0
      %1787 = vmatprep.subr.mxu0 0.0
      %1788 = vmatpush1.msra.mxu0 0.0
      %1789 = vmatprep.subr.mxu0 0.0
      %1790 = vmatpush1.msra.mxu0 0.0
      %1791 = vmatprep.subr.mxu0 0.0
      %1792 = vmatpush1.msra.mxu0 0.0
      %1793 = vmatprep.subr.mxu0 0.0
      %1794 = vmatpush1.msra.mxu0 0.0
      %1795 = vmatprep.subr.mxu0 0.0
      %1796 = vmatpush1.msra.mxu0 0.0
      %1797 = vmatprep.subr.mxu0 0.0
      %1798 = vmatpush1.msra.mxu0 0.0
      %1799 = vmatprep.subr.mxu0 0.0
      %1800 = vmatpush1.msra.mxu0 0.0
      %1801 = vmatprep.subr.mxu0 0.0
      %1802 = vmatpush1.msra.mxu0 0.0
      %1803 = vmatprep.subr.mxu0 0.0
      %1804 = vmatpush1.msra.mxu0 0.0
      %1805 = vmatprep.subr.mxu0 0.0
      %1806 = vmatpush1.msra.mxu0 0.0
      %1807 = vmatprep.subr.mxu0 0.0
      %1808 = vmatpush1.msra.mxu0 0.0
      %1809 = vmatprep.subr.mxu0 0.0
      %1810 = vmatpush1.msra.mxu0 0.0
      %1811 = vmatprep.subr.mxu0 %v1440
      %1812 = vmatpush1.msra.mxu0 %v1439
      %1813 = vmatprep.subr.mxu0 %v1428
      %1814 = vmatpush1.msra.mxu0 %v1427
      %1815 = vmatprep.subr.mxu0 %v1416
      %1816 = vmatpush1.msra.mxu0 %v1415
      %1817 = vmatprep.subr.mxu0 0.0
      %1818 = vmatpush2.msra.mxu0 0.0
      %1819 = vmatprep.subr.mxu0 0.0
      %1820 = vmatpush2.msra.mxu0 0.0
      %1821 = vmatprep.subr.mxu0 0.0
      %1822 = vmatpush2.msra.mxu0 0.0
      %1823 = vmatprep.subr.mxu0 0.0
      %1824 = vmatpush2.msra.mxu0 0.0
      %1825 = vmatprep.subr.mxu0 0.0
      %1826 = vmatpush2.msra.mxu0 0.0
      %1827 = vmatprep.subr.mxu0 0.0
      %1828 = vmatpush2.msra.mxu0 0.0
      %1829 = vmatprep.subr.mxu0 0.0
      %1830 = vmatpush2.msra.mxu0 0.0
      %1831 = vmatprep.subr.mxu0 0.0
      %1832 = vmatpush2.msra.mxu0 0.0
      %1833 = vmatprep.subr.mxu0 0.0
      %1834 = vmatpush2.msra.mxu0 0.0
      %1835 = vmatprep.subr.mxu0 0.0
      %1836 = vmatpush2.msra.mxu0 0.0
      %1837 = vmatprep.subr.mxu0 0.0
      %1838 = vmatpush2.msra.mxu0 0.0
      %1839 = vmatprep.subr.mxu0 0.0
      %1840 = vmatpush2.msra.mxu0 0.0
      %1841 = vmatprep.subr.mxu0 0.0
      %1842 = vmatpush2.msra.mxu0 0.0
      %1843 = vmatprep.subr.mxu0 0.0
      %1844 = vmatpush2.msra.mxu0 0.0
      %1845 = vmatprep.subr.mxu0 0.0
      %1846 = vmatpush2.msra.mxu0 0.0
      %1847 = vmatprep.subr.mxu0 0.0
      %1848 = vmatpush2.msra.mxu0 0.0
      %1849 = vmatprep.mubr.f32.mxu0 0.0
      %1850 = vmatmul.mubr.f32.gmra.mxu0 %v1445
      %v1851 = vpop.f32.mrf.mxu0
      %v1852 = vadd.f32 0.0, %v1851
      %v1853 = vpop.f32.mrf.mxu0
      %v1854 = vadd.f32 0.0, %v1853
      %1855 = vmatprep.mubr.f32.mxu0 0.0
      %1856 = vmatmul.mubr.f32.gmra.mxu0 %v1448
      %v1857 = vpop.f32.mrf.mxu0
      %v1858 = vadd.f32 0.0, %v1857
      %v1859 = vpop.f32.mrf.mxu0
      %v1860 = vadd.f32 0.0, %v1859
      %1861 = vmatprep.mubr.f32.mxu0 0.0
      %1862 = vmatmul.mubr.f32.gmra.mxu0 %v1451
      %v1863 = vpop.f32.mrf.mxu0
      %v1864 = vadd.f32 0.0, %v1863
      %v1865 = vpop.f32.mrf.mxu0
      %v1866 = vadd.f32 0.0, %v1865
      %1867 = vdwg.mxu0
      %1868 = vmatprep.subr.mxu0 0.0
      %1869 = vmatpush1.msra.mxu0 0.0
      %1870 = vmatprep.subr.mxu0 0.0
      %1871 = vmatpush1.msra.mxu0 0.0
      %1872 = vmatprep.subr.mxu0 0.0
      %1873 = vmatpush1.msra.mxu0 0.0
      %1874 = vmatprep.subr.mxu0 0.0
      %1875 = vmatpush1.msra.mxu0 0.0
      %1876 = vmatprep.subr.mxu0 0.0
      %1877 = vmatpush1.msra.mxu0 0.0
      %1878 = vmatprep.subr.mxu0 0.0
      %1879 = vmatpush1.msra.mxu0 0.0
      %1880 = vmatprep.subr.mxu0 0.0
      %1881 = vmatpush1.msra.mxu0 0.0
      %1882 = vmatprep.subr.mxu0 0.0
      %1883 = vmatpush1.msra.mxu0 0.0
      %1884 = vmatprep.subr.mxu0 0.0
      %1885 = vmatpush1.msra.mxu0 0.0
      %1886 = vmatprep.subr.mxu0 0.0
      %1887 = vmatpush1.msra.mxu0 0.0
      %1888 = vmatprep.subr.mxu0 0.0
      %1889 = vmatpush1.msra.mxu0 0.0
      %1890 = vmatprep.subr.mxu0 0.0
      %1891 = vmatpush1.msra.mxu0 0.0
      %1892 = vmatprep.subr.mxu0 0.0
      %1893 = vmatpush1.msra.mxu0 0.0
      %1894 = vmatprep.subr.mxu0 %v1442
      %1895 = vmatpush1.msra.mxu0 %v1441
      %1896 = vmatprep.subr.mxu0 %v1430
      %1897 = vmatpush1.msra.mxu0 %v1429
      %1898 = vmatprep.subr.mxu0 %v1418
      %1899 = vmatpush1.msra.mxu0 %v1417
      %1900 = vmatprep.subr.mxu0 0.0
      %1901 = vmatpush2.msra.mxu0 0.0
      %1902 = vmatprep.subr.mxu0 0.0
      %1903 = vmatpush2.msra.mxu0 0.0
      %1904 = vmatprep.subr.mxu0 0.0
      %1905 = vmatpush2.msra.mxu0 0.0
      %1906 = vmatprep.subr.mxu0 0.0
      %1907 = vmatpush2.msra.mxu0 0.0
      %1908 = vmatprep.subr.mxu0 0.0
      %1909 = vmatpush2.msra.mxu0 0.0
      %1910 = vmatprep.subr.mxu0 0.0
      %1911 = vmatpush2.msra.mxu0 0.0
      %1912 = vmatprep.subr.mxu0 0.0
      %1913 = vmatpush2.msra.mxu0 0.0
      %1914 = vmatprep.subr.mxu0 0.0
      %1915 = vmatpush2.msra.mxu0 0.0
      %1916 = vmatprep.subr.mxu0 0.0
      %1917 = vmatpush2.msra.mxu0 0.0
      %1918 = vmatprep.subr.mxu0 0.0
      %1919 = vmatpush2.msra.mxu0 0.0
      %1920 = vmatprep.subr.mxu0 0.0
      %1921 = vmatpush2.msra.mxu0 0.0
      %1922 = vmatprep.subr.mxu0 0.0
      %1923 = vmatpush2.msra.mxu0 0.0
      %1924 = vmatprep.subr.mxu0 0.0
      %1925 = vmatpush2.msra.mxu0 0.0
      %1926 = vmatprep.subr.mxu0 0.0
      %1927 = vmatpush2.msra.mxu0 0.0
      %1928 = vmatprep.subr.mxu0 0.0
      %1929 = vmatpush2.msra.mxu0 0.0
      %1930 = vmatprep.subr.mxu0 0.0
      %1931 = vmatpush2.msra.mxu0 0.0
      %1932 = vmatprep.mubr.f32.mxu0 0.0
      %1933 = vmatmul.mubr.f32.gmra.mxu0 %v1445
      %v1934 = vpop.f32.mrf.mxu0
      %v1935 = vadd.f32 0.0, %v1934
      %v1936 = vpop.f32.mrf.mxu0
      %v1937 = vadd.f32 0.0, %v1936
      %1938 = vmatprep.mubr.f32.mxu0 0.0
      %1939 = vmatmul.mubr.f32.gmra.mxu0 %v1448
      %v1940 = vpop.f32.mrf.mxu0
      %v1941 = vadd.f32 0.0, %v1940
      %v1942 = vpop.f32.mrf.mxu0
      %v1943 = vadd.f32 0.0, %v1942
      %1944 = vmatprep.mubr.f32.mxu0 0.0
      %1945 = vmatmul.mubr.f32.gmra.mxu0 %v1451
      %v1946 = vpop.f32.mrf.mxu0
      %v1947 = vadd.f32 0.0, %v1946
      %v1948 = vpop.f32.mrf.mxu0
      %v1949 = vadd.f32 0.0, %v1948
      %1950 = vdwg.mxu0
      %1951 = vrot.lane.b32.xlu0 %v1520, 20
      %v1952 = vpop.permute.xlu0 %1951
      %v1953 = vsel %vm1215, %v1952, %v1937
      %1954 = vrot.lane.b32.xlu0 %v1522, 20
      %v1955 = vpop.permute.xlu0 %1954
      %1956 = vrot.lane.b32.xlu0 %v1603, 20
      %v1957 = vpop.permute.xlu0 %1956
      %1958 = vrot.lane.b32.xlu0 %v1605, 20
      %v1959 = vpop.permute.xlu0 %1958
      %1960 = vrot.lane.b32.xlu0 %v1686, 20
      %v1961 = vpop.permute.xlu0 %1960
      %1962 = vrot.lane.b32.xlu0 %v1688, 20
      %v1963 = vpop.permute.xlu0 %1962
      %1964 = vrot.lane.b32.xlu0 %v1769, 20
      %v1965 = vpop.permute.xlu0 %1964
      %1966 = vrot.lane.b32.xlu0 %v1771, 20
      %v1967 = vpop.permute.xlu0 %1966
      %1968 = vrot.lane.b32.xlu0 %v1852, 20
      %v1969 = vpop.permute.xlu0 %1968
      %1970 = vrot.lane.b32.xlu0 %v1854, 20
      %v1971 = vpop.permute.xlu0 %1970
      %1972 = vrot.lane.b32.xlu0 %v1935, 20
      %v1973 = vpop.permute.xlu0 %1972
      %1974 = vrot.lane.b32.xlu0 %v1953, 20
      %v1975 = vpop.permute.xlu0 %1974
      %v1976 = vsel %vm1215, %v1955, %v1952
      %v1977 = vsel %vm1215, %v1957, %v1955
      %v1978 = vsel %vm1215, %v1959, %v1957
      %v1979 = vsel %vm1215, %v1961, %v1959
      %v1980 = vsel %vm1215, %v1963, %v1961
      %v1981 = vsel %vm1215, %v1965, %v1963
      %v1982 = vsel %vm1215, %v1967, %v1965
      %v1983 = vsel %vm1215, %v1969, %v1967
      %v1984 = vsel %vm1215, %v1971, %v1969
      %v1985 = vsel %vm1215, %v1973, %v1971
      %v1986 = vsel %vm1215, %v1975, %v1973
      %2000 = vrot.lane.b32.xlu0 %v1935, 14
      %v2001 = vpop.permute.xlu0 %2000
      %2002 = vrot.lane.b32.xlu0 %v1953, 14
      %v2003 = vpop.permute.xlu0 %2002
      %2004 = vrot.lane.b32.xlu0 %v1976, 14
      %v2005 = vpop.permute.xlu0 %2004
      %2006 = vrot.lane.b32.xlu0 %v1977, 14
      %v2007 = vpop.permute.xlu0 %2006
      %2008 = vrot.lane.b32.xlu0 %v1978, 14
      %v2009 = vpop.permute.xlu0 %2008
      %2010 = vrot.lane.b32.xlu0 %v1979, 14
      %v2011 = vpop.permute.xlu0 %2010
      %2012 = vrot.lane.b32.xlu0 %v1980, 14
      %v2013 = vpop.permute.xlu0 %2012
      %2014 = vrot.lane.b32.xlu0 %v1981, 14
      %v2015 = vpop.permute.xlu0 %2014
      %2016 = vrot.lane.b32.xlu0 %v1982, 14
      %v2017 = vpop.permute.xlu0 %2016
      %2018 = vrot.lane.b32.xlu0 %v1983, 14
      %v2019 = vpop.permute.xlu0 %2018
      %2020 = vrot.lane.b32.xlu0 %v1984, 14
      %v2021 = vpop.permute.xlu0 %2020
      %2022 = vrot.lane.b32.xlu0 %v1985, 14
      %v2023 = vpop.permute.xlu0 %2022
      %2024 = vrot.lane.b32.xlu0 %v1986, 14
      %v2025 = vpop.permute.xlu0 %2024
      %vm2026 = vcmask 113664
      %v2027 = vsel %vm2026, %v2001, %v2003
      %v2028 = vsel %vm2026, %v2003, %v2005
      %v2029 = vsel %vm2026, %v2005, %v2007
      %v2030 = vsel %vm2026, %v2007, %v2009
      %v2031 = vsel %vm2026, %v2009, %v2011
      %v2032 = vsel %vm2026, %v2011, %v2013
      %v2033 = vsel %vm2026, %v2013, %v2015
      %v2034 = vsel %vm2026, %v2015, %v2017
      %v2035 = vsel %vm2026, %v2017, %v2019
      %v2036 = vsel %vm2026, %v2019, %v2021
      %v2037 = vsel %vm2026, %v2021, %v2023
      %v2038 = vsel %vm2026, %v2023, %v2025
      %v2051 = vadd.f32 %v1526, %v2027
      %v2052 = vadd.f32 %v1528, %v2028
      %v2053 = vadd.f32 %v1609, %v2029
      %v2054 = vadd.f32 %v1611, %v2030
      %v2055 = vadd.f32 %v1692, %v2031
      %v2056 = vadd.f32 %v1694, %v2032
      %v2057 = vadd.f32 %v1775, %v2033
      %v2058 = vadd.f32 %v1777, %v2034
      %v2059 = vadd.f32 %v1858, %v2035
      %v2060 = vadd.f32 %v1860, %v2036
      %v2061 = vadd.f32 %v1941, %v2037
      %v2062 = vadd.f32 %v1943, %v2038
      %2063 = vrot.lane.b32.xlu0 %v1532, 20
      %v2064 = vpop.permute.xlu0 %2063
      %v2065 = vsel %vm1215, %v2064, %v1949
      %2078 = vrot.lane.b32.xlu0 %v1532, 94
      %v2079 = vpop.permute.xlu0 %2078
      %2080 = vrot.lane.b32.xlu0 %v1534, 94
      %v2081 = vpop.permute.xlu0 %2080
      %2082 = vrot.lane.b32.xlu0 %v1615, 94
      %v2083 = vpop.permute.xlu0 %2082
      %2084 = vrot.lane.b32.xlu0 %v1617, 94
      %v2085 = vpop.permute.xlu0 %2084
      %2086 = vrot.lane.b32.xlu0 %v1698, 94
      %v2087 = vpop.permute.xlu0 %2086
      %2088 = vrot.lane.b32.xlu0 %v1700, 94
      %v2089 = vpop.permute.xlu0 %2088
      %2090 = vrot.lane.b32.xlu0 %v1781, 94
      %v2091 = vpop.permute.xlu0 %2090
      %2092 = vrot.lane.b32.xlu0 %v1783, 94
      %v2093 = vpop.permute.xlu0 %2092
      %2094 = vrot.lane.b32.xlu0 %v1864, 94
      %v2095 = vpop.permute.xlu0 %2094
      %2096 = vrot.lane.b32.xlu0 %v1866, 94
      %v2097 = vpop.permute.xlu0 %2096
      %2098 = vrot.lane.b32.xlu0 %v1947, 94
      %v2099 = vpop.permute.xlu0 %2098
      %2100 = vrot.lane.b32.xlu0 %v2065, 94
      %v2101 = vpop.permute.xlu0 %2100
      %vm2102 = vcmask 769024
      %v2103 = vsel %vm2102, %v2079, %v2081
      %v2104 = vsel %vm2102, %v2081, %v2083
      %v2105 = vsel %vm2102, %v2083, %v2085
      %v2106 = vsel %vm2102, %v2085, %v2087
      %v2107 = vsel %vm2102, %v2087, %v2089
      %v2108 = vsel %vm2102, %v2089, %v2091
      %v2109 = vsel %vm2102, %v2091, %v2093
      %v2110 = vsel %vm2102, %v2093, %v2095
      %v2111 = vsel %vm2102, %v2095, %v2097
      %v2112 = vsel %vm2102, %v2097, %v2099
      %v2113 = vsel %vm2102, %v2099, %v2101
      %v2126 = vadd.f32 %v2051, %v2103
      %v2127 = vadd.f32 %v2052, %v2104
      %v2128 = vadd.f32 %v2053, %v2105
      %v2129 = vadd.f32 %v2054, %v2106
      %v2130 = vadd.f32 %v2055, %v2107
      %v2131 = vadd.f32 %v2056, %v2108
      %v2132 = vadd.f32 %v2057, %v2109
      %v2133 = vadd.f32 %v2058, %v2110
      %v2134 = vadd.f32 %v2059, %v2111
      %v2135 = vadd.f32 %v2060, %v2112
      %v2136 = vadd.f32 %v2061, %v2113
      %v2137 = vadd.f32 %v2062, %v2101
      %v2138 = vld [vmem:[%s6] sm:$0xff]
      %2140 = vset.pattern.permute.xlu0 0
      %2141 = vperm.xlu0 %2140, %v2138
      %v2142 = vpop.permute.xlu0 %2141
      %v2144 = vadd.f32 %v2126, %v2142
      %v2145 = vadd.f32 %v2127, %v2142
      %v2146 = vadd.f32 %v2128, %v2142
      %v2147 = vadd.f32 %v2129, %v2142
      %v2148 = vadd.f32 %v2130, %v2142
      %v2149 = vadd.f32 %v2131, %v2142
      %v2150 = vadd.f32 %v2132, %v2142
      %v2151 = vadd.f32 %v2133, %v2142
      %v2152 = vadd.f32 %v2134, %v2142
      %v2153 = vadd.f32 %v2135, %v2142
      %v2154 = vadd.f32 %v2136, %v2142
      %v2155 = vadd.f32 %v2137, %v2142
      %v2156 = vld [vmem:[%s7] sm:$0xff]
      %vm2157 = vcmp.gt.f32.partialorder %v2144, 0.0
      %vm2158 = vcmp.gt.f32.partialorder %v2145, 0.0
      %vm2159 = vcmp.gt.f32.partialorder %v2146, 0.0
      %vm2160 = vcmp.gt.f32.partialorder %v2147, 0.0
      %vm2161 = vcmp.gt.f32.partialorder %v2148, 0.0
      %vm2162 = vcmp.gt.f32.partialorder %v2149, 0.0
      %vm2163 = vcmp.gt.f32.partialorder %v2150, 0.0
      %vm2164 = vcmp.gt.f32.partialorder %v2151, 0.0
      %vm2165 = vcmp.gt.f32.partialorder %v2152, 0.0
      %vm2166 = vcmp.gt.f32.partialorder %v2153, 0.0
      %vm2167 = vcmp.gt.f32.partialorder %v2154, 0.0
      %vm2168 = vcmp.gt.f32.partialorder %v2155, 0.0
      %2170 = vset.pattern.permute.xlu0 0
      %2171 = vperm.xlu0 %2170, %v2156
      %v2172 = vpop.permute.xlu0 %2171
      %v2174 = vmul.f32 %v2172, %v2144
      %v2175 = vmul.f32 %v2172, %v2145
      %v2176 = vmul.f32 %v2172, %v2146
      %v2177 = vmul.f32 %v2172, %v2147
      %v2178 = vmul.f32 %v2172, %v2148
      %v2179 = vmul.f32 %v2172, %v2149
      %v2180 = vmul.f32 %v2172, %v2150
      %v2181 = vmul.f32 %v2172, %v2151
      %v2182 = vmul.f32 %v2172, %v2152
      %v2183 = vmul.f32 %v2172, %v2153
      %v2184 = vmul.f32 %v2172, %v2154
      %v2185 = vmul.f32 %v2172, %v2155
      %v2186 = vsel %vm2157, %v2144, %v2174
      %v2187 = vsel %vm2158, %v2145, %v2175
      %v2188 = vsel %vm2159, %v2146, %v2176
      %v2189 = vsel %vm2160, %v2147, %v2177
      %v2190 = vsel %vm2161, %v2148, %v2178
      %v2191 = vsel %vm2162, %v2149, %v2179
      %v2192 = vsel %vm2163, %v2150, %v2180
      %v2193 = vsel %vm2164, %v2151, %v2181
      %v2194 = vsel %vm2165, %v2152, %v2182
      %v2195 = vsel %vm2166, %v2153, %v2183
      %v2196 = vsel %vm2167, %v2154, %v2184
      %v2197 = vsel %vm2168, %v2155, %v2185
      %v2198 = vmul.f32 %v2186, %v1094
      %v2199 = vmul.f32 %v2187, %v1098
      %v2200 = vmul.f32 %v2188, %v1102
      %v2201 = vmul.f32 %v2189, %v1106
      %v2202 = vmul.f32 %v2190, %v1110
      %v2203 = vmul.f32 %v2191, %v1114
      %v2204 = vmul.f32 %v2192, %v1118
      %v2205 = vmul.f32 %v2193, %v1122
      %v2206 = vmul.f32 %v2194, %v1126
      %v2207 = vmul.f32 %v2195, %v1130
      %v2208 = vmul.f32 %v2196, %v1134
      %v2209 = vmul.f32 %v2197, %v1138
      %v2210 = vld [vmem:[%s8] sm:$0xff]
      %v2211 = vld [vmem:[%s8 + $0x8] sm:$0xff]
      %v2212 = vld [vmem:[%s8 + $0x10] sm:$0xff]
      %v2213 = vld [vmem:[%s8 + $0x18] sm:$0xff]
      %2214 = vrot.lane.b32.xlu0 %v2198, 20
      %v2215 = vpop.permute.xlu0 %2214
      %v2216 = vsel %vm1215, %v2215, %v2209
      %2217 = vrot.lane.b32.xlu0 %v2199, 20
      %v2218 = vpop.permute.xlu0 %2217
      %2219 = vrot.lane.b32.xlu0 %v2200, 20
      %v2220 = vpop.permute.xlu0 %2219
      %2221 = vrot.lane.b32.xlu0 %v2201, 20
      %v2222 = vpop.permute.xlu0 %2221
      %2223 = vrot.lane.b32.xlu0 %v2202, 20
      %v2224 = vpop.permute.xlu0 %2223
      %2225 = vrot.lane.b32.xlu0 %v2203, 20
      %v2226 = vpop.permute.xlu0 %2225
      %2227 = vrot.lane.b32.xlu0 %v2204, 20
      %v2228 = vpop.permute.xlu0 %2227
      %2229 = vrot.lane.b32.xlu0 %v2205, 20
      %v2230 = vpop.permute.xlu0 %2229
      %2231 = vrot.lane.b32.xlu0 %v2206, 20
      %v2232 = vpop.permute.xlu0 %2231
      %2233 = vrot.lane.b32.xlu0 %v2207, 20
      %v2234 = vpop.permute.xlu0 %2233
      %2235 = vrot.lane.b32.xlu0 %v2208, 20
      %v2236 = vpop.permute.xlu0 %2235
      %2237 = vrot.lane.b32.xlu0 %v2216, 20
      %v2238 = vpop.permute.xlu0 %2237
      %v2239 = vsel %vm1215, %v2218, %v2215
      %v2240 = vsel %vm1215, %v2220, %v2218
      %v2241 = vsel %vm1215, %v2222, %v2220
      %v2242 = vsel %vm1215, %v2224, %v2222
      %v2243 = vsel %vm1215, %v2226, %v2224
      %v2244 = vsel %vm1215, %v2228, %v2226
      %v2245 = vsel %vm1215, %v2230, %v2228
      %v2246 = vsel %vm1215, %v2232, %v2230
      %v2247 = vsel %vm1215, %v2234, %v2232
      %v2248 = vsel %vm1215, %v2236, %v2234
      %v2249 = vsel %vm1215, %v2238, %v2236
      %2262 = vrot.lane.b32.xlu0 %v2216, 109
      %v2263 = vpop.permute.xlu0 %2262
      %2264 = vrot.lane.b32.xlu0 %v2239, 109
      %v2265 = vpop.permute.xlu0 %2264
      %2266 = vrot.lane.b32.xlu0 %v2240, 109
      %v2267 = vpop.permute.xlu0 %2266
      %2268 = vrot.lane.b32.xlu0 %v2241, 109
      %v2269 = vpop.permute.xlu0 %2268
      %2270 = vrot.lane.b32.xlu0 %v2242, 109
      %v2271 = vpop.permute.xlu0 %2270
      %2272 = vrot.lane.b32.xlu0 %v2243, 109
      %v2273 = vpop.permute.xlu0 %2272
      %2274 = vrot.lane.b32.xlu0 %v2244, 109
      %v2275 = vpop.permute.xlu0 %2274
      %2276 = vrot.lane.b32.xlu0 %v2245, 109
      %v2277 = vpop.permute.xlu0 %2276
      %2278 = vrot.lane.b32.xlu0 %v2246, 109
      %v2279 = vpop.permute.xlu0 %2278
      %2280 = vrot.lane.b32.xlu0 %v2247, 109
      %v2281 = vpop.permute.xlu0 %2280
      %2282 = vrot.lane.b32.xlu0 %v2248, 109
      %v2283 = vpop.permute.xlu0 %2282
      %2284 = vrot.lane.b32.xlu0 %v2249, 109
      %v2285 = vpop.permute.xlu0 %2284
      %v2286 = vsel %vm1288, %v2263, %v2265
      %v2287 = vsel %vm1288, %v2265, %v2267
      %v2288 = vsel %vm1288, %v2267, %v2269
      %v2289 = vsel %vm1288, %v2269, %v2271
      %v2290 = vsel %vm1288, %v2271, %v2273
      %v2291 = vsel %vm1288, %v2273, %v2275
      %v2292 = vsel %vm1288, %v2275, %v2277
      %v2293 = vsel %vm1288, %v2277, %v2279
      %v2294 = vsel %vm1288, %v2279, %v2281
      %v2295 = vsel %vm1288, %v2281, %v2283
      %v2296 = vsel %vm1288, %v2283, %v2285
      %2309 = vst [vmem:[#allocation2] sm:$0xff] %v2286
      %2310 = vst [vmem:[#allocation2 + $0x8] sm:$0xff] %v2287
      %2311 = vst [vmem:[#allocation2 + $0x10] sm:$0xff] %v2288
      %2312 = vst [vmem:[#allocation2 + $0x18] sm:$0xff] %v2289
      %2313 = vst [vmem:[#allocation2 + $0x20] sm:$0xff] %v2290
      %2314 = vst [vmem:[#allocation2 + $0x28] sm:$0xff] %v2291
      %2315 = vst [vmem:[#allocation2 + $0x30] sm:$0xff] %v2292
      %2316 = vst [vmem:[#allocation2 + $0x38] sm:$0xff] %v2293
      %2317 = vst [vmem:[#allocation2 + $0x40] sm:$0xff] %v2294
      %2318 = vst [vmem:[#allocation2 + $0x48] sm:$0xff] %v2295
      %2319 = vst [vmem:[#allocation2 + $0x50] sm:$0xff] %v2296
      %2320 = vst.msk [vmem:[#allocation2 + $0x58] sm:$0xff] %vm1186, %v2285
      %2321 = vst [vmem:[#allocation2 + $0x60] sm:$0xff] %v2198
      %2322 = vst [vmem:[#allocation2 + $0x68] sm:$0xff] %v2199
      %2323 = vst [vmem:[#allocation2 + $0x70] sm:$0xff] %v2200
      %2324 = vst [vmem:[#allocation2 + $0x78] sm:$0xff] %v2201
      %2325 = vst [vmem:[#allocation2 + $0x80] sm:$0xff] %v2202
      %2326 = vst [vmem:[#allocation2 + $0x88] sm:$0xff] %v2203
      %2327 = vst [vmem:[#allocation2 + $0x90] sm:$0xff] %v2204
      %2328 = vst [vmem:[#allocation2 + $0x98] sm:$0xff] %v2205
      %2329 = vst [vmem:[#allocation2 + $0xa0] sm:$0xff] %v2206
      %2330 = vst [vmem:[#allocation2 + $0xa8] sm:$0xff] %v2207
      %2331 = vst [vmem:[#allocation2 + $0xb0] sm:$0xff] %v2208
      %2332 = vst.msk [vmem:[#allocation2 + $0xb8] sm:$0xff] %vm1186, %v2209
      %2344 = vrot.lane.b32.xlu0 %v2198, 127
      %v2345 = vpop.permute.xlu0 %2344
      %2346 = vrot.lane.b32.xlu0 %v2199, 127
      %v2347 = vpop.permute.xlu0 %2346
      %2348 = vrot.lane.b32.xlu0 %v2200, 127
      %v2349 = vpop.permute.xlu0 %2348
      %2350 = vrot.lane.b32.xlu0 %v2201, 127
      %v2351 = vpop.permute.xlu0 %2350
      %2352 = vrot.lane.b32.xlu0 %v2202, 127
      %v2353 = vpop.permute.xlu0 %2352
      %2354 = vrot.lane.b32.xlu0 %v2203, 127
      %v2355 = vpop.permute.xlu0 %2354
      %2356 = vrot.lane.b32.xlu0 %v2204, 127
      %v2357 = vpop.permute.xlu0 %2356
      %2358 = vrot.lane.b32.xlu0 %v2205, 127
      %v2359 = vpop.permute.xlu0 %2358
      %2360 = vrot.lane.b32.xlu0 %v2206, 127
      %v2361 = vpop.permute.xlu0 %2360
      %2362 = vrot.lane.b32.xlu0 %v2207, 127
      %v2363 = vpop.permute.xlu0 %2362
      %2364 = vrot.lane.b32.xlu0 %v2208, 127
      %v2365 = vpop.permute.xlu0 %2364
      %2366 = vrot.lane.b32.xlu0 %v2216, 127
      %v2367 = vpop.permute.xlu0 %2366
      %v2368 = vsel %vm1371, %v2345, %v2347
      %v2369 = vsel %vm1371, %v2347, %v2349
      %v2370 = vsel %vm1371, %v2349, %v2351
      %v2371 = vsel %vm1371, %v2351, %v2353
      %v2372 = vsel %vm1371, %v2353, %v2355
      %v2373 = vsel %vm1371, %v2355, %v2357
      %v2374 = vsel %vm1371, %v2357, %v2359
      %v2375 = vsel %vm1371, %v2359, %v2361
      %v2376 = vsel %vm1371, %v2361, %v2363
      %v2377 = vsel %vm1371, %v2363, %v2365
      %v2378 = vsel %vm1371, %v2365, %v2367
      %2391 = vst [vmem:[#allocation2 + $0xc0] sm:$0xff] %v2368
      %2392 = vst [vmem:[#allocation2 + $0xc8] sm:$0xff] %v2369
      %2393 = vst [vmem:[#allocation2 + $0xd0] sm:$0xff] %v2370
      %2394 = vst [vmem:[#allocation2 + $0xd8] sm:$0xff] %v2371
      %2395 = vst [vmem:[#allocation2 + $0xe0] sm:$0xff] %v2372
      %2396 = vst [vmem:[#allocation2 + $0xe8] sm:$0xff] %v2373
      %2397 = vst [vmem:[#allocation2 + $0xf0] sm:$0xff] %v2374
      %2398 = vst [vmem:[#allocation2 + $0xf8] sm:$0xff] %v2375
      %2399 = vst [vmem:[#allocation2 + $0x100] sm:$0xff] %v2376
      %2400 = vst [vmem:[#allocation2 + $0x108] sm:$0xff] %v2377
      %2401 = vst [vmem:[#allocation2 + $0x110] sm:$0xff] %v2378
      %2402 = vst.msk [vmem:[#allocation2 + $0x118] sm:$0xff] %vm1186, %v2367
      %v2403 = vld [vmem:[#allocation2] sm:$0xff]
      %v2404 = vld [vmem:[#allocation2 + $0x8] sm:$0xff]
      %v2405 = vld [vmem:[#allocation2 + $0x10] sm:$0xff]
      %v2406 = vld [vmem:[#allocation2 + $0x18] sm:$0xff]
      %v2407 = vld [vmem:[#allocation2 + $0x20] sm:$0xff]
      %v2408 = vld [vmem:[#allocation2 + $0x28] sm:$0xff]
      %v2409 = vld [vmem:[#allocation2 + $0x30] sm:$0xff]
      %v2410 = vld [vmem:[#allocation2 + $0x38] sm:$0xff]
      %v2411 = vld [vmem:[#allocation2 + $0x40] sm:$0xff]
      %v2412 = vld [vmem:[#allocation2 + $0x48] sm:$0xff]
      %v2413 = vld [vmem:[#allocation2 + $0x50] sm:$0xff]
      %v2414 = vld [vmem:[#allocation2 + $0x58] sm:$0xff]
      %v2415 = vld [vmem:[#allocation2 + $0x60] sm:$0xff]
      %v2416 = vld [vmem:[#allocation2 + $0x68] sm:$0xff]
      %v2417 = vld [vmem:[#allocation2 + $0x70] sm:$0xff]
      %v2418 = vld [vmem:[#allocation2 + $0x78] sm:$0xff]
      %v2419 = vld [vmem:[#allocation2 + $0x80] sm:$0xff]
      %v2420 = vld [vmem:[#allocation2 + $0x88] sm:$0xff]
      %v2421 = vld [vmem:[#allocation2 + $0x90] sm:$0xff]
      %v2422 = vld [vmem:[#allocation2 + $0x98] sm:$0xff]
      %v2423 = vld [vmem:[#allocation2 + $0xa0] sm:$0xff]
      %v2424 = vld [vmem:[#allocation2 + $0xa8] sm:$0xff]
      %v2425 = vld [vmem:[#allocation2 + $0xb0] sm:$0xff]
      %v2426 = vld [vmem:[#allocation2 + $0xb8] sm:$0xff]
      %v2427 = vld [vmem:[#allocation2 + $0xc0] sm:$0xff]
      %v2428 = vld [vmem:[#allocation2 + $0xc8] sm:$0xff]
      %v2429 = vld [vmem:[#allocation2 + $0xd0] sm:$0xff]
      %v2430 = vld [vmem:[#allocation2 + $0xd8] sm:$0xff]
      %v2431 = vld [vmem:[#allocation2 + $0xe0] sm:$0xff]
      %v2432 = vld [vmem:[#allocation2 + $0xe8] sm:$0xff]
      %v2433 = vld [vmem:[#allocation2 + $0xf0] sm:$0xff]
      %v2434 = vld [vmem:[#allocation2 + $0xf8] sm:$0xff]
      %v2435 = vld [vmem:[#allocation2 + $0x100] sm:$0xff]
      %v2436 = vld [vmem:[#allocation2 + $0x108] sm:$0xff]
      %v2437 = vld [vmem:[#allocation2 + $0x110] sm:$0xff]
      %v2438 = vld [vmem:[#allocation2 + $0x118] sm:$0xff]
      %v2440 = vsel %vm1443, %v2210, 0
      %v2443 = vsel %vm1443, %v2211, 0
      %v2446 = vsel %vm1443, %v2212, 0
      %v2449 = vsel %vm1443, %v2213, 0
      %2451 = vmatprep.subr.mxu0 0.0
      %2452 = vmatpush1.msra.mxu0 0.0
      %2453 = vmatprep.subr.mxu0 0.0
      %2454 = vmatpush1.msra.mxu0 0.0
      %2455 = vmatprep.subr.mxu0 0.0
      %2456 = vmatpush1.msra.mxu0 0.0
      %2457 = vmatprep.subr.mxu0 0.0
      %2458 = vmatpush1.msra.mxu0 0.0
      %2459 = vmatprep.subr.mxu0 0.0
      %2460 = vmatpush1.msra.mxu0 0.0
      %2461 = vmatprep.subr.mxu0 0.0
      %2462 = vmatpush1.msra.mxu0 0.0
      %2463 = vmatprep.subr.mxu0 0.0
      %2464 = vmatpush1.msra.mxu0 0.0
      %2465 = vmatprep.subr.mxu0 0.0
      %2466 = vmatpush1.msra.mxu0 0.0
      %2467 = vmatprep.subr.mxu0 0.0
      %2468 = vmatpush1.msra.mxu0 0.0
      %2469 = vmatprep.subr.mxu0 0.0
      %2470 = vmatpush1.msra.mxu0 0.0
      %2471 = vmatprep.subr.mxu0 0.0
      %2472 = vmatpush1.msra.mxu0 0.0
      %2473 = vmatprep.subr.mxu0 0.0
      %2474 = vmatpush1.msra.mxu0 0.0
      %2475 = vmatprep.subr.mxu0 0.0
      %2476 = vmatpush1.msra.mxu0 0.0
      %2477 = vmatprep.subr.mxu0 %v2428
      %2478 = vmatpush1.msra.mxu0 %v2427
      %2479 = vmatprep.subr.mxu0 %v2416
      %2480 = vmatpush1.msra.mxu0 %v2415
      %2481 = vmatprep.subr.mxu0 %v2404
      %2482 = vmatpush1.msra.mxu0 %v2403
      %2483 = vmatprep.subr.mxu0 0.0
      %2484 = vmatpush2.msra.mxu0 0.0
      %2485 = vmatprep.subr.mxu0 0.0
      %2486 = vmatpush2.msra.mxu0 0.0
      %2487 = vmatprep.subr.mxu0 0.0
      %2488 = vmatpush2.msra.mxu0 0.0
      %2489 = vmatprep.subr.mxu0 0.0
      %2490 = vmatpush2.msra.mxu0 0.0
      %2491 = vmatprep.subr.mxu0 0.0
      %2492 = vmatpush2.msra.mxu0 0.0
      %2493 = vmatprep.subr.mxu0 0.0
      %2494 = vmatpush2.msra.mxu0 0.0
      %2495 = vmatprep.subr.mxu0 0.0
      %2496 = vmatpush2.msra.mxu0 0.0
      %2497 = vmatprep.subr.mxu0 0.0
      %2498 = vmatpush2.msra.mxu0 0.0
      %2499 = vmatprep.subr.mxu0 0.0
      %2500 = vmatpush2.msra.mxu0 0.0
      %2501 = vmatprep.subr.mxu0 0.0
      %2502 = vmatpush2.msra.mxu0 0.0
      %2503 = vmatprep.subr.mxu0 0.0
      %2504 = vmatpush2.msra.mxu0 0.0
      %2505 = vmatprep.subr.mxu0 0.0
      %2506 = vmatpush2.msra.mxu0 0.0
      %2507 = vmatprep.subr.mxu0 0.0
      %2508 = vmatpush2.msra.mxu0 0.0
      %2509 = vmatprep.subr.mxu0 0.0
      %2510 = vmatpush2.msra.mxu0 0.0
      %2511 = vmatprep.subr.mxu0 0.0
      %2512 = vmatpush2.msra.mxu0 0.0
      %2513 = vmatprep.subr.mxu0 0.0
      %2514 = vmatpush2.msra.mxu0 0.0
      %2515 = vmatprep.mubr.f32.mxu0 0.0
      %2516 = vmatmul.mubr.f32.gmra.mxu0 %v2440
      %v2517 = vpop.f32.mrf.mxu0
      %v2518 = vadd.f32 0.0, %v2517
      %v2519 = vpop.f32.mrf.mxu0
      %v2520 = vadd.f32 0.0, %v2519
      %2521 = vmatprep.mubr.f32.mxu0 0.0
      %2522 = vmatmul.mubr.f32.gmra.mxu0 %v2443
      %v2523 = vpop.f32.mrf.mxu0
      %v2524 = vadd.f32 0.0, %v2523
      %v2525 = vpop.f32.mrf.mxu0
      %v2526 = vadd.f32 0.0, %v2525
      %2527 = vmatprep.mubr.f32.mxu0 0.0
      %2528 = vmatmul.mubr.f32.gmra.mxu0 %v2446
      %v2529 = vpop.f32.mrf.mxu0
      %v2530 = vadd.f32 0.0, %v2529
      %v2531 = vpop.f32.mrf.mxu0
      %v2532 = vadd.f32 0.0, %v2531
      %2533 = vmatprep.mubr.f32.mxu0 0.0
      %2534 = vmatmul.mubr.f32.gmra.mxu0 %v2449
      %v2535 = vpop.f32.mrf.mxu0
      %v2536 = vadd.f32 0.0, %v2535
      %v2537 = vpop.f32.mrf.mxu0
      %v2538 = vadd.f32 0.0, %v2537
      %2539 = vdwg.mxu0
      %2540 = vmatprep.subr.mxu0 0.0
      %2541 = vmatpush1.msra.mxu0 0.0
      %2542 = vmatprep.subr.mxu0 0.0
      %2543 = vmatpush1.msra.mxu0 0.0
      %2544 = vmatprep.subr.mxu0 0.0
      %2545 = vmatpush1.msra.mxu0 0.0
      %2546 = vmatprep.subr.mxu0 0.0
      %2547 = vmatpush1.msra.mxu0 0.0
      %2548 = vmatprep.subr.mxu0 0.0
      %2549 = vmatpush1.msra.mxu0 0.0
      %2550 = vmatprep.subr.mxu0 0.0
      %2551 = vmatpush1.msra.mxu0 0.0
      %2552 = vmatprep.subr.mxu0 0.0
      %2553 = vmatpush1.msra.mxu0 0.0
      %2554 = vmatprep.subr.mxu0 0.0
      %2555 = vmatpush1.msra.mxu0 0.0
      %2556 = vmatprep.subr.mxu0 0.0
      %2557 = vmatpush1.msra.mxu0 0.0
      %2558 = vmatprep.subr.mxu0 0.0
      %2559 = vmatpush1.msra.mxu0 0.0
      %2560 = vmatprep.subr.mxu0 0.0
      %2561 = vmatpush1.msra.mxu0 0.0
      %2562 = vmatprep.subr.mxu0 0.0
      %2563 = vmatpush1.msra.mxu0 0.0
      %2564 = vmatprep.subr.mxu0 0.0
      %2565 = vmatpush1.msra.mxu0 0.0
      %2566 = vmatprep.subr.mxu0 %v2430
      %2567 = vmatpush1.msra.mxu0 %v2429
      %2568 = vmatprep.subr.mxu0 %v2418
      %2569 = vmatpush1.msra.mxu0 %v2417
      %2570 = vmatprep.subr.mxu0 %v2406
      %2571 = vmatpush1.msra.mxu0 %v2405
      %2572 = vmatprep.subr.mxu0 0.0
      %2573 = vmatpush2.msra.mxu0 0.0
      %2574 = vmatprep.subr.mxu0 0.0
      %2575 = vmatpush2.msra.mxu0 0.0
      %2576 = vmatprep.subr.mxu0 0.0
      %2577 = vmatpush2.msra.mxu0 0.0
      %2578 = vmatprep.subr.mxu0 0.0
      %2579 = vmatpush2.msra.mxu0 0.0
      %2580 = vmatprep.subr.mxu0 0.0
      %2581 = vmatpush2.msra.mxu0 0.0
      %2582 = vmatprep.subr.mxu0 0.0
      %2583 = vmatpush2.msra.mxu0 0.0
      %2584 = vmatprep.subr.mxu0 0.0
      %2585 = vmatpush2.msra.mxu0 0.0
      %2586 = vmatprep.subr.mxu0 0.0
      %2587 = vmatpush2.msra.mxu0 0.0
      %2588 = vmatprep.subr.mxu0 0.0
      %2589 = vmatpush2.msra.mxu0 0.0
      %2590 = vmatprep.subr.mxu0 0.0
      %2591 = vmatpush2.msra.mxu0 0.0
      %2592 = vmatprep.subr.mxu0 0.0
      %2593 = vmatpush2.msra.mxu0 0.0
      %2594 = vmatprep.subr.mxu0 0.0
      %2595 = vmatpush2.msra.mxu0 0.0
      %2596 = vmatprep.subr.mxu0 0.0
      %2597 = vmatpush2.msra.mxu0 0.0
      %2598 = vmatprep.subr.mxu0 0.0
      %2599 = vmatpush2.msra.mxu0 0.0
      %2600 = vmatprep.subr.mxu0 0.0
      %2601 = vmatpush2.msra.mxu0 0.0
      %2602 = vmatprep.subr.mxu0 0.0
      %2603 = vmatpush2.msra.mxu0 0.0
      %2604 = vmatprep.mubr.f32.mxu0 0.0
      %2605 = vmatmul.mubr.f32.gmra.mxu0 %v2440
      %v2606 = vpop.f32.mrf.mxu0
      %v2607 = vadd.f32 0.0, %v2606
      %v2608 = vpop.f32.mrf.mxu0
      %v2609 = vadd.f32 0.0, %v2608
      %2610 = vmatprep.mubr.f32.mxu0 0.0
      %2611 = vmatmul.mubr.f32.gmra.mxu0 %v2443
      %v2612 = vpop.f32.mrf.mxu0
      %v2613 = vadd.f32 0.0, %v2612
      %v2614 = vpop.f32.mrf.mxu0
      %v2615 = vadd.f32 0.0, %v2614
      %2616 = vmatprep.mubr.f32.mxu0 0.0
      %2617 = vmatmul.mubr.f32.gmra.mxu0 %v2446
      %v2618 = vpop.f32.mrf.mxu0
      %v2619 = vadd.f32 0.0, %v2618
      %v2620 = vpop.f32.mrf.mxu0
      %v2621 = vadd.f32 0.0, %v2620
      %2622 = vmatprep.mubr.f32.mxu0 0.0
      %2623 = vmatmul.mubr.f32.gmra.mxu0 %v2449
      %v2624 = vpop.f32.mrf.mxu0
      %v2625 = vadd.f32 0.0, %v2624
      %v2626 = vpop.f32.mrf.mxu0
      %v2627 = vadd.f32 0.0, %v2626
      %2628 = vdwg.mxu0
      %2629 = vmatprep.subr.mxu0 0.0
      %2630 = vmatpush1.msra.mxu0 0.0
      %2631 = vmatprep.subr.mxu0 0.0
      %2632 = vmatpush1.msra.mxu0 0.0
      %2633 = vmatprep.subr.mxu0 0.0
      %2634 = vmatpush1.msra.mxu0 0.0
      %2635 = vmatprep.subr.mxu0 0.0
      %2636 = vmatpush1.msra.mxu0 0.0
      %2637 = vmatprep.subr.mxu0 0.0
      %2638 = vmatpush1.msra.mxu0 0.0
      %2639 = vmatprep.subr.mxu0 0.0
      %2640 = vmatpush1.msra.mxu0 0.0
      %2641 = vmatprep.subr.mxu0 0.0
      %2642 = vmatpush1.msra.mxu0 0.0
      %2643 = vmatprep.subr.mxu0 0.0
      %2644 = vmatpush1.msra.mxu0 0.0
      %2645 = vmatprep.subr.mxu0 0.0
      %2646 = vmatpush1.msra.mxu0 0.0
      %2647 = vmatprep.subr.mxu0 0.0
      %2648 = vmatpush1.msra.mxu0 0.0
      %2649 = vmatprep.subr.mxu0 0.0
      %2650 = vmatpush1.msra.mxu0 0.0
      %2651 = vmatprep.subr.mxu0 0.0
      %2652 = vmatpush1.msra.mxu0 0.0
      %2653 = vmatprep.subr.mxu0 0.0
      %2654 = vmatpush1.msra.mxu0 0.0
      %2655 = vmatprep.subr.mxu0 %v2432
      %2656 = vmatpush1.msra.mxu0 %v2431
      %2657 = vmatprep.subr.mxu0 %v2420
      %2658 = vmatpush1.msra.mxu0 %v2419
      %2659 = vmatprep.subr.mxu0 %v2408
      %2660 = vmatpush1.msra.mxu0 %v2407
      %2661 = vmatprep.subr.mxu0 0.0
      %2662 = vmatpush2.msra.mxu0 0.0
      %2663 = vmatprep.subr.mxu0 0.0
      %2664 = vmatpush2.msra.mxu0 0.0
      %2665 = vmatprep.subr.mxu0 0.0
      %2666 = vmatpush2.msra.mxu0 0.0
      %2667 = vmatprep.subr.mxu0 0.0
      %2668 = vmatpush2.msra.mxu0 0.0
      %2669 = vmatprep.subr.mxu0 0.0
      %2670 = vmatpush2.msra.mxu0 0.0
      %2671 = vmatprep.subr.mxu0 0.0
      %2672 = vmatpush2.msra.mxu0 0.0
      %2673 = vmatprep.subr.mxu0 0.0
      %2674 = vmatpush2.msra.mxu0 0.0
      %2675 = vmatprep.subr.mxu0 0.0
      %2676 = vmatpush2.msra.mxu0 0.0
      %2677 = vmatprep.subr.mxu0 0.0
      %2678 = vmatpush2.msra.mxu0 0.0
      %2679 = vmatprep.subr.mxu0 0.0
      %2680 = vmatpush2.msra.mxu0 0.0
      %2681 = vmatprep.subr.mxu0 0.0
      %2682 = vmatpush2.msra.mxu0 0.0
      %2683 = vmatprep.subr.mxu0 0.0
      %2684 = vmatpush2.msra.mxu0 0.0
      %2685 = vmatprep.subr.mxu0 0.0
      %2686 = vmatpush2.msra.mxu0 0.0
      %2687 = vmatprep.subr.mxu0 0.0
      %2688 = vmatpush2.msra.mxu0 0.0
      %2689 = vmatprep.subr.mxu0 0.0
      %2690 = vmatpush2.msra.mxu0 0.0
      %2691 = vmatprep.subr.mxu0 0.0
      %2692 = vmatpush2.msra.mxu0 0.0
      %2693 = vmatprep.mubr.f32.mxu0 0.0
      %2694 = vmatmul.mubr.f32.gmra.mxu0 %v2440
      %v2695 = vpop.f32.mrf.mxu0
      %v2696 = vadd.f32 0.0, %v2695
      %v2697 = vpop.f32.mrf.mxu0
      %v2698 = vadd.f32 0.0, %v2697
      %2699 = vmatprep.mubr.f32.mxu0 0.0
      %2700 = vmatmul.mubr.f32.gmra.mxu0 %v2443
      %v2701 = vpop.f32.mrf.mxu0
      %v2702 = vadd.f32 0.0, %v2701
      %v2703 = vpop.f32.mrf.mxu0
      %v2704 = vadd.f32 0.0, %v2703
      %2705 = vmatprep.mubr.f32.mxu0 0.0
      %2706 = vmatmul.mubr.f32.gmra.mxu0 %v2446
      %v2707 = vpop.f32.mrf.mxu0
      %v2708 = vadd.f32 0.0, %v2707
      %v2709 = vpop.f32.mrf.mxu0
      %v2710 = vadd.f32 0.0, %v2709
      %2711 = vmatprep.mubr.f32.mxu0 0.0
      %2712 = vmatmul.mubr.f32.gmra.mxu0 %v2449
      %v2713 = vpop.f32.mrf.mxu0
      %v2714 = vadd.f32 0.0, %v2713
      %v2715 = vpop.f32.mrf.mxu0
      %v2716 = vadd.f32 0.0, %v2715
      %2717 = vdwg.mxu0
      %2718 = vmatprep.subr.mxu0 0.0
      %2719 = vmatpush1.msra.mxu0 0.0
      %2720 = vmatprep.subr.mxu0 0.0
      %2721 = vmatpush1.msra.mxu0 0.0
      %2722 = vmatprep.subr.mxu0 0.0
      %2723 = vmatpush1.msra.mxu0 0.0
      %2724 = vmatprep.subr.mxu0 0.0
      %2725 = vmatpush1.msra.mxu0 0.0
      %2726 = vmatprep.subr.mxu0 0.0
      %2727 = vmatpush1.msra.mxu0 0.0
      %2728 = vmatprep.subr.mxu0 0.0
      %2729 = vmatpush1.msra.mxu0 0.0
      %2730 = vmatprep.subr.mxu0 0.0
      %2731 = vmatpush1.msra.mxu0 0.0
      %2732 = vmatprep.subr.mxu0 0.0
      %2733 = vmatpush1.msra.mxu0 0.0
      %2734 = vmatprep.subr.mxu0 0.0
      %2735 = vmatpush1.msra.mxu0 0.0
      %2736 = vmatprep.subr.mxu0 0.0
      %2737 = vmatpush1.msra.mxu0 0.0
      %2738 = vmatprep.subr.mxu0 0.0
      %2739 = vmatpush1.msra.mxu0 0.0
      %2740 = vmatprep.subr.mxu0 0.0
      %2741 = vmatpush1.msra.mxu0 0.0
      %2742 = vmatprep.subr.mxu0 0.0
      %2743 = vmatpush1.msra.mxu0 0.0
      %2744 = vmatprep.subr.mxu0 %v2434
      %2745 = vmatpush1.msra.mxu0 %v2433
      %2746 = vmatprep.subr.mxu0 %v2422
      %2747 = vmatpush1.msra.mxu0 %v2421
      %2748 = vmatprep.subr.mxu0 %v2410
      %2749 = vmatpush1.msra.mxu0 %v2409
      %2750 = vmatprep.subr.mxu0 0.0
      %2751 = vmatpush2.msra.mxu0 0.0
      %2752 = vmatprep.subr.mxu0 0.0
      %2753 = vmatpush2.msra.mxu0 0.0
      %2754 = vmatprep.subr.mxu0 0.0
      %2755 = vmatpush2.msra.mxu0 0.0
      %2756 = vmatprep.subr.mxu0 0.0
      %2757 = vmatpush2.msra.mxu0 0.0
      %2758 = vmatprep.subr.mxu0 0.0
      %2759 = vmatpush2.msra.mxu0 0.0
      %2760 = vmatprep.subr.mxu0 0.0
      %2761 = vmatpush2.msra.mxu0 0.0
      %2762 = vmatprep.subr.mxu0 0.0
      %2763 = vmatpush2.msra.mxu0 0.0
      %2764 = vmatprep.subr.mxu0 0.0
      %2765 = vmatpush2.msra.mxu0 0.0
      %2766 = vmatprep.subr.mxu0 0.0
      %2767 = vmatpush2.msra.mxu0 0.0
      %2768 = vmatprep.subr.mxu0 0.0
      %2769 = vmatpush2.msra.mxu0 0.0
      %2770 = vmatprep.subr.mxu0 0.0
      %2771 = vmatpush2.msra.mxu0 0.0
      %2772 = vmatprep.subr.mxu0 0.0
      %2773 = vmatpush2.msra.mxu0 0.0
      %2774 = vmatprep.subr.mxu0 0.0
      %2775 = vmatpush2.msra.mxu0 0.0
      %2776 = vmatprep.subr.mxu0 0.0
      %2777 = vmatpush2.msra.mxu0 0.0
      %2778 = vmatprep.subr.mxu0 0.0
      %2779 = vmatpush2.msra.mxu0 0.0
      %2780 = vmatprep.subr.mxu0 0.0
      %2781 = vmatpush2.msra.mxu0 0.0
      %2782 = vmatprep.mubr.f32.mxu0 0.0
      %2783 = vmatmul.mubr.f32.gmra.mxu0 %v2440
      %v2784 = vpop.f32.mrf.mxu0
      %v2785 = vadd.f32 0.0, %v2784
      %v2786 = vpop.f32.mrf.mxu0
      %v2787 = vadd.f32 0.0, %v2786
      %2788 = vmatprep.mubr.f32.mxu0 0.0
      %2789 = vmatmul.mubr.f32.gmra.mxu0 %v2443
      %v2790 = vpop.f32.mrf.mxu0
      %v2791 = vadd.f32 0.0, %v2790
      %v2792 = vpop.f32.mrf.mxu0
      %v2793 = vadd.f32 0.0, %v2792
      %2794 = vmatprep.mubr.f32.mxu0 0.0
      %2795 = vmatmul.mubr.f32.gmra.mxu0 %v2446
      %v2796 = vpop.f32.mrf.mxu0
      %v2797 = vadd.f32 0.0, %v2796
      %v2798 = vpop.f32.mrf.mxu0
      %v2799 = vadd.f32 0.0, %v2798
      %2800 = vmatprep.mubr.f32.mxu0 0.0
      %2801 = vmatmul.mubr.f32.gmra.mxu0 %v2449
      %v2802 = vpop.f32.mrf.mxu0
      %v2803 = vadd.f32 0.0, %v2802
      %v2804 = vpop.f32.mrf.mxu0
      %v2805 = vadd.f32 0.0, %v2804
      %2806 = vdwg.mxu0
      %2807 = vmatprep.subr.mxu0 0.0
      %2808 = vmatpush1.msra.mxu0 0.0
      %2809 = vmatprep.subr.mxu0 0.0
      %2810 = vmatpush1.msra.mxu0 0.0
      %2811 = vmatprep.subr.mxu0 0.0
      %2812 = vmatpush1.msra.mxu0 0.0
      %2813 = vmatprep.subr.mxu0 0.0
      %2814 = vmatpush1.msra.mxu0 0.0
      %2815 = vmatprep.subr.mxu0 0.0
      %2816 = vmatpush1.msra.mxu0 0.0
      %2817 = vmatprep.subr.mxu0 0.0
      %2818 = vmatpush1.msra.mxu0 0.0
      %2819 = vmatprep.subr.mxu0 0.0
      %2820 = vmatpush1.msra.mxu0 0.0
      %2821 = vmatprep.subr.mxu0 0.0
      %2822 = vmatpush1.msra.mxu0 0.0
      %2823 = vmatprep.subr.mxu0 0.0
      %2824 = vmatpush1.msra.mxu0 0.0
      %2825 = vmatprep.subr.mxu0 0.0
      %2826 = vmatpush1.msra.mxu0 0.0
      %2827 = vmatprep.subr.mxu0 0.0
      %2828 = vmatpush1.msra.mxu0 0.0
      %2829 = vmatprep.subr.mxu0 0.0
      %2830 = vmatpush1.msra.mxu0 0.0
      %2831 = vmatprep.subr.mxu0 0.0
      %2832 = vmatpush1.msra.mxu0 0.0
      %2833 = vmatprep.subr.mxu0 %v2436
      %2834 = vmatpush1.msra.mxu0 %v2435
      %2835 = vmatprep.subr.mxu0 %v2424
      %2836 = vmatpush1.msra.mxu0 %v2423
      %2837 = vmatprep.subr.mxu0 %v2412
      %2838 = vmatpush1.msra.mxu0 %v2411
      %2839 = vmatprep.subr.mxu0 0.0
      %2840 = vmatpush2.msra.mxu0 0.0
      %2841 = vmatprep.subr.mxu0 0.0
      %2842 = vmatpush2.msra.mxu0 0.0
      %2843 = vmatprep.subr.mxu0 0.0
      %2844 = vmatpush2.msra.mxu0 0.0
      %2845 = vmatprep.subr.mxu0 0.0
      %2846 = vmatpush2.msra.mxu0 0.0
      %2847 = vmatprep.subr.mxu0 0.0
      %2848 = vmatpush2.msra.mxu0 0.0
      %2849 = vmatprep.subr.mxu0 0.0
      %2850 = vmatpush2.msra.mxu0 0.0
      %2851 = vmatprep.subr.mxu0 0.0
      %2852 = vmatpush2.msra.mxu0 0.0
      %2853 = vmatprep.subr.mxu0 0.0
      %2854 = vmatpush2.msra.mxu0 0.0
      %2855 = vmatprep.subr.mxu0 0.0
      %2856 = vmatpush2.msra.mxu0 0.0
      %2857 = vmatprep.subr.mxu0 0.0
      %2858 = vmatpush2.msra.mxu0 0.0
      %2859 = vmatprep.subr.mxu0 0.0
      %2860 = vmatpush2.msra.mxu0 0.0
      %2861 = vmatprep.subr.mxu0 0.0
      %2862 = vmatpush2.msra.mxu0 0.0
      %2863 = vmatprep.subr.mxu0 0.0
      %2864 = vmatpush2.msra.mxu0 0.0
      %2865 = vmatprep.subr.mxu0 0.0
      %2866 = vmatpush2.msra.mxu0 0.0
      %2867 = vmatprep.subr.mxu0 0.0
      %2868 = vmatpush2.msra.mxu0 0.0
      %2869 = vmatprep.subr.mxu0 0.0
      %2870 = vmatpush2.msra.mxu0 0.0
      %2871 = vmatprep.mubr.f32.mxu0 0.0
      %2872 = vmatmul.mubr.f32.gmra.mxu0 %v2440
      %v2873 = vpop.f32.mrf.mxu0
      %v2874 = vadd.f32 0.0, %v2873
      %v2875 = vpop.f32.mrf.mxu0
      %v2876 = vadd.f32 0.0, %v2875
      %2877 = vmatprep.mubr.f32.mxu0 0.0
      %2878 = vmatmul.mubr.f32.gmra.mxu0 %v2443
      %v2879 = vpop.f32.mrf.mxu0
      %v2880 = vadd.f32 0.0, %v2879
      %v2881 = vpop.f32.mrf.mxu0
      %v2882 = vadd.f32 0.0, %v2881
      %2883 = vmatprep.mubr.f32.mxu0 0.0
      %2884 = vmatmul.mubr.f32.gmra.mxu0 %v2446
      %v2885 = vpop.f32.mrf.mxu0
      %v2886 = vadd.f32 0.0, %v2885
      %v2887 = vpop.f32.mrf.mxu0
      %v2888 = vadd.f32 0.0, %v2887
      %2889 = vmatprep.mubr.f32.mxu0 0.0
      %2890 = vmatmul.mubr.f32.gmra.mxu0 %v2449
      %v2891 = vpop.f32.mrf.mxu0
      %v2892 = vadd.f32 0.0, %v2891
      %v2893 = vpop.f32.mrf.mxu0
      %v2894 = vadd.f32 0.0, %v2893
      %2895 = vdwg.mxu0
      %2896 = vmatprep.subr.mxu0 0.0
      %2897 = vmatpush1.msra.mxu0 0.0
      %2898 = vmatprep.subr.mxu0 0.0
      %2899 = vmatpush1.msra.mxu0 0.0
      %2900 = vmatprep.subr.mxu0 0.0
      %2901 = vmatpush1.msra.mxu0 0.0
      %2902 = vmatprep.subr.mxu0 0.0
      %2903 = vmatpush1.msra.mxu0 0.0
      %2904 = vmatprep.subr.mxu0 0.0
      %2905 = vmatpush1.msra.mxu0 0.0
      %2906 = vmatprep.subr.mxu0 0.0
      %2907 = vmatpush1.msra.mxu0 0.0
      %2908 = vmatprep.subr.mxu0 0.0
      %2909 = vmatpush1.msra.mxu0 0.0
      %2910 = vmatprep.subr.mxu0 0.0
      %2911 = vmatpush1.msra.mxu0 0.0
      %2912 = vmatprep.subr.mxu0 0.0
      %2913 = vmatpush1.msra.mxu0 0.0
      %2914 = vmatprep.subr.mxu0 0.0
      %2915 = vmatpush1.msra.mxu0 0.0
      %2916 = vmatprep.subr.mxu0 0.0
      %2917 = vmatpush1.msra.mxu0 0.0
      %2918 = vmatprep.subr.mxu0 0.0
      %2919 = vmatpush1.msra.mxu0 0.0
      %2920 = vmatprep.subr.mxu0 0.0
      %2921 = vmatpush1.msra.mxu0 0.0
      %2922 = vmatprep.subr.mxu0 %v2438
      %2923 = vmatpush1.msra.mxu0 %v2437
      %2924 = vmatprep.subr.mxu0 %v2426
      %2925 = vmatpush1.msra.mxu0 %v2425
      %2926 = vmatprep.subr.mxu0 %v2414
      %2927 = vmatpush1.msra.mxu0 %v2413
      %2928 = vmatprep.subr.mxu0 0.0
      %2929 = vmatpush2.msra.mxu0 0.0
      %2930 = vmatprep.subr.mxu0 0.0
      %2931 = vmatpush2.msra.mxu0 0.0
      %2932 = vmatprep.subr.mxu0 0.0
      %2933 = vmatpush2.msra.mxu0 0.0
      %2934 = vmatprep.subr.mxu0 0.0
      %2935 = vmatpush2.msra.mxu0 0.0
      %2936 = vmatprep.subr.mxu0 0.0
      %2937 = vmatpush2.msra.mxu0 0.0
      %2938 = vmatprep.subr.mxu0 0.0
      %2939 = vmatpush2.msra.mxu0 0.0
      %2940 = vmatprep.subr.mxu0 0.0
      %2941 = vmatpush2.msra.mxu0 0.0
      %2942 = vmatprep.subr.mxu0 0.0
      %2943 = vmatpush2.msra.mxu0 0.0
      %2944 = vmatprep.subr.mxu0 0.0
      %2945 = vmatpush2.msra.mxu0 0.0
      %2946 = vmatprep.subr.mxu0 0.0
      %2947 = vmatpush2.msra.mxu0 0.0
      %2948 = vmatprep.subr.mxu0 0.0
      %2949 = vmatpush2.msra.mxu0 0.0
      %2950 = vmatprep.subr.mxu0 0.0
      %2951 = vmatpush2.msra.mxu0 0.0
      %2952 = vmatprep.subr.mxu0 0.0
      %2953 = vmatpush2.msra.mxu0 0.0
      %2954 = vmatprep.subr.mxu0 0.0
      %2955 = vmatpush2.msra.mxu0 0.0
      %2956 = vmatprep.subr.mxu0 0.0
      %2957 = vmatpush2.msra.mxu0 0.0
      %2958 = vmatprep.subr.mxu0 0.0
      %2959 = vmatpush2.msra.mxu0 0.0
      %2960 = vmatprep.mubr.f32.mxu0 0.0
      %2961 = vmatmul.mubr.f32.gmra.mxu0 %v2440
      %v2962 = vpop.f32.mrf.mxu0
      %v2963 = vadd.f32 0.0, %v2962
      %v2964 = vpop.f32.mrf.mxu0
      %v2965 = vadd.f32 0.0, %v2964
      %2966 = vmatprep.mubr.f32.mxu0 0.0
      %2967 = vmatmul.mubr.f32.gmra.mxu0 %v2443
      %v2968 = vpop.f32.mrf.mxu0
      %v2969 = vadd.f32 0.0, %v2968
      %v2970 = vpop.f32.mrf.mxu0
      %v2971 = vadd.f32 0.0, %v2970
      %2972 = vmatprep.mubr.f32.mxu0 0.0
      %2973 = vmatmul.mubr.f32.gmra.mxu0 %v2446
      %v2974 = vpop.f32.mrf.mxu0
      %v2975 = vadd.f32 0.0, %v2974
      %v2976 = vpop.f32.mrf.mxu0
      %v2977 = vadd.f32 0.0, %v2976
      %2978 = vmatprep.mubr.f32.mxu0 0.0
      %2979 = vmatmul.mubr.f32.gmra.mxu0 %v2449
      %v2980 = vpop.f32.mrf.mxu0
      %v2981 = vadd.f32 0.0, %v2980
      %v2982 = vpop.f32.mrf.mxu0
      %v2983 = vadd.f32 0.0, %v2982
      %2984 = vdwg.mxu0
      %2985 = vrot.lane.b32.xlu0 %v2518, 20
      %v2986 = vpop.permute.xlu0 %2985
      %v2987 = vsel %vm1215, %v2986, %v2965
      %2988 = vrot.lane.b32.xlu0 %v2520, 20
      %v2989 = vpop.permute.xlu0 %2988
      %2990 = vrot.lane.b32.xlu0 %v2607, 20
      %v2991 = vpop.permute.xlu0 %2990
      %2992 = vrot.lane.b32.xlu0 %v2609, 20
      %v2993 = vpop.permute.xlu0 %2992
      %2994 = vrot.lane.b32.xlu0 %v2696, 20
      %v2995 = vpop.permute.xlu0 %2994
      %2996 = vrot.lane.b32.xlu0 %v2698, 20
      %v2997 = vpop.permute.xlu0 %2996
      %2998 = vrot.lane.b32.xlu0 %v2785, 20
      %v2999 = vpop.permute.xlu0 %2998
      %3000 = vrot.lane.b32.xlu0 %v2787, 20
      %v3001 = vpop.permute.xlu0 %3000
      %3002 = vrot.lane.b32.xlu0 %v2874, 20
      %v3003 = vpop.permute.xlu0 %3002
      %3004 = vrot.lane.b32.xlu0 %v2876, 20
      %v3005 = vpop.permute.xlu0 %3004
      %3006 = vrot.lane.b32.xlu0 %v2963, 20
      %v3007 = vpop.permute.xlu0 %3006
      %3008 = vrot.lane.b32.xlu0 %v2987, 20
      %v3009 = vpop.permute.xlu0 %3008
      %v3010 = vsel %vm1215, %v2989, %v2986
      %v3011 = vsel %vm1215, %v2991, %v2989
      %v3012 = vsel %vm1215, %v2993, %v2991
      %v3013 = vsel %vm1215, %v2995, %v2993
      %v3014 = vsel %vm1215, %v2997, %v2995
      %v3015 = vsel %vm1215, %v2999, %v2997
      %v3016 = vsel %vm1215, %v3001, %v2999
      %v3017 = vsel %vm1215, %v3003, %v3001
      %v3018 = vsel %vm1215, %v3005, %v3003
      %v3019 = vsel %vm1215, %v3007, %v3005
      %v3020 = vsel %vm1215, %v3009, %v3007
      %3034 = vrot.lane.b32.xlu0 %v2963, 14
      %v3035 = vpop.permute.xlu0 %3034
      %3036 = vrot.lane.b32.xlu0 %v2987, 14
      %v3037 = vpop.permute.xlu0 %3036
      %3038 = vrot.lane.b32.xlu0 %v3010, 14
      %v3039 = vpop.permute.xlu0 %3038
      %3040 = vrot.lane.b32.xlu0 %v3011, 14
      %v3041 = vpop.permute.xlu0 %3040
      %3042 = vrot.lane.b32.xlu0 %v3012, 14
      %v3043 = vpop.permute.xlu0 %3042
      %3044 = vrot.lane.b32.xlu0 %v3013, 14
      %v3045 = vpop.permute.xlu0 %3044
      %3046 = vrot.lane.b32.xlu0 %v3014, 14
      %v3047 = vpop.permute.xlu0 %3046
      %3048 = vrot.lane.b32.xlu0 %v3015, 14
      %v3049 = vpop.permute.xlu0 %3048
      %3050 = vrot.lane.b32.xlu0 %v3016, 14
      %v3051 = vpop.permute.xlu0 %3050
      %3052 = vrot.lane.b32.xlu0 %v3017, 14
      %v3053 = vpop.permute.xlu0 %3052
      %3054 = vrot.lane.b32.xlu0 %v3018, 14
      %v3055 = vpop.permute.xlu0 %3054
      %3056 = vrot.lane.b32.xlu0 %v3019, 14
      %v3057 = vpop.permute.xlu0 %3056
      %3058 = vrot.lane.b32.xlu0 %v3020, 14
      %v3059 = vpop.permute.xlu0 %3058
      %v3060 = vsel %vm2026, %v3035, %v3037
      %v3061 = vsel %vm2026, %v3037, %v3039
      %v3062 = vsel %vm2026, %v3039, %v3041
      %v3063 = vsel %vm2026, %v3041, %v3043
      %v3064 = vsel %vm2026, %v3043, %v3045
      %v3065 = vsel %vm2026, %v3045, %v3047
      %v3066 = vsel %vm2026, %v3047, %v3049
      %v3067 = vsel %vm2026, %v3049, %v3051
      %v3068 = vsel %vm2026, %v3051, %v3053
      %v3069 = vsel %vm2026, %v3053, %v3055
      %v3070 = vsel %vm2026, %v3055, %v3057
      %v3071 = vsel %vm2026, %v3057, %v3059
      %v3084 = vadd.f32 %v2524, %v3060
      %v3085 = vadd.f32 %v2526, %v3061
      %v3086 = vadd.f32 %v2613, %v3062
      %v3087 = vadd.f32 %v2615, %v3063
      %v3088 = vadd.f32 %v2702, %v3064
      %v3089 = vadd.f32 %v2704, %v3065
      %v3090 = vadd.f32 %v2791, %v3066
      %v3091 = vadd.f32 %v2793, %v3067
      %v3092 = vadd.f32 %v2880, %v3068
      %v3093 = vadd.f32 %v2882, %v3069
      %v3094 = vadd.f32 %v2969, %v3070
      %v3095 = vadd.f32 %v2971, %v3071
      %3096 = vrot.lane.b32.xlu0 %v2530, 20
      %v3097 = vpop.permute.xlu0 %3096
      %v3098 = vsel %vm1215, %v3097, %v2977
      %3111 = vrot.lane.b32.xlu0 %v2530, 94
      %v3112 = vpop.permute.xlu0 %3111
      %3113 = vrot.lane.b32.xlu0 %v2532, 94
      %v3114 = vpop.permute.xlu0 %3113
      %3115 = vrot.lane.b32.xlu0 %v2619, 94
      %v3116 = vpop.permute.xlu0 %3115
      %3117 = vrot.lane.b32.xlu0 %v2621, 94
      %v3118 = vpop.permute.xlu0 %3117
      %3119 = vrot.lane.b32.xlu0 %v2708, 94
      %v3120 = vpop.permute.xlu0 %3119
      %3121 = vrot.lane.b32.xlu0 %v2710, 94
      %v3122 = vpop.permute.xlu0 %3121
      %3123 = vrot.lane.b32.xlu0 %v2797, 94
      %v3124 = vpop.permute.xlu0 %3123
      %3125 = vrot.lane.b32.xlu0 %v2799, 94
      %v3126 = vpop.permute.xlu0 %3125
      %3127 = vrot.lane.b32.xlu0 %v2886, 94
      %v3128 = vpop.permute.xlu0 %3127
      %3129 = vrot.lane.b32.xlu0 %v2888, 94
      %v3130 = vpop.permute.xlu0 %3129
      %3131 = vrot.lane.b32.xlu0 %v2975, 94
      %v3132 = vpop.permute.xlu0 %3131
      %3133 = vrot.lane.b32.xlu0 %v3098, 94
      %v3134 = vpop.permute.xlu0 %3133
      %v3135 = vsel %vm2102, %v3112, %v3114
      %v3136 = vsel %vm2102, %v3114, %v3116
      %v3137 = vsel %vm2102, %v3116, %v3118
      %v3138 = vsel %vm2102, %v3118, %v3120
      %v3139 = vsel %vm2102, %v3120, %v3122
      %v3140 = vsel %vm2102, %v3122, %v3124
      %v3141 = vsel %vm2102, %v3124, %v3126
      %v3142 = vsel %vm2102, %v3126, %v3128
      %v3143 = vsel %vm2102, %v3128, %v3130
      %v3144 = vsel %vm2102, %v3130, %v3132
      %v3145 = vsel %vm2102, %v3132, %v3134
      %v3158 = vadd.f32 %v3084, %v3135
      %v3159 = vadd.f32 %v3085, %v3136
      %v3160 = vadd.f32 %v3086, %v3137
      %v3161 = vadd.f32 %v3087, %v3138
      %v3162 = vadd.f32 %v3088, %v3139
      %v3163 = vadd.f32 %v3089, %v3140
      %v3164 = vadd.f32 %v3090, %v3141
      %v3165 = vadd.f32 %v3091, %v3142
      %v3166 = vadd.f32 %v3092, %v3143
      %v3167 = vadd.f32 %v3093, %v3144
      %v3168 = vadd.f32 %v3094, %v3145
      %v3169 = vadd.f32 %v3095, %v3134
      %v3170 = vld [vmem:[%s9] sm:$0xff]
      %3172 = vset.pattern.permute.xlu0 0
      %3173 = vperm.xlu0 %3172, %v3170
      %v3174 = vpop.permute.xlu0 %3173
      %v3176 = vadd.f32 %v3158, %v3174
      %v3177 = vadd.f32 %v3159, %v3174
      %v3178 = vadd.f32 %v3160, %v3174
      %v3179 = vadd.f32 %v3161, %v3174
      %v3180 = vadd.f32 %v3162, %v3174
      %v3181 = vadd.f32 %v3163, %v3174
      %v3182 = vadd.f32 %v3164, %v3174
      %v3183 = vadd.f32 %v3165, %v3174
      %v3184 = vadd.f32 %v3166, %v3174
      %v3185 = vadd.f32 %v3167, %v3174
      %v3186 = vadd.f32 %v3168, %v3174
      %v3187 = vadd.f32 %v3169, %v3174
      %v3188 = vld [vmem:[%s10] sm:$0xff]
      %vm3189 = vcmp.gt.f32.partialorder %v3176, 0.0
      %vm3190 = vcmp.gt.f32.partialorder %v3177, 0.0
      %vm3191 = vcmp.gt.f32.partialorder %v3178, 0.0
      %vm3192 = vcmp.gt.f32.partialorder %v3179, 0.0
      %vm3193 = vcmp.gt.f32.partialorder %v3180, 0.0
      %vm3194 = vcmp.gt.f32.partialorder %v3181, 0.0
      %vm3195 = vcmp.gt.f32.partialorder %v3182, 0.0
      %vm3196 = vcmp.gt.f32.partialorder %v3183, 0.0
      %vm3197 = vcmp.gt.f32.partialorder %v3184, 0.0
      %vm3198 = vcmp.gt.f32.partialorder %v3185, 0.0
      %vm3199 = vcmp.gt.f32.partialorder %v3186, 0.0
      %vm3200 = vcmp.gt.f32.partialorder %v3187, 0.0
      %3202 = vset.pattern.permute.xlu0 0
      %3203 = vperm.xlu0 %3202, %v3188
      %v3204 = vpop.permute.xlu0 %3203
      %v3206 = vmul.f32 %v3204, %v3176
      %v3207 = vmul.f32 %v3204, %v3177
      %v3208 = vmul.f32 %v3204, %v3178
      %v3209 = vmul.f32 %v3204, %v3179
      %v3210 = vmul.f32 %v3204, %v3180
      %v3211 = vmul.f32 %v3204, %v3181
      %v3212 = vmul.f32 %v3204, %v3182
      %v3213 = vmul.f32 %v3204, %v3183
      %v3214 = vmul.f32 %v3204, %v3184
      %v3215 = vmul.f32 %v3204, %v3185
      %v3216 = vmul.f32 %v3204, %v3186
      %v3217 = vmul.f32 %v3204, %v3187
      %v3218 = vsel %vm3189, %v3176, %v3206
      %v3219 = vsel %vm3190, %v3177, %v3207
      %v3220 = vsel %vm3191, %v3178, %v3208
      %v3221 = vsel %vm3192, %v3179, %v3209
      %v3222 = vsel %vm3193, %v3180, %v3210
      %v3223 = vsel %vm3194, %v3181, %v3211
      %v3224 = vsel %vm3195, %v3182, %v3212
      %v3225 = vsel %vm3196, %v3183, %v3213
      %v3226 = vsel %vm3197, %v3184, %v3214
      %v3227 = vsel %vm3198, %v3185, %v3215
      %v3228 = vsel %vm3199, %v3186, %v3216
      %v3229 = vsel %vm3200, %v3187, %v3217
      %v3230 = vld [vmem:[%s11] sm:$0xff]
      %3232 = vset.pattern.permute.xlu0 0
      %3233 = vperm.xlu0 %3232, %v3230
      %v3234 = vpop.permute.xlu0 %3233
      %v3236 = vadd.f32 %v2536, %v3234
      %v3237 = vadd.f32 %v2538, %v3234
      %v3238 = vadd.f32 %v2625, %v3234
      %v3239 = vadd.f32 %v2627, %v3234
      %v3240 = vadd.f32 %v2714, %v3234
      %v3241 = vadd.f32 %v2716, %v3234
      %v3242 = vadd.f32 %v2803, %v3234
      %v3243 = vadd.f32 %v2805, %v3234
      %v3244 = vadd.f32 %v2892, %v3234
      %v3245 = vadd.f32 %v2894, %v3234
      %v3246 = vadd.f32 %v2981, %v3234
      %v3247 = vadd.f32 %v2983, %v3234
      %v3248 = vsub.f32 0.0, %v3236
      %v3249 = vsub.f32 0.0, %v3237
      %v3250 = vsub.f32 0.0, %v3238
      %v3251 = vsub.f32 0.0, %v3239
      %v3252 = vsub.f32 0.0, %v3240
      %v3253 = vsub.f32 0.0, %v3241
      %v3254 = vsub.f32 0.0, %v3242
      %v3255 = vsub.f32 0.0, %v3243
      %v3256 = vsub.f32 0.0, %v3244
      %v3257 = vsub.f32 0.0, %v3245
      %v3258 = vsub.f32 0.0, %v3246
      %v3259 = vsub.f32 0.0, %v3247
      %v3260 = vmul.f32 %v3248, 1.442695
      %v3261 = vpow.pop %v3260
      %v3262 = vmul.f32 %v3249, 1.442695
      %v3263 = vpow.pop %v3262
      %v3264 = vmul.f32 %v3250, 1.442695
      %v3265 = vpow.pop %v3264
      %v3266 = vmul.f32 %v3251, 1.442695
      %v3267 = vpow.pop %v3266
      %v3268 = vmul.f32 %v3252, 1.442695
      %v3269 = vpow.pop %v3268
      %v3270 = vmul.f32 %v3253, 1.442695
      %v3271 = vpow.pop %v3270
      %v3272 = vmul.f32 %v3254, 1.442695
      %v3273 = vpow.pop %v3272
      %v3274 = vmul.f32 %v3255, 1.442695
      %v3275 = vpow.pop %v3274
      %v3276 = vmul.f32 %v3256, 1.442695
      %v3277 = vpow.pop %v3276
      %v3278 = vmul.f32 %v3257, 1.442695
      %v3279 = vpow.pop %v3278
      %v3280 = vmul.f32 %v3258, 1.442695
      %v3281 = vpow.pop %v3280
      %v3282 = vmul.f32 %v3259, 1.442695
      %v3283 = vpow.pop %v3282
      %v3284 = vadd.f32 %v3261, 1.0
      %v3285 = vadd.f32 %v3263, 1.0
      %v3286 = vadd.f32 %v3265, 1.0
      %v3287 = vadd.f32 %v3267, 1.0
      %v3288 = vadd.f32 %v3269, 1.0
      %v3289 = vadd.f32 %v3271, 1.0
      %v3290 = vadd.f32 %v3273, 1.0
      %v3291 = vadd.f32 %v3275, 1.0
      %v3292 = vadd.f32 %v3277, 1.0
      %v3293 = vadd.f32 %v3279, 1.0
      %v3294 = vadd.f32 %v3281, 1.0
      %v3295 = vadd.f32 %v3283, 1.0
      %v3296 = vrcp.pop %v3284
      %v3297 = vmul.f32 1.0, %v3296
      %v3298 = vrcp.pop %v3285
      %v3299 = vmul.f32 1.0, %v3298
      %v3300 = vrcp.pop %v3286
      %v3301 = vmul.f32 1.0, %v3300
      %v3302 = vrcp.pop %v3287
      %v3303 = vmul.f32 1.0, %v3302
      %v3304 = vrcp.pop %v3288
      %v3305 = vmul.f32 1.0, %v3304
      %v3306 = vrcp.pop %v3289
      %v3307 = vmul.f32 1.0, %v3306
      %v3308 = vrcp.pop %v3290
      %v3309 = vmul.f32 1.0, %v3308
      %v3310 = vrcp.pop %v3291
      %v3311 = vmul.f32 1.0, %v3310
      %v3312 = vrcp.pop %v3292
      %v3313 = vmul.f32 1.0, %v3312
      %v3314 = vrcp.pop %v3293
      %v3315 = vmul.f32 1.0, %v3314
      %v3316 = vrcp.pop %v3294
      %v3317 = vmul.f32 1.0, %v3316
      %v3318 = vrcp.pop %v3295
      %v3319 = vmul.f32 1.0, %v3318
      %v3320 = vld [vmem:[#allocation3 + $0x60] sm:$0xff]
      %v3321 = vld [vmem:[#allocation3 + $0x68] sm:$0xff]
      %v3322 = vld [vmem:[#allocation3 + $0x70] sm:$0xff]
      %v3323 = vld [vmem:[#allocation3 + $0x78] sm:$0xff]
      %v3324 = vld [vmem:[#allocation3 + $0x80] sm:$0xff]
      %v3325 = vld [vmem:[#allocation3 + $0x88] sm:$0xff]
      %v3326 = vld [vmem:[#allocation3 + $0x90] sm:$0xff]
      %v3327 = vld [vmem:[#allocation3 + $0x98] sm:$0xff]
      %v3328 = vld [vmem:[#allocation3 + $0xa0] sm:$0xff]
      %v3329 = vld [vmem:[#allocation3 + $0xa8] sm:$0xff]
      %v3330 = vld [vmem:[#allocation3 + $0xb0] sm:$0xff]
      %v3331 = vld [vmem:[#allocation3 + $0xb8] sm:$0xff]
      %v3332 = vmul.f32 %v3218, %v3320
      %v3333 = vmul.f32 %v3219, %v3321
      %v3334 = vmul.f32 %v3220, %v3322
      %v3335 = vmul.f32 %v3221, %v3323
      %v3336 = vmul.f32 %v3222, %v3324
      %v3337 = vmul.f32 %v3223, %v3325
      %v3338 = vmul.f32 %v3224, %v3326
      %v3339 = vmul.f32 %v3225, %v3327
      %v3340 = vmul.f32 %v3226, %v3328
      %v3341 = vmul.f32 %v3227, %v3329
      %v3342 = vmul.f32 %v3228, %v3330
      %v3343 = vmul.f32 %v3229, %v3331
      %v3344 = vld [vmem:[#allocation3] sm:$0xff]
      %v3345 = vld [vmem:[#allocation3 + $0x8] sm:$0xff]
      %v3346 = vld [vmem:[#allocation3 + $0x10] sm:$0xff]
      %v3347 = vld [vmem:[#allocation3 + $0x18] sm:$0xff]
      %v3348 = vld [vmem:[#allocation3 + $0x20] sm:$0xff]
      %v3349 = vld [vmem:[#allocation3 + $0x28] sm:$0xff]
      %v3350 = vld [vmem:[#allocation3 + $0x30] sm:$0xff]
      %v3351 = vld [vmem:[#allocation3 + $0x38] sm:$0xff]
      %v3352 = vld [vmem:[#allocation3 + $0x40] sm:$0xff]
      %v3353 = vld [vmem:[#allocation3 + $0x48] sm:$0xff]
      %v3354 = vld [vmem:[#allocation3 + $0x50] sm:$0xff]
      %v3355 = vld [vmem:[#allocation3 + $0x58] sm:$0xff]
      %v3356 = vmul.f32 %v3297, %v3344
      %v3357 = vmul.f32 %v3299, %v3345
      %v3358 = vmul.f32 %v3301, %v3346
      %v3359 = vmul.f32 %v3303, %v3347
      %v3360 = vmul.f32 %v3305, %v3348
      %v3361 = vmul.f32 %v3307, %v3349
      %v3362 = vmul.f32 %v3309, %v3350
      %v3363 = vmul.f32 %v3311, %v3351
      %v3364 = vmul.f32 %v3313, %v3352
      %v3365 = vmul.f32 %v3315, %v3353
      %v3366 = vmul.f32 %v3317, %v3354
      %v3367 = vmul.f32 %v3319, %v3355
      %v3368 = vld [vmem:[%s12] sm:$0xff]
      %v3369 = vld [vmem:[%s12 + $0x8] sm:$0xff]
      %v3370 = vld [vmem:[%s12 + $0x10] sm:$0xff]
      %3371 = vrot.lane.b32.xlu0 %v3332, 20
      %v3372 = vpop.permute.xlu0 %3371
      %v3373 = vsel %vm1215, %v3372, %v3343
      %3374 = vrot.lane.b32.xlu0 %v3333, 20
      %v3375 = vpop.permute.xlu0 %3374
      %3376 = vrot.lane.b32.xlu0 %v3334, 20
      %v3377 = vpop.permute.xlu0 %3376
      %3378 = vrot.lane.b32.xlu0 %v3335, 20
      %v3379 = vpop.permute.xlu0 %3378
      %3380 = vrot.lane.b32.xlu0 %v3336, 20
      %v3381 = vpop.permute.xlu0 %3380
      %3382 = vrot.lane.b32.xlu0 %v3337, 20
      %v3383 = vpop.permute.xlu0 %3382
      %3384 = vrot.lane.b32.xlu0 %v3338, 20
      %v3385 = vpop.permute.xlu0 %3384
      %3386 = vrot.lane.b32.xlu0 %v3339, 20
      %v3387 = vpop.permute.xlu0 %3386
      %3388 = vrot.lane.b32.xlu0 %v3340, 20
      %v3389 = vpop.permute.xlu0 %3388
      %3390 = vrot.lane.b32.xlu0 %v3341, 20
      %v3391 = vpop.permute.xlu0 %3390
      %3392 = vrot.lane.b32.xlu0 %v3342, 20
      %v3393 = vpop.permute.xlu0 %3392
      %3394 = vrot.lane.b32.xlu0 %v3373, 20
      %v3395 = vpop.permute.xlu0 %3394
      %v3396 = vsel %vm1215, %v3375, %v3372
      %v3397 = vsel %vm1215, %v3377, %v3375
      %v3398 = vsel %vm1215, %v3379, %v3377
      %v3399 = vsel %vm1215, %v3381, %v3379
      %v3400 = vsel %vm1215, %v3383, %v3381
      %v3401 = vsel %vm1215, %v3385, %v3383
      %v3402 = vsel %vm1215, %v3387, %v3385
      %v3403 = vsel %vm1215, %v3389, %v3387
      %v3404 = vsel %vm1215, %v3391, %v3389
      %v3405 = vsel %vm1215, %v3393, %v3391
      %v3406 = vsel %vm1215, %v3395, %v3393
      %3419 = vrot.lane.b32.xlu0 %v3373, 109
      %v3420 = vpop.permute.xlu0 %3419
      %3421 = vrot.lane.b32.xlu0 %v3396, 109
      %v3422 = vpop.permute.xlu0 %3421
      %3423 = vrot.lane.b32.xlu0 %v3397, 109
      %v3424 = vpop.permute.xlu0 %3423
      %3425 = vrot.lane.b32.xlu0 %v3398, 109
      %v3426 = vpop.permute.xlu0 %3425
      %3427 = vrot.lane.b32.xlu0 %v3399, 109
      %v3428 = vpop.permute.xlu0 %3427
      %3429 = vrot.lane.b32.xlu0 %v3400, 109
      %v3430 = vpop.permute.xlu0 %3429
      %3431 = vrot.lane.b32.xlu0 %v3401, 109
      %v3432 = vpop.permute.xlu0 %3431
      %3433 = vrot.lane.b32.xlu0 %v3402, 109
      %v3434 = vpop.permute.xlu0 %3433
      %3435 = vrot.lane.b32.xlu0 %v3403, 109
      %v3436 = vpop.permute.xlu0 %3435
      %3437 = vrot.lane.b32.xlu0 %v3404, 109
      %v3438 = vpop.permute.xlu0 %3437
      %3439 = vrot.lane.b32.xlu0 %v3405, 109
      %v3440 = vpop.permute.xlu0 %3439
      %3441 = vrot.lane.b32.xlu0 %v3406, 109
      %v3442 = vpop.permute.xlu0 %3441
      %v3443 = vsel %vm1288, %v3420, %v3422
      %v3444 = vsel %vm1288, %v3422, %v3424
      %v3445 = vsel %vm1288, %v3424, %v3426
      %v3446 = vsel %vm1288, %v3426, %v3428
      %v3447 = vsel %vm1288, %v3428, %v3430
      %v3448 = vsel %vm1288, %v3430, %v3432
      %v3449 = vsel %vm1288, %v3432, %v3434
      %v3450 = vsel %vm1288, %v3434, %v3436
      %v3451 = vsel %vm1288, %v3436, %v3438
      %v3452 = vsel %vm1288, %v3438, %v3440
      %v3453 = vsel %vm1288, %v3440, %v3442
      %3466 = vst [vmem:[#allocation2] sm:$0xff] %v3443
      %3467 = vst [vmem:[#allocation2 + $0x8] sm:$0xff] %v3444
      %3468 = vst [vmem:[#allocation2 + $0x10] sm:$0xff] %v3445
      %3469 = vst [vmem:[#allocation2 + $0x18] sm:$0xff] %v3446
      %3470 = vst [vmem:[#allocation2 + $0x20] sm:$0xff] %v3447
      %3471 = vst [vmem:[#allocation2 + $0x28] sm:$0xff] %v3448
      %3472 = vst [vmem:[#allocation2 + $0x30] sm:$0xff] %v3449
      %3473 = vst [vmem:[#allocation2 + $0x38] sm:$0xff] %v3450
      %3474 = vst [vmem:[#allocation2 + $0x40] sm:$0xff] %v3451
      %3475 = vst [vmem:[#allocation2 + $0x48] sm:$0xff] %v3452
      %3476 = vst [vmem:[#allocation2 + $0x50] sm:$0xff] %v3453
      %3477 = vst.msk [vmem:[#allocation2 + $0x58] sm:$0xff] %vm1186, %v3442
      %3478 = vrot.lane.b32.xlu0 %v3356, 20
      %v3479 = vpop.permute.xlu0 %3478
      %v3480 = vsel %vm1215, %v3479, %v3367
      %3481 = vrot.lane.b32.xlu0 %v3357, 20
      %v3482 = vpop.permute.xlu0 %3481
      %3483 = vrot.lane.b32.xlu0 %v3358, 20
      %v3484 = vpop.permute.xlu0 %3483
      %3485 = vrot.lane.b32.xlu0 %v3359, 20
      %v3486 = vpop.permute.xlu0 %3485
      %3487 = vrot.lane.b32.xlu0 %v3360, 20
      %v3488 = vpop.permute.xlu0 %3487
      %3489 = vrot.lane.b32.xlu0 %v3361, 20
      %v3490 = vpop.permute.xlu0 %3489
      %3491 = vrot.lane.b32.xlu0 %v3362, 20
      %v3492 = vpop.permute.xlu0 %3491
      %3493 = vrot.lane.b32.xlu0 %v3363, 20
      %v3494 = vpop.permute.xlu0 %3493
      %3495 = vrot.lane.b32.xlu0 %v3364, 20
      %v3496 = vpop.permute.xlu0 %3495
      %3497 = vrot.lane.b32.xlu0 %v3365, 20
      %v3498 = vpop.permute.xlu0 %3497
      %3499 = vrot.lane.b32.xlu0 %v3366, 20
      %v3500 = vpop.permute.xlu0 %3499
      %3501 = vrot.lane.b32.xlu0 %v3480, 20
      %v3502 = vpop.permute.xlu0 %3501
      %v3503 = vsel %vm1215, %v3482, %v3479
      %v3504 = vsel %vm1215, %v3484, %v3482
      %v3505 = vsel %vm1215, %v3486, %v3484
      %v3506 = vsel %vm1215, %v3488, %v3486
      %v3507 = vsel %vm1215, %v3490, %v3488
      %v3508 = vsel %vm1215, %v3492, %v3490
      %v3509 = vsel %vm1215, %v3494, %v3492
      %v3510 = vsel %vm1215, %v3496, %v3494
      %v3511 = vsel %vm1215, %v3498, %v3496
      %v3512 = vsel %vm1215, %v3500, %v3498
      %v3513 = vsel %vm1215, %v3502, %v3500
      %3526 = vrot.lane.b32.xlu0 %v3480, 109
      %v3527 = vpop.permute.xlu0 %3526
      %3528 = vrot.lane.b32.xlu0 %v3503, 109
      %v3529 = vpop.permute.xlu0 %3528
      %3530 = vrot.lane.b32.xlu0 %v3504, 109
      %v3531 = vpop.permute.xlu0 %3530
      %3532 = vrot.lane.b32.xlu0 %v3505, 109
      %v3533 = vpop.permute.xlu0 %3532
      %3534 = vrot.lane.b32.xlu0 %v3506, 109
      %v3535 = vpop.permute.xlu0 %3534
      %3536 = vrot.lane.b32.xlu0 %v3507, 109
      %v3537 = vpop.permute.xlu0 %3536
      %3538 = vrot.lane.b32.xlu0 %v3508, 109
      %v3539 = vpop.permute.xlu0 %3538
      %3540 = vrot.lane.b32.xlu0 %v3509, 109
      %v3541 = vpop.permute.xlu0 %3540
      %3542 = vrot.lane.b32.xlu0 %v3510, 109
      %v3543 = vpop.permute.xlu0 %3542
      %3544 = vrot.lane.b32.xlu0 %v3511, 109
      %v3545 = vpop.permute.xlu0 %3544
      %3546 = vrot.lane.b32.xlu0 %v3512, 109
      %v3547 = vpop.permute.xlu0 %3546
      %3548 = vrot.lane.b32.xlu0 %v3513, 109
      %v3549 = vpop.permute.xlu0 %3548
      %v3550 = vsel %vm1288, %v3527, %v3529
      %v3551 = vsel %vm1288, %v3529, %v3531
      %v3552 = vsel %vm1288, %v3531, %v3533
      %v3553 = vsel %vm1288, %v3533, %v3535
      %v3554 = vsel %vm1288, %v3535, %v3537
      %v3555 = vsel %vm1288, %v3537, %v3539
      %v3556 = vsel %vm1288, %v3539, %v3541
      %v3557 = vsel %vm1288, %v3541, %v3543
      %v3558 = vsel %vm1288, %v3543, %v3545
      %v3559 = vsel %vm1288, %v3545, %v3547
      %v3560 = vsel %vm1288, %v3547, %v3549
      %3573 = vst [vmem:[#allocation2 + $0x60] sm:$0xff] %v3550
      %3574 = vst [vmem:[#allocation2 + $0x68] sm:$0xff] %v3551
      %3575 = vst [vmem:[#allocation2 + $0x70] sm:$0xff] %v3552
      %3576 = vst [vmem:[#allocation2 + $0x78] sm:$0xff] %v3553
      %3577 = vst [vmem:[#allocation2 + $0x80] sm:$0xff] %v3554
      %3578 = vst [vmem:[#allocation2 + $0x88] sm:$0xff] %v3555
      %3579 = vst [vmem:[#allocation2 + $0x90] sm:$0xff] %v3556
      %3580 = vst [vmem:[#allocation2 + $0x98] sm:$0xff] %v3557
      %3581 = vst [vmem:[#allocation2 + $0xa0] sm:$0xff] %v3558
      %3582 = vst [vmem:[#allocation2 + $0xa8] sm:$0xff] %v3559
      %3583 = vst [vmem:[#allocation2 + $0xb0] sm:$0xff] %v3560
      %3584 = vst.msk [vmem:[#allocation2 + $0xb8] sm:$0xff] %vm1186, %v3549
      %3585 = vst [vmem:[#allocation2 + $0xc0] sm:$0xff] %v3332
      %3586 = vst [vmem:[#allocation2 + $0xc8] sm:$0xff] %v3333
      %3587 = vst [vmem:[#allocation2 + $0xd0] sm:$0xff] %v3334
      %3588 = vst [vmem:[#allocation2 + $0xd8] sm:$0xff] %v3335
      %3589 = vst [vmem:[#allocation2 + $0xe0] sm:$0xff] %v3336
      %3590 = vst [vmem:[#allocation2 + $0xe8] sm:$0xff] %v3337
      %3591 = vst [vmem:[#allocation2 + $0xf0] sm:$0xff] %v3338
      %3592 = vst [vmem:[#allocation2 + $0xf8] sm:$0xff] %v3339
      %3593 = vst [vmem:[#allocation2 + $0x100] sm:$0xff] %v3340
      %3594 = vst [vmem:[#allocation2 + $0x108] sm:$0xff] %v3341
      %3595 = vst [vmem:[#allocation2 + $0x110] sm:$0xff] %v3342
      %3596 = vst.msk [vmem:[#allocation2 + $0x118] sm:$0xff] %vm1186, %v3343
      %3597 = vst [vmem:[#allocation2 + $0x120] sm:$0xff] %v3356
      %3598 = vst [vmem:[#allocation2 + $0x128] sm:$0xff] %v3357
      %3599 = vst [vmem:[#allocation2 + $0x130] sm:$0xff] %v3358
      %3600 = vst [vmem:[#allocation2 + $0x138] sm:$0xff] %v3359
      %3601 = vst [vmem:[#allocation2 + $0x140] sm:$0xff] %v3360
      %3602 = vst [vmem:[#allocation2 + $0x148] sm:$0xff] %v3361
      %3603 = vst [vmem:[#allocation2 + $0x150] sm:$0xff] %v3362
      %3604 = vst [vmem:[#allocation2 + $0x158] sm:$0xff] %v3363
      %3605 = vst [vmem:[#allocation2 + $0x160] sm:$0xff] %v3364
      %3606 = vst [vmem:[#allocation2 + $0x168] sm:$0xff] %v3365
      %3607 = vst [vmem:[#allocation2 + $0x170] sm:$0xff] %v3366
      %3608 = vst.msk [vmem:[#allocation2 + $0x178] sm:$0xff] %vm1186, %v3367
      %3620 = vrot.lane.b32.xlu0 %v3332, 127
      %v3621 = vpop.permute.xlu0 %3620
      %3622 = vrot.lane.b32.xlu0 %v3333, 127
      %v3623 = vpop.permute.xlu0 %3622
      %3624 = vrot.lane.b32.xlu0 %v3334, 127
      %v3625 = vpop.permute.xlu0 %3624
      %3626 = vrot.lane.b32.xlu0 %v3335, 127
      %v3627 = vpop.permute.xlu0 %3626
      %3628 = vrot.lane.b32.xlu0 %v3336, 127
      %v3629 = vpop.permute.xlu0 %3628
      %3630 = vrot.lane.b32.xlu0 %v3337, 127
      %v3631 = vpop.permute.xlu0 %3630
      %3632 = vrot.lane.b32.xlu0 %v3338, 127
      %v3633 = vpop.permute.xlu0 %3632
      %3634 = vrot.lane.b32.xlu0 %v3339, 127
      %v3635 = vpop.permute.xlu0 %3634
      %3636 = vrot.lane.b32.xlu0 %v3340, 127
      %v3637 = vpop.permute.xlu0 %3636
      %3638 = vrot.lane.b32.xlu0 %v3341, 127
      %v3639 = vpop.permute.xlu0 %3638
      %3640 = vrot.lane.b32.xlu0 %v3342, 127
      %v3641 = vpop.permute.xlu0 %3640
      %3642 = vrot.lane.b32.xlu0 %v3373, 127
      %v3643 = vpop.permute.xlu0 %3642
      %v3644 = vsel %vm1371, %v3621, %v3623
      %v3645 = vsel %vm1371, %v3623, %v3625
      %v3646 = vsel %vm1371, %v3625, %v3627
      %v3647 = vsel %vm1371, %v3627, %v3629
      %v3648 = vsel %vm1371, %v3629, %v3631
      %v3649 = vsel %vm1371, %v3631, %v3633
      %v3650 = vsel %vm1371, %v3633, %v3635
      %v3651 = vsel %vm1371, %v3635, %v3637
      %v3652 = vsel %vm1371, %v3637, %v3639
      %v3653 = vsel %vm1371, %v3639, %v3641
      %v3654 = vsel %vm1371, %v3641, %v3643
      %3667 = vst [vmem:[#allocation2 + $0x180] sm:$0xff] %v3644
      %3668 = vst [vmem:[#allocation2 + $0x188] sm:$0xff] %v3645
      %3669 = vst [vmem:[#allocation2 + $0x190] sm:$0xff] %v3646
      %3670 = vst [vmem:[#allocation2 + $0x198] sm:$0xff] %v3647
      %3671 = vst [vmem:[#allocation2 + $0x1a0] sm:$0xff] %v3648
      %3672 = vst [vmem:[#allocation2 + $0x1a8] sm:$0xff] %v3649
      %3673 = vst [vmem:[#allocation2 + $0x1b0] sm:$0xff] %v3650
      %3674 = vst [vmem:[#allocation2 + $0x1b8] sm:$0xff] %v3651
      %3675 = vst [vmem:[#allocation2 + $0x1c0] sm:$0xff] %v3652
      %3676 = vst [vmem:[#allocation2 + $0x1c8] sm:$0xff] %v3653
      %3677 = vst [vmem:[#allocation2 + $0x1d0] sm:$0xff] %v3654
      %3678 = vst.msk [vmem:[#allocation2 + $0x1d8] sm:$0xff] %vm1186, %v3643
      %3690 = vrot.lane.b32.xlu0 %v3356, 127
      %v3691 = vpop.permute.xlu0 %3690
      %3692 = vrot.lane.b32.xlu0 %v3357, 127
      %v3693 = vpop.permute.xlu0 %3692
      %3694 = vrot.lane.b32.xlu0 %v3358, 127
      %v3695 = vpop.permute.xlu0 %3694
      %3696 = vrot.lane.b32.xlu0 %v3359, 127
      %v3697 = vpop.permute.xlu0 %3696
      %3698 = vrot.lane.b32.xlu0 %v3360, 127
      %v3699 = vpop.permute.xlu0 %3698
      %3700 = vrot.lane.b32.xlu0 %v3361, 127
      %v3701 = vpop.permute.xlu0 %3700
      %3702 = vrot.lane.b32.xlu0 %v3362, 127
      %v3703 = vpop.permute.xlu0 %3702
      %3704 = vrot.lane.b32.xlu0 %v3363, 127
      %v3705 = vpop.permute.xlu0 %3704
      %3706 = vrot.lane.b32.xlu0 %v3364, 127
      %v3707 = vpop.permute.xlu0 %3706
      %3708 = vrot.lane.b32.xlu0 %v3365, 127
      %v3709 = vpop.permute.xlu0 %3708
      %3710 = vrot.lane.b32.xlu0 %v3366, 127
      %v3711 = vpop.permute.xlu0 %3710
      %3712 = vrot.lane.b32.xlu0 %v3480, 127
      %v3713 = vpop.permute.xlu0 %3712
      %v3714 = vsel %vm1371, %v3691, %v3693
      %v3715 = vsel %vm1371, %v3693, %v3695
      %v3716 = vsel %vm1371, %v3695, %v3697
      %v3717 = vsel %vm1371, %v3697, %v3699
      %v3718 = vsel %vm1371, %v3699, %v3701
      %v3719 = vsel %vm1371, %v3701, %v3703
      %v3720 = vsel %vm1371, %v3703, %v3705
      %v3721 = vsel %vm1371, %v3705, %v3707
      %v3722 = vsel %vm1371, %v3707, %v3709
      %v3723 = vsel %vm1371, %v3709, %v3711
      %v3724 = vsel %vm1371, %v3711, %v3713
      %3737 = vst [vmem:[#allocation2 + $0x1e0] sm:$0xff] %v3714
      %3738 = vst [vmem:[#allocation2 + $0x1e8] sm:$0xff] %v3715
      %3739 = vst [vmem:[#allocation2 + $0x1f0] sm:$0xff] %v3716
      %3740 = vst [vmem:[#allocation2 + $0x1f8] sm:$0xff] %v3717
      %3741 = vst [vmem:[#allocation2 + $0x200] sm:$0xff] %v3718
      %3742 = vst [vmem:[#allocation2 + $0x208] sm:$0xff] %v3719
      %3743 = vst [vmem:[#allocation2 + $0x210] sm:$0xff] %v3720
      %3744 = vst [vmem:[#allocation2 + $0x218] sm:$0xff] %v3721
      %3745 = vst [vmem:[#allocation2 + $0x220] sm:$0xff] %v3722
      %3746 = vst [vmem:[#allocation2 + $0x228] sm:$0xff] %v3723
      %3747 = vst [vmem:[#allocation2 + $0x230] sm:$0xff] %v3724
      %3748 = vst.msk [vmem:[#allocation2 + $0x238] sm:$0xff] %vm1186, %v3713
      %v3749 = vld [vmem:[#allocation2] sm:$0xff]
      %v3750 = vld [vmem:[#allocation2 + $0x8] sm:$0xff]
      %v3751 = vld [vmem:[#allocation2 + $0x10] sm:$0xff]
      %v3752 = vld [vmem:[#allocation2 + $0x18] sm:$0xff]
      %v3753 = vld [vmem:[#allocation2 + $0x20] sm:$0xff]
      %v3754 = vld [vmem:[#allocation2 + $0x28] sm:$0xff]
      %v3755 = vld [vmem:[#allocation2 + $0x30] sm:$0xff]
      %v3756 = vld [vmem:[#allocation2 + $0x38] sm:$0xff]
      %v3757 = vld [vmem:[#allocation2 + $0x40] sm:$0xff]
      %v3758 = vld [vmem:[#allocation2 + $0x48] sm:$0xff]
      %v3759 = vld [vmem:[#allocation2 + $0x50] sm:$0xff]
      %v3760 = vld [vmem:[#allocation2 + $0x58] sm:$0xff]
      %v3761 = vld [vmem:[#allocation2 + $0x60] sm:$0xff]
      %v3762 = vld [vmem:[#allocation2 + $0x68] sm:$0xff]
      %v3763 = vld [vmem:[#allocation2 + $0x70] sm:$0xff]
      %v3764 = vld [vmem:[#allocation2 + $0x78] sm:$0xff]
      %v3765 = vld [vmem:[#allocation2 + $0x80] sm:$0xff]
      %v3766 = vld [vmem:[#allocation2 + $0x88] sm:$0xff]
      %v3767 = vld [vmem:[#allocation2 + $0x90] sm:$0xff]
      %v3768 = vld [vmem:[#allocation2 + $0x98] sm:$0xff]
      %v3769 = vld [vmem:[#allocation2 + $0xa0] sm:$0xff]
      %v3770 = vld [vmem:[#allocation2 + $0xa8] sm:$0xff]
      %v3771 = vld [vmem:[#allocation2 + $0xb0] sm:$0xff]
      %v3772 = vld [vmem:[#allocation2 + $0xb8] sm:$0xff]
      %v3773 = vld [vmem:[#allocation2 + $0xc0] sm:$0xff]
      %v3774 = vld [vmem:[#allocation2 + $0xc8] sm:$0xff]
      %v3775 = vld [vmem:[#allocation2 + $0xd0] sm:$0xff]
      %v3776 = vld [vmem:[#allocation2 + $0xd8] sm:$0xff]
      %v3777 = vld [vmem:[#allocation2 + $0xe0] sm:$0xff]
      %v3778 = vld [vmem:[#allocation2 + $0xe8] sm:$0xff]
      %v3779 = vld [vmem:[#allocation2 + $0xf0] sm:$0xff]
      %v3780 = vld [vmem:[#allocation2 + $0xf8] sm:$0xff]
      %v3781 = vld [vmem:[#allocation2 + $0x100] sm:$0xff]
      %v3782 = vld [vmem:[#allocation2 + $0x108] sm:$0xff]
      %v3783 = vld [vmem:[#allocation2 + $0x110] sm:$0xff]
      %v3784 = vld [vmem:[#allocation2 + $0x118] sm:$0xff]
      %v3785 = vld [vmem:[#allocation2 + $0x120] sm:$0xff]
      %v3786 = vld [vmem:[#allocation2 + $0x128] sm:$0xff]
      %v3787 = vld [vmem:[#allocation2 + $0x130] sm:$0xff]
      %v3788 = vld [vmem:[#allocation2 + $0x138] sm:$0xff]
      %v3789 = vld [vmem:[#allocation2 + $0x140] sm:$0xff]
      %v3790 = vld [vmem:[#allocation2 + $0x148] sm:$0xff]
      %v3791 = vld [vmem:[#allocation2 + $0x150] sm:$0xff]
      %v3792 = vld [vmem:[#allocation2 + $0x158] sm:$0xff]
      %v3793 = vld [vmem:[#allocation2 + $0x160] sm:$0xff]
      %v3794 = vld [vmem:[#allocation2 + $0x168] sm:$0xff]
      %v3795 = vld [vmem:[#allocation2 + $0x170] sm:$0xff]
      %v3796 = vld [vmem:[#allocation2 + $0x178] sm:$0xff]
      %v3797 = vld [vmem:[#allocation2 + $0x180] sm:$0xff]
      %v3798 = vld [vmem:[#allocation2 + $0x188] sm:$0xff]
      %v3799 = vld [vmem:[#allocation2 + $0x190] sm:$0xff]
      %v3800 = vld [vmem:[#allocation2 + $0x198] sm:$0xff]
      %v3801 = vld [vmem:[#allocation2 + $0x1a0] sm:$0xff]
      %v3802 = vld [vmem:[#allocation2 + $0x1a8] sm:$0xff]
      %v3803 = vld [vmem:[#allocation2 + $0x1b0] sm:$0xff]
      %v3804 = vld [vmem:[#allocation2 + $0x1b8] sm:$0xff]
      %v3805 = vld [vmem:[#allocation2 + $0x1c0] sm:$0xff]
      %v3806 = vld [vmem:[#allocation2 + $0x1c8] sm:$0xff]
      %v3807 = vld [vmem:[#allocation2 + $0x1d0] sm:$0xff]
      %v3808 = vld [vmem:[#allocation2 + $0x1d8] sm:$0xff]
      %v3809 = vld [vmem:[#allocation2 + $0x1e0] sm:$0xff]
      %v3810 = vld [vmem:[#allocation2 + $0x1e8] sm:$0xff]
      %v3811 = vld [vmem:[#allocation2 + $0x1f0] sm:$0xff]
      %v3812 = vld [vmem:[#allocation2 + $0x1f8] sm:$0xff]
      %v3813 = vld [vmem:[#allocation2 + $0x200] sm:$0xff]
      %v3814 = vld [vmem:[#allocation2 + $0x208] sm:$0xff]
      %v3815 = vld [vmem:[#allocation2 + $0x210] sm:$0xff]
      %v3816 = vld [vmem:[#allocation2 + $0x218] sm:$0xff]
      %v3817 = vld [vmem:[#allocation2 + $0x220] sm:$0xff]
      %v3818 = vld [vmem:[#allocation2 + $0x228] sm:$0xff]
      %v3819 = vld [vmem:[#allocation2 + $0x230] sm:$0xff]
      %v3820 = vld [vmem:[#allocation2 + $0x238] sm:$0xff]
      %vm3821 = vcmask 392192
      %v3823 = vsel %vm3821, %v3368, 0
      %v3826 = vsel %vm3821, %v3369, 0
      %v3829 = vsel %vm3821, %v3370, 0
      %3831 = vmatprep.subr.mxu0 0.0
      %3832 = vmatpush1.msra.mxu0 0.0
      %3833 = vmatprep.subr.mxu0 0.0
      %3834 = vmatpush1.msra.mxu0 0.0
      %3835 = vmatprep.subr.mxu0 0.0
      %3836 = vmatpush1.msra.mxu0 0.0
      %3837 = vmatprep.subr.mxu0 0.0
      %3838 = vmatpush1.msra.mxu0 0.0
      %3839 = vmatprep.subr.mxu0 0.0
      %3840 = vmatpush1.msra.mxu0 0.0
      %3841 = vmatprep.subr.mxu0 0.0
      %3842 = vmatpush1.msra.mxu0 0.0
      %3843 = vmatprep.subr.mxu0 0.0
      %3844 = vmatpush1.msra.mxu0 0.0
      %3845 = vmatprep.subr.mxu0 0.0
      %3846 = vmatpush1.msra.mxu0 0.0
      %3847 = vmatprep.subr.mxu0 0.0
      %3848 = vmatpush1.msra.mxu0 0.0
      %3849 = vmatprep.subr.mxu0 0.0
      %3850 = vmatpush1.msra.mxu0 0.0
      %3851 = vmatprep.subr.mxu0 %v3810
      %3852 = vmatpush1.msra.mxu0 %v3809
      %3853 = vmatprep.subr.mxu0 %v3798
      %3854 = vmatpush1.msra.mxu0 %v3797
      %3855 = vmatprep.subr.mxu0 %v3786
      %3856 = vmatpush1.msra.mxu0 %v3785
      %3857 = vmatprep.subr.mxu0 %v3774
      %3858 = vmatpush1.msra.mxu0 %v3773
      %3859 = vmatprep.subr.mxu0 %v3762
      %3860 = vmatpush1.msra.mxu0 %v3761
      %3861 = vmatprep.subr.mxu0 %v3750
      %3862 = vmatpush1.msra.mxu0 %v3749
      %3863 = vmatprep.subr.mxu0 0.0
      %3864 = vmatpush2.msra.mxu0 0.0
      %3865 = vmatprep.subr.mxu0 0.0
      %3866 = vmatpush2.msra.mxu0 0.0
      %3867 = vmatprep.subr.mxu0 0.0
      %3868 = vmatpush2.msra.mxu0 0.0
      %3869 = vmatprep.subr.mxu0 0.0
      %3870 = vmatpush2.msra.mxu0 0.0
      %3871 = vmatprep.subr.mxu0 0.0
      %3872 = vmatpush2.msra.mxu0 0.0
      %3873 = vmatprep.subr.mxu0 0.0
      %3874 = vmatpush2.msra.mxu0 0.0
      %3875 = vmatprep.subr.mxu0 0.0
      %3876 = vmatpush2.msra.mxu0 0.0
      %3877 = vmatprep.subr.mxu0 0.0
      %3878 = vmatpush2.msra.mxu0 0.0
      %3879 = vmatprep.subr.mxu0 0.0
      %3880 = vmatpush2.msra.mxu0 0.0
      %3881 = vmatprep.subr.mxu0 0.0
      %3882 = vmatpush2.msra.mxu0 0.0
      %3883 = vmatprep.subr.mxu0 0.0
      %3884 = vmatpush2.msra.mxu0 0.0
      %3885 = vmatprep.subr.mxu0 0.0
      %3886 = vmatpush2.msra.mxu0 0.0
      %3887 = vmatprep.subr.mxu0 0.0
      %3888 = vmatpush2.msra.mxu0 0.0
      %3889 = vmatprep.subr.mxu0 0.0
      %3890 = vmatpush2.msra.mxu0 0.0
      %3891 = vmatprep.subr.mxu0 0.0
      %3892 = vmatpush2.msra.mxu0 0.0
      %3893 = vmatprep.subr.mxu0 0.0
      %3894 = vmatpush2.msra.mxu0 0.0
      %3895 = vmatprep.mubr.f32.mxu0 0.0
      %3896 = vmatmul.mubr.f32.gmra.mxu0 %v3823
      %v3897 = vpop.f32.mrf.mxu0
      %v3898 = vadd.f32 0.0, %v3897
      %v3899 = vpop.f32.mrf.mxu0
      %v3900 = vadd.f32 0.0, %v3899
      %3901 = vmatprep.mubr.f32.mxu0 0.0
      %3902 = vmatmul.mubr.f32.gmra.mxu0 %v3826
      %v3903 = vpop.f32.mrf.mxu0
      %v3904 = vadd.f32 0.0, %v3903
      %v3905 = vpop.f32.mrf.mxu0
      %v3906 = vadd.f32 0.0, %v3905
      %3907 = vmatprep.mubr.f32.mxu0 0.0
      %3908 = vmatmul.mubr.f32.gmra.mxu0 %v3829
      %v3909 = vpop.f32.mrf.mxu0
      %v3910 = vadd.f32 0.0, %v3909
      %v3911 = vpop.f32.mrf.mxu0
      %v3912 = vadd.f32 0.0, %v3911
      %3913 = vdwg.mxu0
      %3914 = vmatprep.subr.mxu0 0.0
      %3915 = vmatpush1.msra.mxu0 0.0
      %3916 = vmatprep.subr.mxu0 0.0
      %3917 = vmatpush1.msra.mxu0 0.0
      %3918 = vmatprep.subr.mxu0 0.0
      %3919 = vmatpush1.msra.mxu0 0.0
      %3920 = vmatprep.subr.mxu0 0.0
      %3921 = vmatpush1.msra.mxu0 0.0
      %3922 = vmatprep.subr.mxu0 0.0
      %3923 = vmatpush1.msra.mxu0 0.0
      %3924 = vmatprep.subr.mxu0 0.0
      %3925 = vmatpush1.msra.mxu0 0.0
      %3926 = vmatprep.subr.mxu0 0.0
      %3927 = vmatpush1.msra.mxu0 0.0
      %3928 = vmatprep.subr.mxu0 0.0
      %3929 = vmatpush1.msra.mxu0 0.0
      %3930 = vmatprep.subr.mxu0 0.0
      %3931 = vmatpush1.msra.mxu0 0.0
      %3932 = vmatprep.subr.mxu0 0.0
      %3933 = vmatpush1.msra.mxu0 0.0
      %3934 = vmatprep.subr.mxu0 %v3812
      %3935 = vmatpush1.msra.mxu0 %v3811
      %3936 = vmatprep.subr.mxu0 %v3800
      %3937 = vmatpush1.msra.mxu0 %v3799
      %3938 = vmatprep.subr.mxu0 %v3788
      %3939 = vmatpush1.msra.mxu0 %v3787
      %3940 = vmatprep.subr.mxu0 %v3776
      %3941 = vmatpush1.msra.mxu0 %v3775
      %3942 = vmatprep.subr.mxu0 %v3764
      %3943 = vmatpush1.msra.mxu0 %v3763
      %3944 = vmatprep.subr.mxu0 %v3752
      %3945 = vmatpush1.msra.mxu0 %v3751
      %3946 = vmatprep.subr.mxu0 0.0
      %3947 = vmatpush2.msra.mxu0 0.0
      %3948 = vmatprep.subr.mxu0 0.0
      %3949 = vmatpush2.msra.mxu0 0.0
      %3950 = vmatprep.subr.mxu0 0.0
      %3951 = vmatpush2.msra.mxu0 0.0
      %3952 = vmatprep.subr.mxu0 0.0
      %3953 = vmatpush2.msra.mxu0 0.0
      %3954 = vmatprep.subr.mxu0 0.0
      %3955 = vmatpush2.msra.mxu0 0.0
      %3956 = vmatprep.subr.mxu0 0.0
      %3957 = vmatpush2.msra.mxu0 0.0
      %3958 = vmatprep.subr.mxu0 0.0
      %3959 = vmatpush2.msra.mxu0 0.0
      %3960 = vmatprep.subr.mxu0 0.0
      %3961 = vmatpush2.msra.mxu0 0.0
      %3962 = vmatprep.subr.mxu0 0.0
      %3963 = vmatpush2.msra.mxu0 0.0
      %3964 = vmatprep.subr.mxu0 0.0
      %3965 = vmatpush2.msra.mxu0 0.0
      %3966 = vmatprep.subr.mxu0 0.0
      %3967 = vmatpush2.msra.mxu0 0.0
      %3968 = vmatprep.subr.mxu0 0.0
      %3969 = vmatpush2.msra.mxu0 0.0
      %3970 = vmatprep.subr.mxu0 0.0
      %3971 = vmatpush2.msra.mxu0 0.0
      %3972 = vmatprep.subr.mxu0 0.0
      %3973 = vmatpush2.msra.mxu0 0.0
      %3974 = vmatprep.subr.mxu0 0.0
      %3975 = vmatpush2.msra.mxu0 0.0
      %3976 = vmatprep.subr.mxu0 0.0
      %3977 = vmatpush2.msra.mxu0 0.0
      %3978 = vmatprep.mubr.f32.mxu0 0.0
      %3979 = vmatmul.mubr.f32.gmra.mxu0 %v3823
      %v3980 = vpop.f32.mrf.mxu0
      %v3981 = vadd.f32 0.0, %v3980
      %v3982 = vpop.f32.mrf.mxu0
      %v3983 = vadd.f32 0.0, %v3982
      %3984 = vmatprep.mubr.f32.mxu0 0.0
      %3985 = vmatmul.mubr.f32.gmra.mxu0 %v3826
      %v3986 = vpop.f32.mrf.mxu0
      %v3987 = vadd.f32 0.0, %v3986
      %v3988 = vpop.f32.mrf.mxu0
      %v3989 = vadd.f32 0.0, %v3988
      %3990 = vmatprep.mubr.f32.mxu0 0.0
      %3991 = vmatmul.mubr.f32.gmra.mxu0 %v3829
      %v3992 = vpop.f32.mrf.mxu0
      %v3993 = vadd.f32 0.0, %v3992
      %v3994 = vpop.f32.mrf.mxu0
      %v3995 = vadd.f32 0.0, %v3994
      %3996 = vdwg.mxu0
      %3997 = vmatprep.subr.mxu0 0.0
      %3998 = vmatpush1.msra.mxu0 0.0
      %3999 = vmatprep.subr.mxu0 0.0
      %4000 = vmatpush1.msra.mxu0 0.0
      %4001 = vmatprep.subr.mxu0 0.0
      %4002 = vmatpush1.msra.mxu0 0.0
      %4003 = vmatprep.subr.mxu0 0.0
      %4004 = vmatpush1.msra.mxu0 0.0
      %4005 = vmatprep.subr.mxu0 0.0
      %4006 = vmatpush1.msra.mxu0 0.0
      %4007 = vmatprep.subr.mxu0 0.0
      %4008 = vmatpush1.msra.mxu0 0.0
      %4009 = vmatprep.subr.mxu0 0.0
      %4010 = vmatpush1.msra.mxu0 0.0
      %4011 = vmatprep.subr.mxu0 0.0
      %4012 = vmatpush1.msra.mxu0 0.0
      %4013 = vmatprep.subr.mxu0 0.0
      %4014 = vmatpush1.msra.mxu0 0.0
      %4015 = vmatprep.subr.mxu0 0.0
      %4016 = vmatpush1.msra.mxu0 0.0
      %4017 = vmatprep.subr.mxu0 %v3814
      %4018 = vmatpush1.msra.mxu0 %v3813
      %4019 = vmatprep.subr.mxu0 %v3802
      %4020 = vmatpush1.msra.mxu0 %v3801
      %4021 = vmatprep.subr.mxu0 %v3790
      %4022 = vmatpush1.msra.mxu0 %v3789
      %4023 = vmatprep.subr.mxu0 %v3778
      %4024 = vmatpush1.msra.mxu0 %v3777
      %4025 = vmatprep.subr.mxu0 %v3766
      %4026 = vmatpush1.msra.mxu0 %v3765
      %4027 = vmatprep.subr.mxu0 %v3754
      %4028 = vmatpush1.msra.mxu0 %v3753
      %4029 = vmatprep.subr.mxu0 0.0
      %4030 = vmatpush2.msra.mxu0 0.0
      %4031 = vmatprep.subr.mxu0 0.0
      %4032 = vmatpush2.msra.mxu0 0.0
      %4033 = vmatprep.subr.mxu0 0.0
      %4034 = vmatpush2.msra.mxu0 0.0
      %4035 = vmatprep.subr.mxu0 0.0
      %4036 = vmatpush2.msra.mxu0 0.0
      %4037 = vmatprep.subr.mxu0 0.0
      %4038 = vmatpush2.msra.mxu0 0.0
      %4039 = vmatprep.subr.mxu0 0.0
      %4040 = vmatpush2.msra.mxu0 0.0
      %4041 = vmatprep.subr.mxu0 0.0
      %4042 = vmatpush2.msra.mxu0 0.0
      %4043 = vmatprep.subr.mxu0 0.0
      %4044 = vmatpush2.msra.mxu0 0.0
      %4045 = vmatprep.subr.mxu0 0.0
      %4046 = vmatpush2.msra.mxu0 0.0
      %4047 = vmatprep.subr.mxu0 0.0
      %4048 = vmatpush2.msra.mxu0 0.0
      %4049 = vmatprep.subr.mxu0 0.0
      %4050 = vmatpush2.msra.mxu0 0.0
      %4051 = vmatprep.subr.mxu0 0.0
      %4052 = vmatpush2.msra.mxu0 0.0
      %4053 = vmatprep.subr.mxu0 0.0
      %4054 = vmatpush2.msra.mxu0 0.0
      %4055 = vmatprep.subr.mxu0 0.0
      %4056 = vmatpush2.msra.mxu0 0.0
      %4057 = vmatprep.subr.mxu0 0.0
      %4058 = vmatpush2.msra.mxu0 0.0
      %4059 = vmatprep.subr.mxu0 0.0
      %4060 = vmatpush2.msra.mxu0 0.0
      %4061 = vmatprep.mubr.f32.mxu0 0.0
      %4062 = vmatmul.mubr.f32.gmra.mxu0 %v3823
      %v4063 = vpop.f32.mrf.mxu0
      %v4064 = vadd.f32 0.0, %v4063
      %v4065 = vpop.f32.mrf.mxu0
      %v4066 = vadd.f32 0.0, %v4065
      %4067 = vmatprep.mubr.f32.mxu0 0.0
      %4068 = vmatmul.mubr.f32.gmra.mxu0 %v3826
      %v4069 = vpop.f32.mrf.mxu0
      %v4070 = vadd.f32 0.0, %v4069
      %v4071 = vpop.f32.mrf.mxu0
      %v4072 = vadd.f32 0.0, %v4071
      %4073 = vmatprep.mubr.f32.mxu0 0.0
      %4074 = vmatmul.mubr.f32.gmra.mxu0 %v3829
      %v4075 = vpop.f32.mrf.mxu0
      %v4076 = vadd.f32 0.0, %v4075
      %v4077 = vpop.f32.mrf.mxu0
      %v4078 = vadd.f32 0.0, %v4077
      %4079 = vdwg.mxu0
      %4080 = vmatprep.subr.mxu0 0.0
      %4081 = vmatpush1.msra.mxu0 0.0
      %4082 = vmatprep.subr.mxu0 0.0
      %4083 = vmatpush1.msra.mxu0 0.0
      %4084 = vmatprep.subr.mxu0 0.0
      %4085 = vmatpush1.msra.mxu0 0.0
      %4086 = vmatprep.subr.mxu0 0.0
      %4087 = vmatpush1.msra.mxu0 0.0
      %4088 = vmatprep.subr.mxu0 0.0
      %4089 = vmatpush1.msra.mxu0 0.0
      %4090 = vmatprep.subr.mxu0 0.0
      %4091 = vmatpush1.msra.mxu0 0.0
      %4092 = vmatprep.subr.mxu0 0.0
      %4093 = vmatpush1.msra.mxu0 0.0
      %4094 = vmatprep.subr.mxu0 0.0
      %4095 = vmatpush1.msra.mxu0 0.0
      %4096 = vmatprep.subr.mxu0 0.0
      %4097 = vmatpush1.msra.mxu0 0.0
      %4098 = vmatprep.subr.mxu0 0.0
      %4099 = vmatpush1.msra.mxu0 0.0
      %4100 = vmatprep.subr.mxu0 %v3816
      %4101 = vmatpush1.msra.mxu0 %v3815
      %4102 = vmatprep.subr.mxu0 %v3804
      %4103 = vmatpush1.msra.mxu0 %v3803
      %4104 = vmatprep.subr.mxu0 %v3792
      %4105 = vmatpush1.msra.mxu0 %v3791
      %4106 = vmatprep.subr.mxu0 %v3780
      %4107 = vmatpush1.msra.mxu0 %v3779
      %4108 = vmatprep.subr.mxu0 %v3768
      %4109 = vmatpush1.msra.mxu0 %v3767
      %4110 = vmatprep.subr.mxu0 %v3756
      %4111 = vmatpush1.msra.mxu0 %v3755
      %4112 = vmatprep.subr.mxu0 0.0
      %4113 = vmatpush2.msra.mxu0 0.0
      %4114 = vmatprep.subr.mxu0 0.0
      %4115 = vmatpush2.msra.mxu0 0.0
      %4116 = vmatprep.subr.mxu0 0.0
      %4117 = vmatpush2.msra.mxu0 0.0
      %4118 = vmatprep.subr.mxu0 0.0
      %4119 = vmatpush2.msra.mxu0 0.0
      %4120 = vmatprep.subr.mxu0 0.0
      %4121 = vmatpush2.msra.mxu0 0.0
      %4122 = vmatprep.subr.mxu0 0.0
      %4123 = vmatpush2.msra.mxu0 0.0
      %4124 = vmatprep.subr.mxu0 0.0
      %4125 = vmatpush2.msra.mxu0 0.0
      %4126 = vmatprep.subr.mxu0 0.0
      %4127 = vmatpush2.msra.mxu0 0.0
      %4128 = vmatprep.subr.mxu0 0.0
      %4129 = vmatpush2.msra.mxu0 0.0
      %4130 = vmatprep.subr.mxu0 0.0
      %4131 = vmatpush2.msra.mxu0 0.0
      %4132 = vmatprep.subr.mxu0 0.0
      %4133 = vmatpush2.msra.mxu0 0.0
      %4134 = vmatprep.subr.mxu0 0.0
      %4135 = vmatpush2.msra.mxu0 0.0
      %4136 = vmatprep.subr.mxu0 0.0
      %4137 = vmatpush2.msra.mxu0 0.0
      %4138 = vmatprep.subr.mxu0 0.0
      %4139 = vmatpush2.msra.mxu0 0.0
      %4140 = vmatprep.subr.mxu0 0.0
      %4141 = vmatpush2.msra.mxu0 0.0
      %4142 = vmatprep.subr.mxu0 0.0
      %4143 = vmatpush2.msra.mxu0 0.0
      %4144 = vmatprep.mubr.f32.mxu0 0.0
      %4145 = vmatmul.mubr.f32.gmra.mxu0 %v3823
      %v4146 = vpop.f32.mrf.mxu0
      %v4147 = vadd.f32 0.0, %v4146
      %v4148 = vpop.f32.mrf.mxu0
      %v4149 = vadd.f32 0.0, %v4148
      %4150 = vmatprep.mubr.f32.mxu0 0.0
      %4151 = vmatmul.mubr.f32.gmra.mxu0 %v3826
      %v4152 = vpop.f32.mrf.mxu0
      %v4153 = vadd.f32 0.0, %v4152
      %v4154 = vpop.f32.mrf.mxu0
      %v4155 = vadd.f32 0.0, %v4154
      %4156 = vmatprep.mubr.f32.mxu0 0.0
      %4157 = vmatmul.mubr.f32.gmra.mxu0 %v3829
      %v4158 = vpop.f32.mrf.mxu0
      %v4159 = vadd.f32 0.0, %v4158
      %v4160 = vpop.f32.mrf.mxu0
      %v4161 = vadd.f32 0.0, %v4160
      %4162 = vdwg.mxu0
      %4163 = vmatprep.subr.mxu0 0.0
      %4164 = vmatpush1.msra.mxu0 0.0
      %4165 = vmatprep.subr.mxu0 0.0
      %4166 = vmatpush1.msra.mxu0 0.0
      %4167 = vmatprep.subr.mxu0 0.0
      %4168 = vmatpush1.msra.mxu0 0.0
      %4169 = vmatprep.subr.mxu0 0.0
      %4170 = vmatpush1.msra.mxu0 0.0
      %4171 = vmatprep.subr.mxu0 0.0
      %4172 = vmatpush1.msra.mxu0 0.0
      %4173 = vmatprep.subr.mxu0 0.0
      %4174 = vmatpush1.msra.mxu0 0.0
      %4175 = vmatprep.subr.mxu0 0.0
      %4176 = vmatpush1.msra.mxu0 0.0
      %4177 = vmatprep.subr.mxu0 0.0
      %4178 = vmatpush1.msra.mxu0 0.0
      %4179 = vmatprep.subr.mxu0 0.0
      %4180 = vmatpush1.msra.mxu0 0.0
      %4181 = vmatprep.subr.mxu0 0.0
      %4182 = vmatpush1.msra.mxu0 0.0
      %4183 = vmatprep.subr.mxu0 %v3818
      %4184 = vmatpush1.msra.mxu0 %v3817
      %4185 = vmatprep.subr.mxu0 %v3806
      %4186 = vmatpush1.msra.mxu0 %v3805
      %4187 = vmatprep.subr.mxu0 %v3794
      %4188 = vmatpush1.msra.mxu0 %v3793
      %4189 = vmatprep.subr.mxu0 %v3782
      %4190 = vmatpush1.msra.mxu0 %v3781
      %4191 = vmatprep.subr.mxu0 %v3770
      %4192 = vmatpush1.msra.mxu0 %v3769
      %4193 = vmatprep.subr.mxu0 %v3758
      %4194 = vmatpush1.msra.mxu0 %v3757
      %4195 = vmatprep.subr.mxu0 0.0
      %4196 = vmatpush2.msra.mxu0 0.0
      %4197 = vmatprep.subr.mxu0 0.0
      %4198 = vmatpush2.msra.mxu0 0.0
      %4199 = vmatprep.subr.mxu0 0.0
      %4200 = vmatpush2.msra.mxu0 0.0
      %4201 = vmatprep.subr.mxu0 0.0
      %4202 = vmatpush2.msra.mxu0 0.0
      %4203 = vmatprep.subr.mxu0 0.0
      %4204 = vmatpush2.msra.mxu0 0.0
      %4205 = vmatprep.subr.mxu0 0.0
      %4206 = vmatpush2.msra.mxu0 0.0
      %4207 = vmatprep.subr.mxu0 0.0
      %4208 = vmatpush2.msra.mxu0 0.0
      %4209 = vmatprep.subr.mxu0 0.0
      %4210 = vmatpush2.msra.mxu0 0.0
      %4211 = vmatprep.subr.mxu0 0.0
      %4212 = vmatpush2.msra.mxu0 0.0
      %4213 = vmatprep.subr.mxu0 0.0
      %4214 = vmatpush2.msra.mxu0 0.0
      %4215 = vmatprep.subr.mxu0 0.0
      %4216 = vmatpush2.msra.mxu0 0.0
      %4217 = vmatprep.subr.mxu0 0.0
      %4218 = vmatpush2.msra.mxu0 0.0
      %4219 = vmatprep.subr.mxu0 0.0
      %4220 = vmatpush2.msra.mxu0 0.0
      %4221 = vmatprep.subr.mxu0 0.0
      %4222 = vmatpush2.msra.mxu0 0.0
      %4223 = vmatprep.subr.mxu0 0.0
      %4224 = vmatpush2.msra.mxu0 0.0
      %4225 = vmatprep.subr.mxu0 0.0
      %4226 = vmatpush2.msra.mxu0 0.0
      %4227 = vmatprep.mubr.f32.mxu0 0.0
      %4228 = vmatmul.mubr.f32.gmra.mxu0 %v3823
      %v4229 = vpop.f32.mrf.mxu0
      %v4230 = vadd.f32 0.0, %v4229
      %v4231 = vpop.f32.mrf.mxu0
      %v4232 = vadd.f32 0.0, %v4231
      %4233 = vmatprep.mubr.f32.mxu0 0.0
      %4234 = vmatmul.mubr.f32.gmra.mxu0 %v3826
      %v4235 = vpop.f32.mrf.mxu0
      %v4236 = vadd.f32 0.0, %v4235
      %v4237 = vpop.f32.mrf.mxu0
      %v4238 = vadd.f32 0.0, %v4237
      %4239 = vmatprep.mubr.f32.mxu0 0.0
      %4240 = vmatmul.mubr.f32.gmra.mxu0 %v3829
      %v4241 = vpop.f32.mrf.mxu0
      %v4242 = vadd.f32 0.0, %v4241
      %v4243 = vpop.f32.mrf.mxu0
      %v4244 = vadd.f32 0.0, %v4243
      %4245 = vdwg.mxu0
      %4246 = vmatprep.subr.mxu0 0.0
      %4247 = vmatpush1.msra.mxu0 0.0
      %4248 = vmatprep.subr.mxu0 0.0
      %4249 = vmatpush1.msra.mxu0 0.0
      %4250 = vmatprep.subr.mxu0 0.0
      %4251 = vmatpush1.msra.mxu0 0.0
      %4252 = vmatprep.subr.mxu0 0.0
      %4253 = vmatpush1.msra.mxu0 0.0
      %4254 = vmatprep.subr.mxu0 0.0
      %4255 = vmatpush1.msra.mxu0 0.0
      %4256 = vmatprep.subr.mxu0 0.0
      %4257 = vmatpush1.msra.mxu0 0.0
      %4258 = vmatprep.subr.mxu0 0.0
      %4259 = vmatpush1.msra.mxu0 0.0
      %4260 = vmatprep.subr.mxu0 0.0
      %4261 = vmatpush1.msra.mxu0 0.0
      %4262 = vmatprep.subr.mxu0 0.0
      %4263 = vmatpush1.msra.mxu0 0.0
      %4264 = vmatprep.subr.mxu0 0.0
      %4265 = vmatpush1.msra.mxu0 0.0
      %4266 = vmatprep.subr.mxu0 %v3820
      %4267 = vmatpush1.msra.mxu0 %v3819
      %4268 = vmatprep.subr.mxu0 %v3808
      %4269 = vmatpush1.msra.mxu0 %v3807
      %4270 = vmatprep.subr.mxu0 %v3796
      %4271 = vmatpush1.msra.mxu0 %v3795
      %4272 = vmatprep.subr.mxu0 %v3784
      %4273 = vmatpush1.msra.mxu0 %v3783
      %4274 = vmatprep.subr.mxu0 %v3772
      %4275 = vmatpush1.msra.mxu0 %v3771
      %4276 = vmatprep.subr.mxu0 %v3760
      %4277 = vmatpush1.msra.mxu0 %v3759
      %4278 = vmatprep.subr.mxu0 0.0
      %4279 = vmatpush2.msra.mxu0 0.0
      %4280 = vmatprep.subr.mxu0 0.0
      %4281 = vmatpush2.msra.mxu0 0.0
      %4282 = vmatprep.subr.mxu0 0.0
      %4283 = vmatpush2.msra.mxu0 0.0
      %4284 = vmatprep.subr.mxu0 0.0
      %4285 = vmatpush2.msra.mxu0 0.0
      %4286 = vmatprep.subr.mxu0 0.0
      %4287 = vmatpush2.msra.mxu0 0.0
      %4288 = vmatprep.subr.mxu0 0.0
      %4289 = vmatpush2.msra.mxu0 0.0
      %4290 = vmatprep.subr.mxu0 0.0
      %4291 = vmatpush2.msra.mxu0 0.0
      %4292 = vmatprep.subr.mxu0 0.0
      %4293 = vmatpush2.msra.mxu0 0.0
      %4294 = vmatprep.subr.mxu0 0.0
      %4295 = vmatpush2.msra.mxu0 0.0
      %4296 = vmatprep.subr.mxu0 0.0
      %4297 = vmatpush2.msra.mxu0 0.0
      %4298 = vmatprep.subr.mxu0 0.0
      %4299 = vmatpush2.msra.mxu0 0.0
      %4300 = vmatprep.subr.mxu0 0.0
      %4301 = vmatpush2.msra.mxu0 0.0
      %4302 = vmatprep.subr.mxu0 0.0
      %4303 = vmatpush2.msra.mxu0 0.0
      %4304 = vmatprep.subr.mxu0 0.0
      %4305 = vmatpush2.msra.mxu0 0.0
      %4306 = vmatprep.subr.mxu0 0.0
      %4307 = vmatpush2.msra.mxu0 0.0
      %4308 = vmatprep.subr.mxu0 0.0
      %4309 = vmatpush2.msra.mxu0 0.0
      %4310 = vmatprep.mubr.f32.mxu0 0.0
      %4311 = vmatmul.mubr.f32.gmra.mxu0 %v3823
      %v4312 = vpop.f32.mrf.mxu0
      %v4313 = vadd.f32 0.0, %v4312
      %v4314 = vpop.f32.mrf.mxu0
      %v4315 = vadd.f32 0.0, %v4314
      %4316 = vmatprep.mubr.f32.mxu0 0.0
      %4317 = vmatmul.mubr.f32.gmra.mxu0 %v3826
      %v4318 = vpop.f32.mrf.mxu0
      %v4319 = vadd.f32 0.0, %v4318
      %v4320 = vpop.f32.mrf.mxu0
      %v4321 = vadd.f32 0.0, %v4320
      %4322 = vmatprep.mubr.f32.mxu0 0.0
      %4323 = vmatmul.mubr.f32.gmra.mxu0 %v3829
      %v4324 = vpop.f32.mrf.mxu0
      %v4325 = vadd.f32 0.0, %v4324
      %v4326 = vpop.f32.mrf.mxu0
      %v4327 = vadd.f32 0.0, %v4326
      %4328 = vdwg.mxu0
      %4329 = vrot.lane.b32.xlu0 %v3898, 20
      %v4330 = vpop.permute.xlu0 %4329
      %v4331 = vsel %vm1215, %v4330, %v4315
      %4332 = vrot.lane.b32.xlu0 %v3900, 20
      %v4333 = vpop.permute.xlu0 %4332
      %4334 = vrot.lane.b32.xlu0 %v3981, 20
      %v4335 = vpop.permute.xlu0 %4334
      %4336 = vrot.lane.b32.xlu0 %v3983, 20
      %v4337 = vpop.permute.xlu0 %4336
      %4338 = vrot.lane.b32.xlu0 %v4064, 20
      %v4339 = vpop.permute.xlu0 %4338
      %4340 = vrot.lane.b32.xlu0 %v4066, 20
      %v4341 = vpop.permute.xlu0 %4340
      %4342 = vrot.lane.b32.xlu0 %v4147, 20
      %v4343 = vpop.permute.xlu0 %4342
      %4344 = vrot.lane.b32.xlu0 %v4149, 20
      %v4345 = vpop.permute.xlu0 %4344
      %4346 = vrot.lane.b32.xlu0 %v4230, 20
      %v4347 = vpop.permute.xlu0 %4346
      %4348 = vrot.lane.b32.xlu0 %v4232, 20
      %v4349 = vpop.permute.xlu0 %4348
      %4350 = vrot.lane.b32.xlu0 %v4313, 20
      %v4351 = vpop.permute.xlu0 %4350
      %4352 = vrot.lane.b32.xlu0 %v4331, 20
      %v4353 = vpop.permute.xlu0 %4352
      %v4354 = vsel %vm1215, %v4333, %v4330
      %v4355 = vsel %vm1215, %v4335, %v4333
      %v4356 = vsel %vm1215, %v4337, %v4335
      %v4357 = vsel %vm1215, %v4339, %v4337
      %v4358 = vsel %vm1215, %v4341, %v4339
      %v4359 = vsel %vm1215, %v4343, %v4341
      %v4360 = vsel %vm1215, %v4345, %v4343
      %v4361 = vsel %vm1215, %v4347, %v4345
      %v4362 = vsel %vm1215, %v4349, %v4347
      %v4363 = vsel %vm1215, %v4351, %v4349
      %v4364 = vsel %vm1215, %v4353, %v4351
      %4378 = vrot.lane.b32.xlu0 %v4313, 14
      %v4379 = vpop.permute.xlu0 %4378
      %4380 = vrot.lane.b32.xlu0 %v4331, 14
      %v4381 = vpop.permute.xlu0 %4380
      %4382 = vrot.lane.b32.xlu0 %v4354, 14
      %v4383 = vpop.permute.xlu0 %4382
      %4384 = vrot.lane.b32.xlu0 %v4355, 14
      %v4385 = vpop.permute.xlu0 %4384
      %4386 = vrot.lane.b32.xlu0 %v4356, 14
      %v4387 = vpop.permute.xlu0 %4386
      %4388 = vrot.lane.b32.xlu0 %v4357, 14
      %v4389 = vpop.permute.xlu0 %4388
      %4390 = vrot.lane.b32.xlu0 %v4358, 14
      %v4391 = vpop.permute.xlu0 %4390
      %4392 = vrot.lane.b32.xlu0 %v4359, 14
      %v4393 = vpop.permute.xlu0 %4392
      %4394 = vrot.lane.b32.xlu0 %v4360, 14
      %v4395 = vpop.permute.xlu0 %4394
      %4396 = vrot.lane.b32.xlu0 %v4361, 14
      %v4397 = vpop.permute.xlu0 %4396
      %4398 = vrot.lane.b32.xlu0 %v4362, 14
      %v4399 = vpop.permute.xlu0 %4398
      %4400 = vrot.lane.b32.xlu0 %v4363, 14
      %v4401 = vpop.permute.xlu0 %4400
      %4402 = vrot.lane.b32.xlu0 %v4364, 14
      %v4403 = vpop.permute.xlu0 %4402
      %v4404 = vsel %vm2026, %v4379, %v4381
      %v4405 = vsel %vm2026, %v4381, %v4383
      %v4406 = vsel %vm2026, %v4383, %v4385
      %v4407 = vsel %vm2026, %v4385, %v4387
      %v4408 = vsel %vm2026, %v4387, %v4389
      %v4409 = vsel %vm2026, %v4389, %v4391
      %v4410 = vsel %vm2026, %v4391, %v4393
      %v4411 = vsel %vm2026, %v4393, %v4395
      %v4412 = vsel %vm2026, %v4395, %v4397
      %v4413 = vsel %vm2026, %v4397, %v4399
      %v4414 = vsel %vm2026, %v4399, %v4401
      %v4415 = vsel %vm2026, %v4401, %v4403
      %v4428 = vadd.f32 %v3904, %v4404
      %v4429 = vadd.f32 %v3906, %v4405
      %v4430 = vadd.f32 %v3987, %v4406
      %v4431 = vadd.f32 %v3989, %v4407
      %v4432 = vadd.f32 %v4070, %v4408
      %v4433 = vadd.f32 %v4072, %v4409
      %v4434 = vadd.f32 %v4153, %v4410
      %v4435 = vadd.f32 %v4155, %v4411
      %v4436 = vadd.f32 %v4236, %v4412
      %v4437 = vadd.f32 %v4238, %v4413
      %v4438 = vadd.f32 %v4319, %v4414
      %v4439 = vadd.f32 %v4321, %v4415
      %4440 = vrot.lane.b32.xlu0 %v3910, 20
      %v4441 = vpop.permute.xlu0 %4440
      %v4442 = vsel %vm1215, %v4441, %v4327
      %4455 = vrot.lane.b32.xlu0 %v3910, 94
      %v4456 = vpop.permute.xlu0 %4455
      %4457 = vrot.lane.b32.xlu0 %v3912, 94
      %v4458 = vpop.permute.xlu0 %4457
      %4459 = vrot.lane.b32.xlu0 %v3993, 94
      %v4460 = vpop.permute.xlu0 %4459
      %4461 = vrot.lane.b32.xlu0 %v3995, 94
      %v4462 = vpop.permute.xlu0 %4461
      %4463 = vrot.lane.b32.xlu0 %v4076, 94
      %v4464 = vpop.permute.xlu0 %4463
      %4465 = vrot.lane.b32.xlu0 %v4078, 94
      %v4466 = vpop.permute.xlu0 %4465
      %4467 = vrot.lane.b32.xlu0 %v4159, 94
      %v4468 = vpop.permute.xlu0 %4467
      %4469 = vrot.lane.b32.xlu0 %v4161, 94
      %v4470 = vpop.permute.xlu0 %4469
      %4471 = vrot.lane.b32.xlu0 %v4242, 94
      %v4472 = vpop.permute.xlu0 %4471
      %4473 = vrot.lane.b32.xlu0 %v4244, 94
      %v4474 = vpop.permute.xlu0 %4473
      %4475 = vrot.lane.b32.xlu0 %v4325, 94
      %v4476 = vpop.permute.xlu0 %4475
      %4477 = vrot.lane.b32.xlu0 %v4442, 94
      %v4478 = vpop.permute.xlu0 %4477
      %v4479 = vsel %vm2102, %v4456, %v4458
      %v4480 = vsel %vm2102, %v4458, %v4460
      %v4481 = vsel %vm2102, %v4460, %v4462
      %v4482 = vsel %vm2102, %v4462, %v4464
      %v4483 = vsel %vm2102, %v4464, %v4466
      %v4484 = vsel %vm2102, %v4466, %v4468
      %v4485 = vsel %vm2102, %v4468, %v4470
      %v4486 = vsel %vm2102, %v4470, %v4472
      %v4487 = vsel %vm2102, %v4472, %v4474
      %v4488 = vsel %vm2102, %v4474, %v4476
      %v4489 = vsel %vm2102, %v4476, %v4478
      %v4502 = vadd.f32 %v4428, %v4479
      %v4503 = vadd.f32 %v4429, %v4480
      %v4504 = vadd.f32 %v4430, %v4481
      %v4505 = vadd.f32 %v4431, %v4482
      %v4506 = vadd.f32 %v4432, %v4483
      %v4507 = vadd.f32 %v4433, %v4484
      %v4508 = vadd.f32 %v4434, %v4485
      %v4509 = vadd.f32 %v4435, %v4486
      %v4510 = vadd.f32 %v4436, %v4487
      %v4511 = vadd.f32 %v4437, %v4488
      %v4512 = vadd.f32 %v4438, %v4489
      %v4513 = vadd.f32 %v4439, %v4478
      %v4514 = vld [vmem:[%s13] sm:$0xff]
      %4516 = vset.pattern.permute.xlu0 0
      %4517 = vperm.xlu0 %4516, %v4514
      %v4518 = vpop.permute.xlu0 %4517
      %v4520 = vadd.f32 %v4502, %v4518
      %v4521 = vadd.f32 %v4503, %v4518
      %v4522 = vadd.f32 %v4504, %v4518
      %v4523 = vadd.f32 %v4505, %v4518
      %v4524 = vadd.f32 %v4506, %v4518
      %v4525 = vadd.f32 %v4507, %v4518
      %v4526 = vadd.f32 %v4508, %v4518
      %v4527 = vadd.f32 %v4509, %v4518
      %v4528 = vadd.f32 %v4510, %v4518
      %v4529 = vadd.f32 %v4511, %v4518
      %v4530 = vadd.f32 %v4512, %v4518
      %v4531 = vadd.f32 %v4513, %v4518
      %v4532 = vld [vmem:[%s14] sm:$0xff]
      %vm4533 = vcmp.gt.f32.partialorder %v4520, 0.0
      %vm4534 = vcmp.gt.f32.partialorder %v4521, 0.0
      %vm4535 = vcmp.gt.f32.partialorder %v4522, 0.0
      %vm4536 = vcmp.gt.f32.partialorder %v4523, 0.0
      %vm4537 = vcmp.gt.f32.partialorder %v4524, 0.0
      %vm4538 = vcmp.gt.f32.partialorder %v4525, 0.0
      %vm4539 = vcmp.gt.f32.partialorder %v4526, 0.0
      %vm4540 = vcmp.gt.f32.partialorder %v4527, 0.0
      %vm4541 = vcmp.gt.f32.partialorder %v4528, 0.0
      %vm4542 = vcmp.gt.f32.partialorder %v4529, 0.0
      %vm4543 = vcmp.gt.f32.partialorder %v4530, 0.0
      %vm4544 = vcmp.gt.f32.partialorder %v4531, 0.0
      %4546 = vset.pattern.permute.xlu0 0
      %4547 = vperm.xlu0 %4546, %v4532
      %v4548 = vpop.permute.xlu0 %4547
      %v4550 = vmul.f32 %v4548, %v4520
      %v4551 = vmul.f32 %v4548, %v4521
      %v4552 = vmul.f32 %v4548, %v4522
      %v4553 = vmul.f32 %v4548, %v4523
      %v4554 = vmul.f32 %v4548, %v4524
      %v4555 = vmul.f32 %v4548, %v4525
      %v4556 = vmul.f32 %v4548, %v4526
      %v4557 = vmul.f32 %v4548, %v4527
      %v4558 = vmul.f32 %v4548, %v4528
      %v4559 = vmul.f32 %v4548, %v4529
      %v4560 = vmul.f32 %v4548, %v4530
      %v4561 = vmul.f32 %v4548, %v4531
      %v4562 = vsel %vm4533, %v4520, %v4550
      %v4563 = vsel %vm4534, %v4521, %v4551
      %v4564 = vsel %vm4535, %v4522, %v4552
      %v4565 = vsel %vm4536, %v4523, %v4553
      %v4566 = vsel %vm4537, %v4524, %v4554
      %v4567 = vsel %vm4538, %v4525, %v4555
      %v4568 = vsel %vm4539, %v4526, %v4556
      %v4569 = vsel %vm4540, %v4527, %v4557
      %v4570 = vsel %vm4541, %v4528, %v4558
      %v4571 = vsel %vm4542, %v4529, %v4559
      %v4572 = vsel %vm4543, %v4530, %v4560
      %v4573 = vsel %vm4544, %v4531, %v4561
      %4574 = vst [vmem:[%s494] sm:$0xff] %v4562
      %4575 = vst [vmem:[%s494 + $0x8] sm:$0xff] %v4563
      %4576 = vst [vmem:[%s494 + $0x10] sm:$0xff] %v4564
      %4577 = vst [vmem:[%s494 + $0x18] sm:$0xff] %v4565
      %4578 = vst [vmem:[%s494 + $0x20] sm:$0xff] %v4566
      %4579 = vst [vmem:[%s494 + $0x28] sm:$0xff] %v4567
      %4580 = vst [vmem:[%s494 + $0x30] sm:$0xff] %v4568
      %4581 = vst [vmem:[%s494 + $0x38] sm:$0xff] %v4569
      %4582 = vst [vmem:[%s494 + $0x40] sm:$0xff] %v4570
      %4583 = vst [vmem:[%s494 + $0x48] sm:$0xff] %v4571
      %4584 = vst [vmem:[%s494 + $0x50] sm:$0xff] %v4572
      %4585 = vst.msk [vmem:[%s494 + $0x58] sm:$0xff] %vm1186, %v4573
      %p4586 = scmp.lt.s32.totalorder %s26, 1
      %s4587 = scalar_select %p4586, %s26, 1
      %s4588 = smul.addr %s4587, 12
      %s4589 = smul.addr %s4588, 8
      %s4590 = scalar_lea.vmem %s15, %s4589
      // Predicated region
      $region81: #{global_feature_upsample.1} parent=79 // pred_check
        %p4591 = pneg %p364
      $region82: #{global_feature_upsample.1} parent=79 // pred_check_branch
        %4593 = sbr.rel (%p4591) target = $region84
      $region83: #{global_feature_upsample.1} parent=79 // pred_region
        _
      $region84: #{global_feature_upsample.1} parent=79 // pred_fallthru
        _
    $region80: #{global_feature_upsample.1} parent=5 // pred_fallthru
      _
    %p4594 = scmp.le.s32.totalorder 2, %s21
    // Predicated region
    $region85: #{global_feature_upsample.1} parent=5 // pred_check
      %p4595 = pneg %p4594
    $region86: #{global_feature_upsample.1} parent=5 // pred_check_branch
      %4597 = sbr.rel (%p4595) target = $region88
    $region87: #{global_feature_upsample.1} parent=5 // pred_region
      %s4598 = ssub.s32 %s21, 2
      // Predicated region
      $region89: #{global_feature_upsample.1} parent=87 // pred_check
        %p4599 = pneg %p370
      $region90: #{global_feature_upsample.1} parent=87 // pred_check_branch
        %4601 = sbr.rel (%p4599) target = $region92
      $region91: #{global_feature_upsample.1} parent=87 // pred_region
        %p4602 = scmp.lt.s32.totalorder %s27, 1
        %s4603 = scalar_select %p4602, %s27, 1
        %s4604 = smul.addr %s4603, 12
        %s4605 = smul.addr %s4604, 8
        %s4606 = scalar_lea.vmem %s15, %s4605
      $region92: #{global_feature_upsample.1} parent=87 // pred_fallthru
        _
    $region88: #{global_feature_upsample.1} parent=5 // pred_fallthru
      _
  $region6: #{global_feature_upsample.1} parent=0 // loop_footer
    %s25 = sadd.s32 1, %s21
  $region7: #{global_feature_upsample.1} parent=0 // loop_footer_branch
    %20 = sbr.rel target = $region3
  $region8: #{global_feature_upsample.1} parent=0 // loop_exit
    _

</llo_original>
